<compile_context>
chip_gen: v7x
topology: tpu7x:2x2x1
jax: 0.10.0
libtpu: 0.0.40
codegen_flags: <defaults>
</compile_context>

<pallas_src>
from functools import partial

import numpy as np
import jax
import jax.numpy as jnp
from jax.experimental import pallas as pl
from jax.experimental.pallas import tpu as pltpu

# ----------------------------------------------------------------------------- #
# Constants from models/PD.py
# ----------------------------------------------------------------------------- #
NUM_ATOMS = [4, 5, 11, 8, 8, 6, 9, 9, 4, 10, 8, 8, 9, 8, 11, 7, 6, 7, 14, 12, 7]

ATOM_TYPES = ['', 'N', 'CA', 'C', 'O', 'CB', 'CG', 'CG1', 'CG2', 'OG', 'OG1', 'SG',
              'CD', 'CD1', 'CD2', 'ND1', 'ND2', 'OD1', 'OD2', 'SD', 'CE', 'CE1',
              'CE2', 'CE3', 'NE', 'NE1', 'NE2', 'OE1', 'OE2', 'CH2', 'NH1', 'NH2',
              'OH', 'CZ', 'CZ2', 'CZ3', 'NZ', 'OXT']

RES_ATOM14 = [[''] * 14,
 ['N', 'CA', 'C', 'O', 'CB', '', '', '', '', '', '', '', '', ''],
 ['N', 'CA', 'C', 'O', 'CB', 'CG', 'CD', 'NE', 'CZ', 'NH1', 'NH2', '', '', ''],
 ['N', 'CA', 'C', 'O', 'CB', 'CG', 'OD1', 'ND2', '', '', '', '', '', ''],
 ['N', 'CA', 'C', 'O', 'CB', 'CG', 'OD1', 'OD2', '', '', '', '', '', ''],
 ['N', 'CA', 'C', 'O', 'CB', 'SG', '', '', '', '', '', '', '', ''],
 ['N', 'CA', 'C', 'O', 'CB', 'CG', 'CD', 'OE1', 'NE2', '', '', '', '', ''],
 ['N', 'CA', 'C', 'O', 'CB', 'CG', 'CD', 'OE1', 'OE2', '', '', '', '', ''],
 ['N', 'CA', 'C', 'O', '', '', '', '', '', '', '', '', '', ''],
 ['N', 'CA', 'C', 'O', 'CB', 'CG', 'ND1', 'CD2', 'CE1', 'NE2', '', '', '', ''],
 ['N', 'CA', 'C', 'O', 'CB', 'CG1', 'CG2', 'CD1', '', '', '', '', '', ''],
 ['N', 'CA', 'C', 'O', 'CB', 'CG', 'CD1', 'CD2', '', '', '', '', '', ''],
 ['N', 'CA', 'C', 'O', 'CB', 'CG', 'CD', 'CE', 'NZ', '', '', '', '', ''],
 ['N', 'CA', 'C', 'O', 'CB', 'CG', 'SD', 'CE', '', '', '', '', '', ''],
 ['N', 'CA', 'C', 'O', 'CB', 'CG', 'CD1', 'CD2', 'CE1', 'CE2', 'CZ', '', '', ''],
 ['N', 'CA', 'C', 'O', 'CB', 'CG', 'CD', '', '', '', '', '', '', ''],
 ['N', 'CA', 'C', 'O', 'CB', 'OG', '', '', '', '', '', '', '', ''],
 ['N', 'CA', 'C', 'O', 'CB', 'OG1', 'CG2', '', '', '', '', '', '', ''],
 ['N', 'CA', 'C', 'O', 'CB', 'CG', 'CD1', 'CD2', 'NE1', 'CE2', 'CE3', 'CZ2', 'CZ3', 'CH2'],
 ['N', 'CA', 'C', 'O', 'CB', 'CG', 'CD1', 'CD2', 'CE1', 'CE2', 'CZ', 'OH', '', ''],
 ['N', 'CA', 'C', 'O', 'CB', 'CG1', 'CG2', '', '', '', '', '', '', '']]

RES_ATOMS = [[ATOM_TYPES.index(i) for i in res if i != ''] for res in RES_ATOM14]

NEG_BIG = -1e30  # finite "masked" logit value (exp underflows to exactly 0.0)


def _rup(n, m):
    return ((n + m - 1) // m) * m


# ----------------------------------------------------------------------------- #
# Pallas kernels
# ----------------------------------------------------------------------------- #
def _linear_kernel(x_ref, w_ref, b_ref, o_ref):
    # y = x @ w + b  (bf16 MXU operands, f32 accumulation)
    o_ref[...] = jnp.dot(x_ref[...].astype(jnp.bfloat16), w_ref[...],
                         preferred_element_type=jnp.float32) + b_ref[...]


def _pallas_linear(xp, wp, bp):
    """Pre-padded linear layer (used once per forward for the ligand embedding)."""
    Mp, Kp = xp.shape
    Hp = wp.shape[1]
    return pl.pallas_call(
        _linear_kernel,
        out_shape=jax.ShapeDtypeStruct((Mp, Hp), jnp.float32),
        grid=(1,),
        in_specs=[pl.BlockSpec((Mp, Kp), lambda i: (0, 0)),
                  pl.BlockSpec((Kp, Hp), lambda i: (0, 0)),
                  pl.BlockSpec((1, Hp), lambda i: (0, 0))],
        out_specs=pl.BlockSpec((Mp, Hp), lambda i: (0, 0)),
    )(xp, wp, bp)


def _make_phase_kernel(inv_hub_prot, inv_hub_lig):
    """Fused per-phase kernel: the whole interpolation loop runs as grid=(steps,).

    Per grid step: compose features (inject carried residue-type logits),
    protein_atom_emb, per-residue pooling (encoder stand-in), residue_mlp,
    cross-entropy, and both SmoothL1 losses.  Losses accumulate in the resident
    (1,128) output block; the carried logits live in a VMEM scratch ref.
    """
    def kernel(feat_ref, expand_ref, wp_ref, bp_ref, pool_ref, invcnt_ref,
               wr_ref, br_ref, rt_init_ref, onehot_ref, addmask_ref, rowscale_ref,
               atommask_ref, predx_ref, labelx_ref, predlig_ref, lablig_ref,
               loss_ref, rt_ref):
        t = pl.program_id(0)

        @pl.when(t == 0)
        def _init():
            rt_ref[...] = rt_init_ref[...]
            loss_ref[...] = jnp.zeros_like(loss_ref)

        # ---- compose(): overwrite aa one-hot columns of edited atoms with the
        # carried (detached, raw) residue-type logits.  expand is (atoms, n_res)
        # 0/1; rt already has its 20 logit columns shifted to the aa columns.
        aa_update = jnp.dot(expand_ref[...], rt_ref[...],
                            preferred_element_type=jnp.float32)
        feat = feat_ref[...] + aa_update                                # (Na, Dp) f32

        # ---- protein_atom_emb (bf16 MXU operands, f32 accumulation)
        h_protein = jnp.dot(feat.astype(jnp.bfloat16), wp_ref[...],
                            preferred_element_type=jnp.float32) + bp_ref[...]

        # ---- encoder stand-in: per-residue mean pooling (0/1 pool matrix, then
        # exact f32 1/count scaling).
        h_res = jnp.dot(pool_ref[...], h_protein,
                        preferred_element_type=jnp.float32) * invcnt_ref[...]

        # ---- residue_mlp (weights pre-shifted so logits land on aa columns)
        logits = jnp.dot(h_res.astype(jnp.bfloat16), wr_ref[...],
                         preferred_element_type=jnp.float32) + br_ref[...]
        rt_ref[...] = logits                                            # carried to next step

        # ---- cross-entropy (mean over real rows; addmask is a finite -1e30
        # additive mask on non-logit lanes, rowscale zeroes padded rows)
        x = logits + addmask_ref[...]
        m = jnp.max(x, axis=-1, keepdims=True)
        lse = jnp.log(jnp.sum(jnp.exp(x - m), axis=-1, keepdims=True)) + m
        picked = jnp.sum(onehot_ref[...] * logits, axis=-1, keepdims=True)
        loss_type_t = jnp.sum((lse - picked) * rowscale_ref[...])

        # ---- SmoothL1 (beta=1) over edited protein atoms (masked, mean baked
        # into the static inverse divisor) + over all ligand atoms
        d = (predx_ref[0] - labelx_ref[...]) * atommask_ref[...]
        ad = jnp.abs(d)
        hub_p = jnp.where(ad < 1.0, 0.5 * d * d, ad - 0.5)
        loss_prot = jnp.sum(hub_p) * inv_hub_prot

        dl = predlig_ref[0] - lablig_ref[...]
        adl = jnp.abs(dl)
        hub_l = jnp.where(adl < 1.0, 0.5 * dl * dl, adl - 0.5)
        loss_lig = jnp.sum(hub_l) * inv_hub_lig

        lanes = jax.lax.broadcasted_iota(jnp.int32, loss_ref.shape, 1)
        inc = (jnp.where(lanes == 0, loss_prot + loss_lig, 0.0) +
               jnp.where(lanes == 1, loss_type_t, 0.0))
        loss_ref[...] = loss_ref[...] + inc

    return kernel


def _run_phase(arrs, inv_hub_prot, inv_hub_lig):
    """Run one refinement phase (all steps) as a single pallas_call."""
    feat, expand = arrs[0], arrs[1]
    wp = arrs[2]
    pool = arrs[4]
    predx_steps = arrs[13]
    predlig_steps = arrs[15]

    steps = predx_steps.shape[0]
    Na_p, Dp = feat.shape
    Rp = pool.shape[0]
    Hp = wp.shape[1]
    Lp = predlig_steps.shape[1]

    c00 = lambda t: (0, 0)
    kernel = _make_phase_kernel(inv_hub_prot, inv_hub_lig)

    out = pl.pallas_call(
        kernel,
        out_shape=jax.ShapeDtypeStruct((1, 128), jnp.float32),
        grid=(steps,),
        in_specs=[
            pl.BlockSpec((Na_p, Dp), c00),                 # feat base
            pl.BlockSpec((Na_p, Rp), c00),                 # expand (edited-atom -> residue slot)
            pl.BlockSpec((Dp, Hp), c00),                   # Wp (bf16)
            pl.BlockSpec((1, Hp), c00),                    # bp
            pl.BlockSpec((Rp, Na_p), c00),                 # pooling 0/1 matrix
            pl.BlockSpec((Rp, 1), c00),                    # 1/atom-count per residue
            pl.BlockSpec((Hp, Dp), c00),                   # Wr (bf16, columns pre-shifted)
            pl.BlockSpec((1, Dp), c00),                    # br (shifted)
            pl.BlockSpec((Rp, Dp), c00),                   # carried-logits init
            pl.BlockSpec((Rp, Dp), c00),                   # one-hot labels (shifted)
            pl.BlockSpec((1, Dp), c00),                    # additive column mask
            pl.BlockSpec((Rp, 1), c00),                    # CE row scale (1/n rows)
            pl.BlockSpec((Na_p, 1), c00),                  # edited-atom mask for SmoothL1
            pl.BlockSpec((1, Na_p, 3), lambda t: (t, 0, 0)),   # pred protein positions / step
            pl.BlockSpec((Na_p, 3), c00),                  # label protein positions
            pl.BlockSpec((1, Lp, 3), lambda t: (t, 0, 0)),     # pred ligand positions / step
            pl.BlockSpec((Lp, 3), c00),                    # label ligand positions
        ],
        out_specs=pl.BlockSpec((1, 128), c00),
        scratch_shapes=[pltpu.VMEM((Rp, Dp), jnp.float32)],
        compiler_params=pltpu.CompilerParams(
            dimension_semantics=("arbitrary",)),           # sequential carry + accumulation
    )(*arrs)
    return out[0, 0], out[0, 1]


# ----------------------------------------------------------------------------- #
# Jitted forward (pure-JAX glue + 3 pallas_calls total)
# ----------------------------------------------------------------------------- #
@partial(jax.jit, static_argnames=("steps", "inv_bb", "inv_full", "inv_lig"))
def _forward_jit(key, c, steps, inv_bb, inv_full, inv_lig):
    f32 = jnp.float32
    k1, k2, k3, k4 = jax.random.split(key, 4)
    ratios = jnp.arange(steps, 0, -1, dtype=f32) / steps          # (steps-t)/steps
    r3 = ratios[:, None, None]
    Lp = c['lig_pos'].shape[0]

    # Step-invariant ligand embedding (hoisted out of the loops).  It only feeds
    # the external encoder (TODO(synk)), so it is returned untouched.
    h_ligand = _pallas_linear(c['lig_feat'], c['wl'], c['bl'])

    # ---------------- phase 1: backbone refinement ----------------
    predx1 = (1.0 - r3) * c['pos_bb'][None] + r3 * c['interp_bb'][None]
    predlig1 = c['lig_pos'][None] + \
        jax.random.normal(k1, (steps, Lp, 3), f32) * c['lig_mask'] * r3 * 0.5

    p1_pos, p1_type = _run_phase(
        (c['feat_bb'], c['expand_bb'], c['wp'], c['bp'], c['pool_bb'], c['invcnt_bb'],
         c['wr'], c['br'], c['rt_init_bb'], c['onehot_bb'], c['addmask'], c['rowscale_bb'],
         c['atommask_bb'], predx1, c['pos_bb'], predlig1, c['lig_pos']),
        inv_bb, inv_lig)

    # ---------------- phase 2: full-atom refinement ----------------
    n_edit = c['edit_rows'].shape[0]
    n_side = c['side_rows'].shape[0]
    base = jnp.broadcast_to(c['pos_full'][None], (steps,) + c['pos_full'].shape)
    noise_e = jax.random.normal(k2, (steps, n_edit, 3), f32) * r3 * 0.3
    predx2 = base.at[:, c['edit_rows']].add(noise_e)
    # vectorized side-chain re-initialization around the (noised) CA atom
    ca = predx2[:, c['ca_rows']]
    side_noise = 0.1 * jax.random.normal(k3, (steps, n_side, 3), f32)
    side_new = r3 * (ca + side_noise) + (1.0 - r3) * predx2[:, c['side_rows']]
    predx2 = predx2.at[:, c['side_rows']].set(side_new)
    predlig2 = c['lig_pos'][None] + \
        jax.random.normal(k4, (steps, Lp, 3), f32) * c['lig_mask'] * r3 * 0.2

    p2_pos, p2_type = _run_phase(
        (c['feat_full'], c['expand_full'], c['wp'], c['bp'], c['pool_full'], c['invcnt_full'],
         c['wr'], c['br'], c['rt_init_full'], c['onehot_full'], c['addmask'], c['rowscale_full'],
         c['atommask_full'], predx2, c['pos_full'], predlig2, c['lig_pos']),
        inv_full, inv_lig)

    loss_pos = p1_pos + p2_pos
    loss_type = p1_type + p2_type
    return loss_pos + loss_type, loss_pos, loss_type, h_ligand


# ----------------------------------------------------------------------------- #
# Host-side glue (data-dependent bookkeeping from models/PD.py, concrete numpy)
# ----------------------------------------------------------------------------- #
def nearest_np(residue_mask):
    n = len(residue_mask)
    index = [[0, 0] for _ in range(n)]
    p, q = 0, n
    for i in range(n):
        if not residue_mask[i]:
            p = i
        else:
            index[i][0] = p
    for i in range(n - 1, -1, -1):
        if not residue_mask[i]:
            q = i
        else:
            index[i][1] = q
    return index


def interpolation_init_np(pred_X, residue_mask, backbone_pos, atom2residue):
    """Single-protein version of interpolation_init (numpy glue)."""
    pred_X = np.array(pred_X, np.float32, copy=True)
    if (~residue_mask).sum() <= 2:
        return pred_X
    residue_index = np.arange(len(residue_mask))
    front = residue_index[~residue_mask][:2]
    end = residue_index[~residue_mask][-2:]
    near = nearest_np(residue_mask)
    for k in range(len(residue_mask)):
        if residue_mask[k]:
            mask = atom2residue == k
            if k < front[0]:
                pred_X[mask] = backbone_pos[front[0]] + (k - front[0]) / (front[0] - front[1]) * \
                               (backbone_pos[front[0]] - backbone_pos[front[1]])
            elif k > end[1]:
                pred_X[mask] = backbone_pos[end[1]] + (k - end[1]) / (end[1] - end[0]) * \
                               (backbone_pos[end[1]] - backbone_pos[end[0]])
            else:
                pred_X[mask] = ((k - near[k][0]) * backbone_pos[near[k][1]] +
                                (near[k][1] - k) * backbone_pos[near[k][0]]) / (near[k][1] - near[k][0])
    return pred_X


def atom_feature_np(res_type):
    atom_ids = np.asarray(RES_ATOMS[res_type])
    atom_onehot = (atom_ids[:, None] == np.arange(38)[None, :]).astype(np.float32)
    aa_onehot = np.zeros((len(atom_ids), 21), np.float32)
    aa_onehot[:, res_type] = 1.0
    return np.concatenate([atom_onehot, aa_onehot], axis=1)     # (natoms, 59)


def make_batch(key, ligand_feat_dim=16, num_ligand_atoms=12):
    aa = np.array([1, 4, 7, 9, 12, 14, 17, 19], np.int64)        # 8 residues, types 1..20
    R = len(aa)
    natoms = np.array([NUM_ATOMS[int(a)] for a in aa], np.int64)
    N = int(natoms.sum())
    atom2residue = np.repeat(np.arange(R), natoms)
    atom2residue_bb = np.repeat(np.arange(R), 4)

    edit_res = np.zeros(R, bool); edit_res[[2, 4, 5]] = True
    rm_res = np.zeros(R, bool); rm_res[2] = True

    feat = np.concatenate([atom_feature_np(int(a)) for a in aa], axis=0)  # (N, 59)
    bb_rows = np.concatenate([np.where(atom2residue == r)[0][:4] for r in range(R)])
    feat_bb = feat[bb_rows]

    k1, k2, k3 = jax.random.split(key, 3)
    protein_pos = np.asarray(jax.random.normal(k1, (N, 3), jnp.float32)) * 2.0
    protein_pos = protein_pos + atom2residue[:, None].astype(np.float32) * 1.5
    ligand_pos = np.asarray(jax.random.normal(k2, (num_ligand_atoms, 3), jnp.float32)) * 2.0
    ligand_feat = np.asarray(jax.random.normal(k3, (num_ligand_atoms, ligand_feat_dim), jnp.float32))

    return dict(
        num_residues=R,
        amino_acid=aa,
        residue_natoms=natoms,
        atom2residue=atom2residue,
        atom2residue_backbone=atom2residue_bb,
        protein_edit_residue=edit_res,
        random_mask_residue=rm_res,
        protein_edit_atom=np.repeat(edit_res, natoms),
        protein_edit_atom_backbone=np.repeat(edit_res, 4),
        random_mask_atom=np.repeat(rm_res, natoms),
        protein_atom_feature=feat,
        protein_atom_feature_backbone=feat_bb,
        protein_pos=protein_pos,
        protein_pos_backbone=protein_pos[bb_rows],
        residue_pos=protein_pos[bb_rows.reshape(R, 4)[:, 1]],    # CA positions
        ligand_pos=ligand_pos,
        ligand_atom_feature=ligand_feat,
    )


# ----------------------------------------------------------------------------- #
# Pocket_Design forward (Pallas version)
# ----------------------------------------------------------------------------- #
def _init_linear(key, fan_in, fan_out):
    kw, kb = jax.random.split(key)
    bound = 1.0 / np.sqrt(fan_in)
    w = jax.random.uniform(kw, (fan_in, fan_out), jnp.float32, -bound, bound)
    b = jax.random.uniform(kb, (fan_out,), jnp.float32, -bound, bound)
    return w, b


class PocketDesignPallas:
    def __init__(self, key, protein_feat_dim, ligand_feat_dim, hidden=32):
        k1, k2, k3 = jax.random.split(key, 3)
        self.Wp, self.bp = _init_linear(k1, protein_feat_dim, hidden)   # protein_atom_emb
        self.Wl, self.bl = _init_linear(k2, ligand_feat_dim, hidden)    # ligand_atom_emb
        self.Wr, self.br = _init_linear(k3, hidden, 20)                 # residue_mlp
        self.hidden = hidden
        self.protein_feat_dim = protein_feat_dim
        self.ligand_feat_dim = ligand_feat_dim
        self.interpolate_steps = 5

        # ---- pad weights ONCE (hoisted out of the per-step path) ----
        D, H = protein_feat_dim, hidden
        Dp, Hp = _rup(D, 128), _rup(H, 128)
        Lfp = _rup(ligand_feat_dim, 128)
        col0 = D - 20
        self.Wp_pad = jnp.zeros((Dp, Hp), jnp.bfloat16).at[:D, :H].set(
            self.Wp.astype(jnp.bfloat16))
        self.bp_pad = jnp.zeros((1, Hp), jnp.float32).at[0, :H].set(self.bp)
        self.Wl_pad = jnp.zeros((Lfp, Hp), jnp.bfloat16).at[:ligand_feat_dim, :H].set(
            self.Wl.astype(jnp.bfloat16))
        self.bl_pad = jnp.zeros((1, Hp), jnp.float32).at[0, :H].set(self.bl)
        # residue-MLP output columns pre-shifted onto the aa one-hot feature cols
        self.Wr_shift = jnp.zeros((Hp, Dp), jnp.bfloat16).at[:H, col0:D].set(
            self.Wr.astype(jnp.bfloat16))
        self.br_shift = jnp.zeros((1, Dp), jnp.float32).at[0, col0:D].set(self.br)

    def forward(self, batch, key):
        D = batch['protein_atom_feature'].shape[1]
        steps = self.interpolate_steps
        aa = batch['amino_acid']
        res_mask = batch['protein_edit_residue']
        rm_mask = batch['random_mask_residue']
        a2r_full = batch['atom2residue']
        a2r_bb = batch['atom2residue_backbone']

        N, Nbb = len(a2r_full), len(a2r_bb)
        L = batch['ligand_pos'].shape[0]
        Np_, Nbb_p, Lp = _rup(N, 8), _rup(Nbb, 8), _rup(L, 8)
        Dp = _rup(D, 128)
        col0 = D - 20

        edit_res_idx = np.where(res_mask)[0]
        rm_res_idx = np.where(rm_mask)[0]
        R_edit, R_rm = len(edit_res_idx), len(rm_res_idx)
        Rp_e, Rp_m = _rup(max(R_edit, 1), 8), _rup(max(R_rm, 1), 8)

        # -------- phase-1 constants (backbone graph) --------
        feat_bb = np.array(batch['protein_atom_feature_backbone'], np.float32, copy=True)
        bb_edit_rows = np.where(batch['protein_edit_atom_backbone'])[0]
        feat_bb[bb_edit_rows, -20:] = 0.0          # refilled with carried logits in-kernel
        feat_bb_p = np.zeros((Nbb_p, Dp), np.float32); feat_bb_p[:Nbb, :D] = feat_bb

        expand_bb = np.zeros((Nbb_p, Rp_e), np.float32)
        pool_bb = np.zeros((Rp_e, Nbb_p), np.float32)
        invcnt_bb = np.zeros((Rp_e, 1), np.float32)
        for j, r in enumerate(edit_res_idx):
            rows = np.where(a2r_bb == r)[0]
            expand_bb[rows, j] = 1.0
            pool_bb[j, rows] = 1.0
            invcnt_bb[j, 0] = 1.0 / len(rows)

        rt_init_bb = np.zeros((Rp_e, Dp), np.float32)
        rt_init_bb[:R_edit, col0:D] = 1.0 / 20.0   # initial uniform pred_res_type
        onehot_bb = np.zeros((Rp_e, Dp), np.float32)
        onehot_bb[np.arange(R_edit), col0 + (aa[edit_res_idx] - 1)] = 1.0
        rowscale_bb = np.zeros((Rp_e, 1), np.float32); rowscale_bb[:R_edit, 0] = 1.0 / R_edit

        bbmask = np.zeros((Nbb_p, 1), np.float32); bbmask[bb_edit_rows, 0] = 1.0
        pos_bb_p = np.zeros((Nbb_p, 3), np.float32)
        pos_bb_p[:Nbb] = batch['protein_pos_backbone']
        interp = interpolation_init_np(batch['protein_pos_backbone'], res_mask,
                                       np.asarray(batch['residue_pos']), a2r_bb)
        interp_p = np.zeros((Nbb_p, 3), np.float32); interp_p[:Nbb] = interp

        # -------- phase-2 constants (full-atom graph) --------
        feat_full = np.array(batch['protein_atom_feature'], np.float32, copy=True)
        rm_atom_rows = np.where(batch['random_mask_atom'])[0]
        feat_full[rm_atom_rows, -20:] = 0.0
        feat_full[rm_atom_rows, -21] = 1.0
        feat_full_p = np.zeros((Np_, Dp), np.float32); feat_full_p[:N, :D] = feat_full

        expand_full = np.zeros((Np_, Rp_m), np.float32)   # phase 2 does not inject logits
        pool_rm = np.zeros((Rp_m, Np_), np.float32)
        invcnt_rm = np.zeros((Rp_m, 1), np.float32)
        for j, r in enumerate(rm_res_idx):
            rows = np.where(a2r_full == r)[0]
            pool_rm[j, rows] = 1.0
            invcnt_rm[j, 0] = 1.0 / len(rows)
        rt_init_rm = np.zeros((Rp_m, Dp), np.float32)
        onehot_rm = np.zeros((Rp_m, Dp), np.float32)
        onehot_rm[np.arange(R_rm), col0 + (aa[rm_res_idx] - 1)] = 1.0
        rowscale_rm = np.zeros((Rp_m, 1), np.float32); rowscale_rm[:R_rm, 0] = 1.0 / R_rm

        edit_atom_rows = np.where(batch['protein_edit_atom'])[0]
        fullmask = np.zeros((Np_, 1), np.float32); fullmask[edit_atom_rows, 0] = 1.0
        pos_full_p = np.zeros((Np_, 3), np.float32); pos_full_p[:N] = batch['protein_pos']

        # side-chain re-init bookkeeping (vectorized scatter indices)
        side_rows, ca_rows = [], []
        for r in edit_res_idx:
            rows = np.where(a2r_full == r)[0]
            if len(rows) > 4:
                side_rows.append(rows[4:])
                ca_rows.append(np.full(len(rows) - 4, rows[1]))
        side_rows = (np.concatenate(side_rows) if side_rows
                     else np.zeros((0,), np.int64))
        ca_rows = (np.concatenate(ca_rows) if ca_rows
                   else np.zeros((0,), np.int64))

        # -------- shared constants --------
        addmask = np.full((1, Dp), NEG_BIG, np.float32); addmask[0, col0:D] = 0.0
        lig_pos_p = np.zeros((Lp, 3), np.float32); lig_pos_p[:L] = batch['ligand_pos']
        lig_mask = np.zeros((Lp, 1), np.float32); lig_mask[:L, 0] = 1.0
        Lfp = _rup(batch['ligand_atom_feature'].shape[1], 128)
        lig_feat_p = np.zeros((Lp, Lfp), np.float32)
        lig_feat_p[:L, :batch['ligand_atom_feature'].shape[1]] = batch['ligand_atom_feature']

        consts = dict(
            wp=self.Wp_pad, bp=self.bp_pad, wr=self.Wr_shift, br=self.br_shift,
            wl=self.Wl_pad, bl=self.bl_pad,
            addmask=jnp.asarray(addmask),
            lig_pos=jnp.asarray(lig_pos_p), lig_mask=jnp.asarray(lig_mask),
            lig_feat=jnp.asarray(lig_feat_p),
            feat_bb=jnp.asarray(feat_bb_p), expand_bb=jnp.asarray(expand_bb),
            pool_bb=jnp.asarray(pool_bb), invcnt_bb=jnp.asarray(invcnt_bb),
            rt_init_bb=jnp.asarray(rt_init_bb), onehot_bb=jnp.asarray(onehot_bb),
            rowscale_bb=jnp.asarray(rowscale_bb), atommask_bb=jnp.asarray(bbmask),
            pos_bb=jnp.asarray(pos_bb_p), interp_bb=jnp.asarray(interp_p),
            feat_full=jnp.asarray(feat_full_p), expand_full=jnp.asarray(expand_full),
            pool_full=jnp.asarray(pool_rm), invcnt_full=jnp.asarray(invcnt_rm),
            rt_init_full=jnp.asarray(rt_init_rm), onehot_full=jnp.asarray(onehot_rm),
            rowscale_full=jnp.asarray(rowscale_rm), atommask_full=jnp.asarray(fullmask),
            pos_full=jnp.asarray(pos_full_p),
            edit_rows=jnp.asarray(edit_atom_rows, jnp.int32),
            side_rows=jnp.asarray(side_rows, jnp.int32),
            ca_rows=jnp.asarray(ca_rows, jnp.int32),
        )

        inv_bb = 1.0 / (len(bb_edit_rows) * 3)
        inv_full = 1.0 / (len(edit_atom_rows) * 3)
        inv_lig = 1.0 / (L * 3)

        total, loss_pos, loss_type, _h_ligand = _forward_jit(
            key, consts, steps=steps, inv_bb=inv_bb, inv_full=inv_full, inv_lig=inv_lig)
        return total, (loss_pos, loss_type)


if __name__ == "__main__":
    key = jax.random.PRNGKey(0)
    k_params, k_data, k_noise = jax.random.split(key, 3)
    batch = make_batch(k_data)
    model = PocketDesignPallas(
        k_params,
        protein_feat_dim=batch['protein_atom_feature'].shape[1],   # 59 = 38 atom types + 21 aa
        ligand_feat_dim=batch['ligand_atom_feature'].shape[1],     # 16
        hidden=32)
    total, (loss_pos, loss_type) = model.forward(batch, k_noise)
    total = jax.block_until_ready(total)
    assert np.isfinite(float(total)), "non-finite loss"
    print("KERNEL_OK")
</pallas_src>

<mosaic_0001>
module attributes {stable_mosaic.version = 11 : i64} {
  func.func @kernel(%arg0: i32, %arg1: memref<72x128xf32, #tpu.memory_space<vmem>>, %arg2: memref<72x8xf32, #tpu.memory_space<vmem>>, %arg3: memref<128x128xbf16, #tpu.memory_space<vmem>>, %arg4: memref<1x128xf32, #tpu.memory_space<vmem>>, %arg5: memref<8x72xf32, #tpu.memory_space<vmem>>, %arg6: memref<8x1xf32, #tpu.memory_space<vmem>>, %arg7: memref<128x128xbf16, #tpu.memory_space<vmem>>, %arg8: memref<1x128xf32, #tpu.memory_space<vmem>>, %arg9: memref<8x128xf32, #tpu.memory_space<vmem>>, %arg10: memref<8x128xf32, #tpu.memory_space<vmem>>, %arg11: memref<1x128xf32, #tpu.memory_space<vmem>>, %arg12: memref<8x1xf32, #tpu.memory_space<vmem>>, %arg13: memref<72x1xf32, #tpu.memory_space<vmem>>, %arg14: memref<1x72x3xf32, #tpu.memory_space<vmem>>, %arg15: memref<72x3xf32, #tpu.memory_space<vmem>>, %arg16: memref<1x16x3xf32, #tpu.memory_space<vmem>>, %arg17: memref<16x3xf32, #tpu.memory_space<vmem>>, %arg18: memref<1x128xf32, #tpu.memory_space<vmem>>, %arg19: memref<8x128xf32, #tpu.memory_space<vmem>>) attributes {dimension_semantics = [#tpu.dimension_semantics<arbitrary>], iteration_bounds = array<i64: 5>, scalar_prefetch = 0 : i64, scratch_operands = 1 : i64, tpu.core_type = #tpu.core_type<tc>, window_params = [{pipeline_mode = #tpu.pipeline_mode<synchronous>, transform_indices = @transform_0, window_bounds = array<i64: 72, 128>}, {pipeline_mode = #tpu.pipeline_mode<synchronous>, transform_indices = @transform_1, window_bounds = array<i64: 72, 8>}, {pipeline_mode = #tpu.pipeline_mode<synchronous>, transform_indices = @transform_2, window_bounds = array<i64: 128, 128>}, {pipeline_mode = #tpu.pipeline_mode<synchronous>, transform_indices = @transform_3, window_bounds = array<i64: 1, 128>}, {pipeline_mode = #tpu.pipeline_mode<synchronous>, transform_indices = @transform_4, window_bounds = array<i64: 8, 72>}, {pipeline_mode = #tpu.pipeline_mode<synchronous>, transform_indices = @transform_5, window_bounds = array<i64: 8, 1>}, {pipeline_mode = #tpu.pipeline_mode<synchronous>, transform_indices = @transform_6, window_bounds = array<i64: 128, 128>}, {pipeline_mode = #tpu.pipeline_mode<synchronous>, transform_indices = @transform_7, window_bounds = array<i64: 1, 128>}, {pipeline_mode = #tpu.pipeline_mode<synchronous>, transform_indices = @transform_8, window_bounds = array<i64: 8, 128>}, {pipeline_mode = #tpu.pipeline_mode<synchronous>, transform_indices = @transform_9, window_bounds = array<i64: 8, 128>}, {pipeline_mode = #tpu.pipeline_mode<synchronous>, transform_indices = @transform_10, window_bounds = array<i64: 1, 128>}, {pipeline_mode = #tpu.pipeline_mode<synchronous>, transform_indices = @transform_11, window_bounds = array<i64: 8, 1>}, {pipeline_mode = #tpu.pipeline_mode<synchronous>, transform_indices = @transform_12, window_bounds = array<i64: 72, 1>}, {transform_indices = @transform_13, window_bounds = array<i64: 1, 72, 3>}, {pipeline_mode = #tpu.pipeline_mode<synchronous>, transform_indices = @transform_14, window_bounds = array<i64: 72, 3>}, {transform_indices = @transform_15, window_bounds = array<i64: 1, 16, 3>}, {pipeline_mode = #tpu.pipeline_mode<synchronous>, transform_indices = @transform_16, window_bounds = array<i64: 16, 3>}, {pipeline_mode = #tpu.pipeline_mode<synchronous>, transform_indices = @transform_17, window_bounds = array<i64: 1, 128>}]} {
    %c0_i32 = arith.constant 0 : i32
    %0 = arith.cmpi eq, %arg0, %c0_i32 : i32
    %1 = arith.extui %0 : i1 to i32
    %c0_i32_0 = arith.constant 0 : i32
    %2 = arith.cmpi ne, %1, %c0_i32_0 : i32
    scf.if %2 {
      %c0_62 = arith.constant 0 : index
      %c0_63 = arith.constant 0 : index
      %104 = vector.load %arg9[%c0_62, %c0_63] : memref<8x128xf32, #tpu.memory_space<vmem>>, vector<8x128xf32>
      %c0_64 = arith.constant 0 : index
      %c0_65 = arith.constant 0 : index
      %105 = vector.load %arg19[%c0_64, %c0_65] : memref<8x128xf32, #tpu.memory_space<vmem>>, vector<8x128xf32>
      tpu.vector_store %arg19[%c0_64, %c0_65], %104 {strides = array<i32>} : memref<8x128xf32, #tpu.memory_space<vmem>>, vector<8x128xf32>,
      %cst_66 = arith.constant 0.000000e+00 : f32
      %106 = vector.broadcast %cst_66 : f32 to vector<1x128xf32>
      %c0_67 = arith.constant 0 : index
      %c0_68 = arith.constant 0 : index
      %107 = vector.load %arg18[%c0_67, %c0_68] : memref<1x128xf32, #tpu.memory_space<vmem>>, vector<1x128xf32>
      tpu.vector_store %arg18[%c0_67, %c0_68], %106 {strides = array<i32>} : memref<1x128xf32, #tpu.memory_space<vmem>>, vector<1x128xf32>,
    } else {
    }
    %c0 = arith.constant 0 : index
    %c0_1 = arith.constant 0 : index
    %3 = vector.load %arg2[%c0, %c0_1] : memref<72x8xf32, #tpu.memory_space<vmem>>, vector<72x8xf32>
    %c0_2 = arith.constant 0 : index
    %c0_3 = arith.constant 0 : index
    %4 = vector.load %arg19[%c0_2, %c0_3] : memref<8x128xf32, #tpu.memory_space<vmem>>, vector<8x128xf32>
    %cst = arith.constant dense<0.000000e+00> : vector<72x128xf32>
    %5 = tpu.matmul %3, %4, %cst {dimension_numbers = #tpu.dot_dimension_numbers<[1], [0], [0], [1], [0, 0, 1, 1], [], []>} : vector<72x8xf32>, vector<8x128xf32>, vector<72x128xf32> -> vector<72x128xf32>
    %c0_4 = arith.constant 0 : index
    %c0_5 = arith.constant 0 : index
    %6 = vector.load %arg1[%c0_4, %c0_5] : memref<72x128xf32, #tpu.memory_space<vmem>>, vector<72x128xf32>
    %7 = arith.addf %6, %5 : vector<72x128xf32>
    %8 = arith.truncf %7 : vector<72x128xf32> to vector<72x128xbf16>
    %c0_6 = arith.constant 0 : index
    %c0_7 = arith.constant 0 : index
    %9 = vector.load %arg3[%c0_6, %c0_7] : memref<128x128xbf16, #tpu.memory_space<vmem>>, vector<128x128xbf16>
    %cst_8 = arith.constant dense<0.000000e+00> : vector<72x128xf32>
    %10 = tpu.matmul %8, %9, %cst_8 {dimension_numbers = #tpu.dot_dimension_numbers<[1], [0], [0], [1], [0, 0, 1, 1], [], []>} : vector<72x128xbf16>, vector<128x128xbf16>, vector<72x128xf32> -> vector<72x128xf32>
    %c0_9 = arith.constant 0 : index
    %c0_10 = arith.constant 0 : index
    %11 = vector.load %arg4[%c0_9, %c0_10] : memref<1x128xf32, #tpu.memory_space<vmem>>, vector<1x128xf32>
    %12 = vector.broadcast %11 : vector<1x128xf32> to vector<72x128xf32>
    %13 = arith.addf %10, %12 : vector<72x128xf32>
    %c0_11 = arith.constant 0 : index
    %c0_12 = arith.constant 0 : index
    %14 = vector.load %arg5[%c0_11, %c0_12] : memref<8x72xf32, #tpu.memory_space<vmem>>, vector<8x72xf32>
    %cst_13 = arith.constant dense<0.000000e+00> : vector<8x128xf32>
    %15 = tpu.matmul %14, %13, %cst_13 {dimension_numbers = #tpu.dot_dimension_numbers<[1], [0], [0], [1], [0, 0, 1, 1], [], []>} : vector<8x72xf32>, vector<72x128xf32>, vector<8x128xf32> -> vector<8x128xf32>
    %c0_14 = arith.constant 0 : index
    %c0_15 = arith.constant 0 : index
    %16 = vector.load %arg6[%c0_14, %c0_15] : memref<8x1xf32, #tpu.memory_space<vmem>>, vector<8x1xf32>
    %17 = vector.broadcast %16 : vector<8x1xf32> to vector<8x128xf32>
    %18 = arith.mulf %15, %17 : vector<8x128xf32>
    %19 = arith.truncf %18 : vector<8x128xf32> to vector<8x128xbf16>
    %c0_16 = arith.constant 0 : index
    %c0_17 = arith.constant 0 : index
    %20 = vector.load %arg7[%c0_16, %c0_17] : memref<128x128xbf16, #tpu.memory_space<vmem>>, vector<128x128xbf16>
    %cst_18 = arith.constant dense<0.000000e+00> : vector<8x128xf32>
    %21 = tpu.matmul %19, %20, %cst_18 {dimension_numbers = #tpu.dot_dimension_numbers<[1], [0], [0], [1], [0, 0, 1, 1], [], []>} : vector<8x128xbf16>, vector<128x128xbf16>, vector<8x128xf32> -> vector<8x128xf32>
    %c0_19 = arith.constant 0 : index
    %c0_20 = arith.constant 0 : index
    %22 = vector.load %arg8[%c0_19, %c0_20] : memref<1x128xf32, #tpu.memory_space<vmem>>, vector<1x128xf32>
    %23 = vector.broadcast %22 : vector<1x128xf32> to vector<8x128xf32>
    %24 = arith.addf %21, %23 : vector<8x128xf32>
    %c0_21 = arith.constant 0 : index
    %c0_22 = arith.constant 0 : index
    %25 = vector.load %arg19[%c0_21, %c0_22] : memref<8x128xf32, #tpu.memory_space<vmem>>, vector<8x128xf32>
    tpu.vector_store %arg19[%c0_21, %c0_22], %24 {strides = array<i32>} : memref<8x128xf32, #tpu.memory_space<vmem>>, vector<8x128xf32>,
    %c0_23 = arith.constant 0 : index
    %c0_24 = arith.constant 0 : index
    %26 = vector.load %arg11[%c0_23, %c0_24] : memref<1x128xf32, #tpu.memory_space<vmem>>, vector<1x128xf32>
    %27 = vector.broadcast %26 : vector<1x128xf32> to vector<8x128xf32>
    %28 = arith.addf %24, %27 : vector<8x128xf32>
    %cst_25 = arith.constant dense<0xFF800000> : vector<8xf32>
    %29 = vector.multi_reduction <maximumf>, %28, %cst_25 [1] : vector<8x128xf32> to vector<8xf32>
    %30 = vector.shape_cast %29 : vector<8xf32> to vector<8x1xf32>
    %31 = vector.broadcast %30 : vector<8x1xf32> to vector<8x128xf32>
    %32 = arith.subf %28, %31 : vector<8x128xf32>
    %33 = math.exp %32 : vector<8x128xf32>
    %cst_26 = arith.constant dense<0.000000e+00> : vector<8xf32>
    %34 = vector.multi_reduction <add>, %33, %cst_26 [1] : vector<8x128xf32> to vector<8xf32>
    %35 = vector.shape_cast %34 : vector<8xf32> to vector<8x1xf32>
    %36 = math.log %35 : vector<8x1xf32>
    %37 = arith.addf %36, %30 : vector<8x1xf32>
    %c0_27 = arith.constant 0 : index
    %c0_28 = arith.constant 0 : index
    %38 = vector.load %arg10[%c0_27, %c0_28] : memref<8x128xf32, #tpu.memory_space<vmem>>, vector<8x128xf32>
    %39 = arith.mulf %38, %24 : vector<8x128xf32>
    %cst_29 = arith.constant dense<0.000000e+00> : vector<8xf32>
    %40 = vector.multi_reduction <add>, %39, %cst_29 [1] : vector<8x128xf32> to vector<8xf32>
    %41 = vector.shape_cast %40 : vector<8xf32> to vector<8x1xf32>
    %42 = arith.subf %37, %41 : vector<8x1xf32>
    %c0_30 = arith.constant 0 : index
    %c0_31 = arith.constant 0 : index
    %43 = vector.load %arg12[%c0_30, %c0_31] : memref<8x1xf32, #tpu.memory_space<vmem>>, vector<8x1xf32>
    %44 = arith.mulf %42, %43 : vector<8x1xf32>
    %45 = vector.shape_cast %44 : vector<8x1xf32> to vector<1x8x1xf32>
    %cst_32 = arith.constant dense<0.000000e+00> : vector<1xf32>
    %46 = vector.multi_reduction <add>, %45, %cst_32 [1, 2] : vector<1x8x1xf32> to vector<1xf32>
    %47 = vector.shape_cast %46 : vector<1xf32> to vector<1x1x1xf32>
    %48 = vector.extract %47[0, 0, 0] : f32 from vector<1x1x1xf32>
    %c0_33 = arith.constant 0 : index
    %c0_34 = arith.constant 0 : index
    %c0_35 = arith.constant 0 : index
    %49 = vector.load %arg14[%c0_33, %c0_34, %c0_35] : memref<1x72x3xf32, #tpu.memory_space<vmem>>, vector<1x72x3xf32>
    %50 = vector.shape_cast %49 : vector<1x72x3xf32> to vector<72x3xf32>
    %c0_36 = arith.constant 0 : index
    %c0_37 = arith.constant 0 : index
    %51 = vector.load %arg15[%c0_36, %c0_37] : memref<72x3xf32, #tpu.memory_space<vmem>>, vector<72x3xf32>
    %52 = arith.subf %50, %51 : vector<72x3xf32>
    %c0_38 = arith.constant 0 : index
    %c0_39 = arith.constant 0 : index
    %53 = vector.load %arg13[%c0_38, %c0_39] : memref<72x1xf32, #tpu.memory_space<vmem>>, vector<72x1xf32>
    %54 = vector.broadcast %53 : vector<72x1xf32> to vector<72x3xf32>
    %55 = arith.mulf %52, %54 : vector<72x3xf32>
    %56 = math.absf %55 : vector<72x3xf32>
    %cst_40 = arith.constant 1.000000e+00 : f32
    %57 = vector.broadcast %cst_40 : f32 to vector<72x3xf32>
    %58 = arith.cmpf olt, %56, %57 : vector<72x3xf32>
    %cst_41 = arith.constant 5.000000e-01 : f32
    %59 = vector.broadcast %cst_41 : f32 to vector<72x3xf32>
    %60 = arith.mulf %59, %55 : vector<72x3xf32>
    %61 = arith.mulf %60, %55 : vector<72x3xf32>
    %cst_42 = arith.constant 5.000000e-01 : f32
    %62 = vector.broadcast %cst_42 : f32 to vector<72x3xf32>
    %63 = arith.subf %56, %62 : vector<72x3xf32>
    %64 = arith.select %58, %61, %63 : vector<72x3xi1>, vector<72x3xf32>
    %65 = vector.shape_cast %64 : vector<72x3xf32> to vector<1x72x3xf32>
    %cst_43 = arith.constant dense<0.000000e+00> : vector<1xf32>
    %66 = vector.multi_reduction <add>, %65, %cst_43 [1, 2] : vector<1x72x3xf32> to vector<1xf32>
    %67 = vector.shape_cast %66 : vector<1xf32> to vector<1x1x1xf32>
    %68 = vector.extract %67[0, 0, 0] : f32 from vector<1x1x1xf32>
    %cst_44 = arith.constant 0.0114942528 : f32
    %69 = arith.mulf %68, %cst_44 : f32
    %c0_45 = arith.constant 0 : index
    %c0_46 = arith.constant 0 : index
    %c0_47 = arith.constant 0 : index
    %70 = vector.load %arg16[%c0_45, %c0_46, %c0_47] : memref<1x16x3xf32, #tpu.memory_space<vmem>>, vector<1x16x3xf32>
    %71 = vector.shape_cast %70 : vector<1x16x3xf32> to vector<16x3xf32>
    %c0_48 = arith.constant 0 : index
    %c0_49 = arith.constant 0 : index
    %72 = vector.load %arg17[%c0_48, %c0_49] : memref<16x3xf32, #tpu.memory_space<vmem>>, vector<16x3xf32>
    %73 = arith.subf %71, %72 : vector<16x3xf32>
    %74 = math.absf %73 : vector<16x3xf32>
    %cst_50 = arith.constant 1.000000e+00 : f32
    %75 = vector.broadcast %cst_50 : f32 to vector<16x3xf32>
    %76 = arith.cmpf olt, %74, %75 : vector<16x3xf32>
    %cst_51 = arith.constant 5.000000e-01 : f32
    %77 = vector.broadcast %cst_51 : f32 to vector<16x3xf32>
    %78 = arith.mulf %77, %73 : vector<16x3xf32>
    %79 = arith.mulf %78, %73 : vector<16x3xf32>
    %cst_52 = arith.constant 5.000000e-01 : f32
    %80 = vector.broadcast %cst_52 : f32 to vector<16x3xf32>
    %81 = arith.subf %74, %80 : vector<16x3xf32>
    %82 = arith.select %76, %79, %81 : vector<16x3xi1>, vector<16x3xf32>
    %83 = vector.shape_cast %82 : vector<16x3xf32> to vector<1x16x3xf32>
    %cst_53 = arith.constant dense<0.000000e+00> : vector<1xf32>
    %84 = vector.multi_reduction <add>, %83, %cst_53 [1, 2] : vector<1x16x3xf32> to vector<1xf32>
    %85 = vector.shape_cast %84 : vector<1xf32> to vector<1x1x1xf32>
    %86 = vector.extract %85[0, 0, 0] : f32 from vector<1x1x1xf32>
    %cst_54 = arith.constant 0.027777778 : f32
    %87 = arith.mulf %86, %cst_54 : f32
    %88 = tpu.iota {dimensions = array<i32: 1>} : vector<1x128xi32>
    %c0_i32_55 = arith.constant 0 : i32
    %89 = vector.broadcast %c0_i32_55 : i32 to vector<1x128xi32>
    %90 = arith.cmpi eq, %88, %89 : vector<1x128xi32>
    %91 = arith.addf %69, %87 : f32
    %cst_56 = arith.constant 0.000000e+00 : f32
    %92 = vector.broadcast %91 : f32 to vector<1x128xf32>
    %93 = vector.broadcast %cst_56 : f32 to vector<1x128xf32>
    %94 = arith.select %90, %92, %93 : vector<1x128xi1>, vector<1x128xf32>
    %c1_i32 = arith.constant 1 : i32
    %95 = vector.broadcast %c1_i32 : i32 to vector<1x128xi32>
    %96 = arith.cmpi eq, %88, %95 : vector<1x128xi32>
    %cst_57 = arith.constant 0.000000e+00 : f32
    %97 = vector.broadcast %48 : f32 to vector<1x128xf32>
    %98 = vector.broadcast %cst_57 : f32 to vector<1x128xf32>
    %99 = arith.select %96, %97, %98 : vector<1x128xi1>, vector<1x128xf32>
    %100 = arith.addf %94, %99 : vector<1x128xf32>
    %c0_58 = arith.constant 0 : index
    %c0_59 = arith.constant 0 : index
    %101 = vector.load %arg18[%c0_58, %c0_59] : memref<1x128xf32, #tpu.memory_space<vmem>>, vector<1x128xf32>
    %102 = arith.addf %101, %100 : vector<1x128xf32>
    %c0_60 = arith.constant 0 : index
    %c0_61 = arith.constant 0 : index
    %103 = vector.load %arg18[%c0_60, %c0_61] : memref<1x128xf32, #tpu.memory_space<vmem>>, vector<1x128xf32>
    tpu.vector_store %arg18[%c0_60, %c0_61], %102 {strides = array<i32>} : memref<1x128xf32, #tpu.memory_space<vmem>>, vector<1x128xf32>,
    return
  }
  func.func @transform_0(%arg0: i32) -> (i32, i32) {
    %c0_i32 = arith.constant 0 : i32
    %c0_i32_0 = arith.constant 0 : i32
    %c0_i32_1 = arith.constant 0 : i32
    return %c0_i32, %c0_i32_0 : i32, i32
  }
  func.func @transform_1(%arg0: i32) -> (i32, i32) {
    %c0_i32 = arith.constant 0 : i32
    %c0_i32_0 = arith.constant 0 : i32
    %c0_i32_1 = arith.constant 0 : i32
    return %c0_i32, %c0_i32_0 : i32, i32
  }
  func.func @transform_2(%arg0: i32) -> (i32, i32) {
    %c0_i32 = arith.constant 0 : i32
    %c0_i32_0 = arith.constant 0 : i32
    %c0_i32_1 = arith.constant 0 : i32
    return %c0_i32, %c0_i32_0 : i32, i32
  }
  func.func @transform_3(%arg0: i32) -> (i32, i32) {
    %c0_i32 = arith.constant 0 : i32
    %c0_i32_0 = arith.constant 0 : i32
    %c0_i32_1 = arith.constant 0 : i32
    return %c0_i32, %c0_i32_0 : i32, i32
  }
  func.func @transform_4(%arg0: i32) -> (i32, i32) {
    %c0_i32 = arith.constant 0 : i32
    %c0_i32_0 = arith.constant 0 : i32
    %c0_i32_1 = arith.constant 0 : i32
    return %c0_i32, %c0_i32_0 : i32, i32
  }
  func.func @transform_5(%arg0: i32) -> (i32, i32) {
    %c0_i32 = arith.constant 0 : i32
    %c0_i32_0 = arith.constant 0 : i32
    %c0_i32_1 = arith.constant 0 : i32
    return %c0_i32, %c0_i32_0 : i32, i32
  }
  func.func @transform_6(%arg0: i32) -> (i32, i32) {
    %c0_i32 = arith.constant 0 : i32
    %c0_i32_0 = arith.constant 0 : i32
    %c0_i32_1 = arith.constant 0 : i32
    return %c0_i32, %c0_i32_0 : i32, i32
  }
  func.func @transform_7(%arg0: i32) -> (i32, i32) {
    %c0_i32 = arith.constant 0 : i32
    %c0_i32_0 = arith.constant 0 : i32
    %c0_i32_1 = arith.constant 0 : i32
    return %c0_i32, %c0_i32_0 : i32, i32
  }
  func.func @transform_8(%arg0: i32) -> (i32, i32) {
    %c0_i32 = arith.constant 0 : i32
    %c0_i32_0 = arith.constant 0 : i32
    %c0_i32_1 = arith.constant 0 : i32
    return %c0_i32, %c0_i32_0 : i32, i32
  }
  func.func @transform_9(%arg0: i32) -> (i32, i32) {
    %c0_i32 = arith.constant 0 : i32
    %c0_i32_0 = arith.constant 0 : i32
    %c0_i32_1 = arith.constant 0 : i32
    return %c0_i32, %c0_i32_0 : i32, i32
  }
  func.func @transform_10(%arg0: i32) -> (i32, i32) {
    %c0_i32 = arith.constant 0 : i32
    %c0_i32_0 = arith.constant 0 : i32
    %c0_i32_1 = arith.constant 0 : i32
    return %c0_i32, %c0_i32_0 : i32, i32
  }
  func.func @transform_11(%arg0: i32) -> (i32, i32) {
    %c0_i32 = arith.constant 0 : i32
    %c0_i32_0 = arith.constant 0 : i32
    %c0_i32_1 = arith.constant 0 : i32
    return %c0_i32, %c0_i32_0 : i32, i32
  }
  func.func @transform_12(%arg0: i32) -> (i32, i32) {
    %c0_i32 = arith.constant 0 : i32
    %c0_i32_0 = arith.constant 0 : i32
    %c0_i32_1 = arith.constant 0 : i32
    return %c0_i32, %c0_i32_0 : i32, i32
  }
  func.func @transform_13(%arg0: i32) -> (i32, i32, i32) {
    %c0_i32 = arith.constant 0 : i32
    %c0_i32_0 = arith.constant 0 : i32
    %c0_i32_1 = arith.constant 0 : i32
    return %arg0, %c0_i32, %c0_i32_0 : i32, i32, i32
  }
  func.func @transform_14(%arg0: i32) -> (i32, i32) {
    %c0_i32 = arith.constant 0 : i32
    %c0_i32_0 = arith.constant 0 : i32
    %c0_i32_1 = arith.constant 0 : i32
    return %c0_i32, %c0_i32_0 : i32, i32
  }
  func.func @transform_15(%arg0: i32) -> (i32, i32, i32) {
    %c0_i32 = arith.constant 0 : i32
    %c0_i32_0 = arith.constant 0 : i32
    %c0_i32_1 = arith.constant 0 : i32
    return %arg0, %c0_i32, %c0_i32_0 : i32, i32, i32
  }
  func.func @transform_16(%arg0: i32) -> (i32, i32) {
    %c0_i32 = arith.constant 0 : i32
    %c0_i32_0 = arith.constant 0 : i32
    %c0_i32_1 = arith.constant 0 : i32
    return %c0_i32, %c0_i32_0 : i32, i32
  }
  func.func @transform_17(%arg0: i32) -> (i32, i32) {
    %c0_i32 = arith.constant 0 : i32
    %c0_i32_0 = arith.constant 0 : i32
    %c0_i32_1 = arith.constant 0 : i32
    return %c0_i32, %c0_i32_0 : i32, i32
  }
}

module attributes {stable_mosaic.version = 11 : i64} {
  func.func @_linear_kernel(%arg0: i32, %arg1: memref<16x128xf32, #tpu.memory_space<vmem>>, %arg2: memref<128x128xbf16, #tpu.memory_space<vmem>>, %arg3: memref<1x128xf32, #tpu.memory_space<vmem>>, %arg4: memref<16x128xf32, #tpu.memory_space<vmem>>) attributes {dimension_semantics = [#tpu.dimension_semantics<arbitrary>], iteration_bounds = array<i64: 1>, scalar_prefetch = 0 : i64, scratch_operands = 0 : i64, tpu.core_type = #tpu.core_type<tc>, window_params = [{pipeline_mode = #tpu.pipeline_mode<synchronous>, transform_indices = @transform_0, window_bounds = array<i64: 16, 128>}, {pipeline_mode = #tpu.pipeline_mode<synchronous>, transform_indices = @transform_1, window_bounds = array<i64: 128, 128>}, {pipeline_mode = #tpu.pipeline_mode<synchronous>, transform_indices = @transform_2, window_bounds = array<i64: 1, 128>}, {pipeline_mode = #tpu.pipeline_mode<synchronous>, transform_indices = @transform_3, window_bounds = array<i64: 16, 128>}]} {
    %c0 = arith.constant 0 : index
    %c0_0 = arith.constant 0 : index
    %0 = vector.load %arg1[%c0, %c0_0] : memref<16x128xf32, #tpu.memory_space<vmem>>, vector<16x128xf32>
    %1 = arith.truncf %0 : vector<16x128xf32> to vector<16x128xbf16>
    %c0_1 = arith.constant 0 : index
    %c0_2 = arith.constant 0 : index
    %2 = vector.load %arg2[%c0_1, %c0_2] : memref<128x128xbf16, #tpu.memory_space<vmem>>, vector<128x128xbf16>
    %cst = arith.constant dense<0.000000e+00> : vector<16x128xf32>
    %3 = tpu.matmul %1, %2, %cst {dimension_numbers = #tpu.dot_dimension_numbers<[1], [0], [0], [1], [0, 0, 1, 1], [], []>} : vector<16x128xbf16>, vector<128x128xbf16>, vector<16x128xf32> -> vector<16x128xf32>
    %c0_3 = arith.constant 0 : index
    %c0_4 = arith.constant 0 : index
    %4 = vector.load %arg3[%c0_3, %c0_4] : memref<1x128xf32, #tpu.memory_space<vmem>>, vector<1x128xf32>
    %5 = vector.broadcast %4 : vector<1x128xf32> to vector<16x128xf32>
    %6 = arith.addf %3, %5 : vector<16x128xf32>
    %c0_5 = arith.constant 0 : index
    %c0_6 = arith.constant 0 : index
    %7 = vector.load %arg4[%c0_5, %c0_6] : memref<16x128xf32, #tpu.memory_space<vmem>>, vector<16x128xf32>
    tpu.vector_store %arg4[%c0_5, %c0_6], %6 {strides = array<i32>} : memref<16x128xf32, #tpu.memory_space<vmem>>, vector<16x128xf32>,
    return
  }
  func.func @transform_0(%arg0: i32) -> (i32, i32) {
    %c0_i32 = arith.constant 0 : i32
    %c0_i32_0 = arith.constant 0 : i32
    %c0_i32_1 = arith.constant 0 : i32
    return %c0_i32, %c0_i32_0 : i32, i32
  }
  func.func @transform_1(%arg0: i32) -> (i32, i32) {
    %c0_i32 = arith.constant 0 : i32
    %c0_i32_0 = arith.constant 0 : i32
    %c0_i32_1 = arith.constant 0 : i32
    return %c0_i32, %c0_i32_0 : i32, i32
  }
  func.func @transform_2(%arg0: i32) -> (i32, i32) {
    %c0_i32 = arith.constant 0 : i32
    %c0_i32_0 = arith.constant 0 : i32
    %c0_i32_1 = arith.constant 0 : i32
    return %c0_i32, %c0_i32_0 : i32, i32
  }
  func.func @transform_3(%arg0: i32) -> (i32, i32) {
    %c0_i32 = arith.constant 0 : i32
    %c0_i32_0 = arith.constant 0 : i32
    %c0_i32_1 = arith.constant 0 : i32
    return %c0_i32, %c0_i32_0 : i32, i32
  }
}

module attributes {stable_mosaic.version = 11 : i64} {
  func.func @kernel(%arg0: i32, %arg1: memref<32x128xf32, #tpu.memory_space<vmem>>, %arg2: memref<32x8xf32, #tpu.memory_space<vmem>>, %arg3: memref<128x128xbf16, #tpu.memory_space<vmem>>, %arg4: memref<1x128xf32, #tpu.memory_space<vmem>>, %arg5: memref<8x32xf32, #tpu.memory_space<vmem>>, %arg6: memref<8x1xf32, #tpu.memory_space<vmem>>, %arg7: memref<128x128xbf16, #tpu.memory_space<vmem>>, %arg8: memref<1x128xf32, #tpu.memory_space<vmem>>, %arg9: memref<8x128xf32, #tpu.memory_space<vmem>>, %arg10: memref<8x128xf32, #tpu.memory_space<vmem>>, %arg11: memref<1x128xf32, #tpu.memory_space<vmem>>, %arg12: memref<8x1xf32, #tpu.memory_space<vmem>>, %arg13: memref<32x1xf32, #tpu.memory_space<vmem>>, %arg14: memref<1x32x3xf32, #tpu.memory_space<vmem>>, %arg15: memref<32x3xf32, #tpu.memory_space<vmem>>, %arg16: memref<1x16x3xf32, #tpu.memory_space<vmem>>, %arg17: memref<16x3xf32, #tpu.memory_space<vmem>>, %arg18: memref<1x128xf32, #tpu.memory_space<vmem>>, %arg19: memref<8x128xf32, #tpu.memory_space<vmem>>) attributes {dimension_semantics = [#tpu.dimension_semantics<arbitrary>], iteration_bounds = array<i64: 5>, scalar_prefetch = 0 : i64, scratch_operands = 1 : i64, tpu.core_type = #tpu.core_type<tc>, window_params = [{pipeline_mode = #tpu.pipeline_mode<synchronous>, transform_indices = @transform_0, window_bounds = array<i64: 32, 128>}, {pipeline_mode = #tpu.pipeline_mode<synchronous>, transform_indices = @transform_1, window_bounds = array<i64: 32, 8>}, {pipeline_mode = #tpu.pipeline_mode<synchronous>, transform_indices = @transform_2, window_bounds = array<i64: 128, 128>}, {pipeline_mode = #tpu.pipeline_mode<synchronous>, transform_indices = @transform_3, window_bounds = array<i64: 1, 128>}, {pipeline_mode = #tpu.pipeline_mode<synchronous>, transform_indices = @transform_4, window_bounds = array<i64: 8, 32>}, {pipeline_mode = #tpu.pipeline_mode<synchronous>, transform_indices = @transform_5, window_bounds = array<i64: 8, 1>}, {pipeline_mode = #tpu.pipeline_mode<synchronous>, transform_indices = @transform_6, window_bounds = array<i64: 128, 128>}, {pipeline_mode = #tpu.pipeline_mode<synchronous>, transform_indices = @transform_7, window_bounds = array<i64: 1, 128>}, {pipeline_mode = #tpu.pipeline_mode<synchronous>, transform_indices = @transform_8, window_bounds = array<i64: 8, 128>}, {pipeline_mode = #tpu.pipeline_mode<synchronous>, transform_indices = @transform_9, window_bounds = array<i64: 8, 128>}, {pipeline_mode = #tpu.pipeline_mode<synchronous>, transform_indices = @transform_10, window_bounds = array<i64: 1, 128>}, {pipeline_mode = #tpu.pipeline_mode<synchronous>, transform_indices = @transform_11, window_bounds = array<i64: 8, 1>}, {pipeline_mode = #tpu.pipeline_mode<synchronous>, transform_indices = @transform_12, window_bounds = array<i64: 32, 1>}, {transform_indices = @transform_13, window_bounds = array<i64: 1, 32, 3>}, {pipeline_mode = #tpu.pipeline_mode<synchronous>, transform_indices = @transform_14, window_bounds = array<i64: 32, 3>}, {transform_indices = @transform_15, window_bounds = array<i64: 1, 16, 3>}, {pipeline_mode = #tpu.pipeline_mode<synchronous>, transform_indices = @transform_16, window_bounds = array<i64: 16, 3>}, {pipeline_mode = #tpu.pipeline_mode<synchronous>, transform_indices = @transform_17, window_bounds = array<i64: 1, 128>}]} {
    %c0_i32 = arith.constant 0 : i32
    %0 = arith.cmpi eq, %arg0, %c0_i32 : i32
    %1 = arith.extui %0 : i1 to i32
    %c0_i32_0 = arith.constant 0 : i32
    %2 = arith.cmpi ne, %1, %c0_i32_0 : i32
    scf.if %2 {
      %c0_62 = arith.constant 0 : index
      %c0_63 = arith.constant 0 : index
      %104 = vector.load %arg9[%c0_62, %c0_63] : memref<8x128xf32, #tpu.memory_space<vmem>>, vector<8x128xf32>
      %c0_64 = arith.constant 0 : index
      %c0_65 = arith.constant 0 : index
      %105 = vector.load %arg19[%c0_64, %c0_65] : memref<8x128xf32, #tpu.memory_space<vmem>>, vector<8x128xf32>
      tpu.vector_store %arg19[%c0_64, %c0_65], %104 {strides = array<i32>} : memref<8x128xf32, #tpu.memory_space<vmem>>, vector<8x128xf32>,
      %cst_66 = arith.constant 0.000000e+00 : f32
      %106 = vector.broadcast %cst_66 : f32 to vector<1x128xf32>
      %c0_67 = arith.constant 0 : index
      %c0_68 = arith.constant 0 : index
      %107 = vector.load %arg18[%c0_67, %c0_68] : memref<1x128xf32, #tpu.memory_space<vmem>>, vector<1x128xf32>
      tpu.vector_store %arg18[%c0_67, %c0_68], %106 {strides = array<i32>} : memref<1x128xf32, #tpu.memory_space<vmem>>, vector<1x128xf32>,
    } else {
    }
    %c0 = arith.constant 0 : index
    %c0_1 = arith.constant 0 : index
    %3 = vector.load %arg2[%c0, %c0_1] : memref<32x8xf32, #tpu.memory_space<vmem>>, vector<32x8xf32>
    %c0_2 = arith.constant 0 : index
    %c0_3 = arith.constant 0 : index
    %4 = vector.load %arg19[%c0_2, %c0_3] : memref<8x128xf32, #tpu.memory_space<vmem>>, vector<8x128xf32>
    %cst = arith.constant dense<0.000000e+00> : vector<32x128xf32>
    %5 = tpu.matmul %3, %4, %cst {dimension_numbers = #tpu.dot_dimension_numbers<[1], [0], [0], [1], [0, 0, 1, 1], [], []>} : vector<32x8xf32>, vector<8x128xf32>, vector<32x128xf32> -> vector<32x128xf32>
    %c0_4 = arith.constant 0 : index
    %c0_5 = arith.constant 0 : index
    %6 = vector.load %arg1[%c0_4, %c0_5] : memref<32x128xf32, #tpu.memory_space<vmem>>, vector<32x128xf32>
    %7 = arith.addf %6, %5 : vector<32x128xf32>
    %8 = arith.truncf %7 : vector<32x128xf32> to vector<32x128xbf16>
    %c0_6 = arith.constant 0 : index
    %c0_7 = arith.constant 0 : index
    %9 = vector.load %arg3[%c0_6, %c0_7] : memref<128x128xbf16, #tpu.memory_space<vmem>>, vector<128x128xbf16>
    %cst_8 = arith.constant dense<0.000000e+00> : vector<32x128xf32>
    %10 = tpu.matmul %8, %9, %cst_8 {dimension_numbers = #tpu.dot_dimension_numbers<[1], [0], [0], [1], [0, 0, 1, 1], [], []>} : vector<32x128xbf16>, vector<128x128xbf16>, vector<32x128xf32> -> vector<32x128xf32>
    %c0_9 = arith.constant 0 : index
    %c0_10 = arith.constant 0 : index
    %11 = vector.load %arg4[%c0_9, %c0_10] : memref<1x128xf32, #tpu.memory_space<vmem>>, vector<1x128xf32>
    %12 = vector.broadcast %11 : vector<1x128xf32> to vector<32x128xf32>
    %13 = arith.addf %10, %12 : vector<32x128xf32>
    %c0_11 = arith.constant 0 : index
    %c0_12 = arith.constant 0 : index
    %14 = vector.load %arg5[%c0_11, %c0_12] : memref<8x32xf32, #tpu.memory_space<vmem>>, vector<8x32xf32>
    %cst_13 = arith.constant dense<0.000000e+00> : vector<8x128xf32>
    %15 = tpu.matmul %14, %13, %cst_13 {dimension_numbers = #tpu.dot_dimension_numbers<[1], [0], [0], [1], [0, 0, 1, 1], [], []>} : vector<8x32xf32>, vector<32x128xf32>, vector<8x128xf32> -> vector<8x128xf32>
    %c0_14 = arith.constant 0 : index
    %c0_15 = arith.constant 0 : index
    %16 = vector.load %arg6[%c0_14, %c0_15] : memref<8x1xf32, #tpu.memory_space<vmem>>, vector<8x1xf32>
    %17 = vector.broadcast %16 : vector<8x1xf32> to vector<8x128xf32>
    %18 = arith.mulf %15, %17 : vector<8x128xf32>
    %19 = arith.truncf %18 : vector<8x128xf32> to vector<8x128xbf16>
    %c0_16 = arith.constant 0 : index
    %c0_17 = arith.constant 0 : index
    %20 = vector.load %arg7[%c0_16, %c0_17] : memref<128x128xbf16, #tpu.memory_space<vmem>>, vector<128x128xbf16>
    %cst_18 = arith.constant dense<0.000000e+00> : vector<8x128xf32>
    %21 = tpu.matmul %19, %20, %cst_18 {dimension_numbers = #tpu.dot_dimension_numbers<[1], [0], [0], [1], [0, 0, 1, 1], [], []>} : vector<8x128xbf16>, vector<128x128xbf16>, vector<8x128xf32> -> vector<8x128xf32>
    %c0_19 = arith.constant 0 : index
    %c0_20 = arith.constant 0 : index
    %22 = vector.load %arg8[%c0_19, %c0_20] : memref<1x128xf32, #tpu.memory_space<vmem>>, vector<1x128xf32>
    %23 = vector.broadcast %22 : vector<1x128xf32> to vector<8x128xf32>
    %24 = arith.addf %21, %23 : vector<8x128xf32>
    %c0_21 = arith.constant 0 : index
    %c0_22 = arith.constant 0 : index
    %25 = vector.load %arg19[%c0_21, %c0_22] : memref<8x128xf32, #tpu.memory_space<vmem>>, vector<8x128xf32>
    tpu.vector_store %arg19[%c0_21, %c0_22], %24 {strides = array<i32>} : memref<8x128xf32, #tpu.memory_space<vmem>>, vector<8x128xf32>,
    %c0_23 = arith.constant 0 : index
    %c0_24 = arith.constant 0 : index
    %26 = vector.load %arg11[%c0_23, %c0_24] : memref<1x128xf32, #tpu.memory_space<vmem>>, vector<1x128xf32>
    %27 = vector.broadcast %26 : vector<1x128xf32> to vector<8x128xf32>
    %28 = arith.addf %24, %27 : vector<8x128xf32>
    %cst_25 = arith.constant dense<0xFF800000> : vector<8xf32>
    %29 = vector.multi_reduction <maximumf>, %28, %cst_25 [1] : vector<8x128xf32> to vector<8xf32>
    %30 = vector.shape_cast %29 : vector<8xf32> to vector<8x1xf32>
    %31 = vector.broadcast %30 : vector<8x1xf32> to vector<8x128xf32>
    %32 = arith.subf %28, %31 : vector<8x128xf32>
    %33 = math.exp %32 : vector<8x128xf32>
    %cst_26 = arith.constant dense<0.000000e+00> : vector<8xf32>
    %34 = vector.multi_reduction <add>, %33, %cst_26 [1] : vector<8x128xf32> to vector<8xf32>
    %35 = vector.shape_cast %34 : vector<8xf32> to vector<8x1xf32>
    %36 = math.log %35 : vector<8x1xf32>
    %37 = arith.addf %36, %30 : vector<8x1xf32>
    %c0_27 = arith.constant 0 : index
    %c0_28 = arith.constant 0 : index
    %38 = vector.load %arg10[%c0_27, %c0_28] : memref<8x128xf32, #tpu.memory_space<vmem>>, vector<8x128xf32>
    %39 = arith.mulf %38, %24 : vector<8x128xf32>
    %cst_29 = arith.constant dense<0.000000e+00> : vector<8xf32>
    %40 = vector.multi_reduction <add>, %39, %cst_29 [1] : vector<8x128xf32> to vector<8xf32>
    %41 = vector.shape_cast %40 : vector<8xf32> to vector<8x1xf32>
    %42 = arith.subf %37, %41 : vector<8x1xf32>
    %c0_30 = arith.constant 0 : index
    %c0_31 = arith.constant 0 : index
    %43 = vector.load %arg12[%c0_30, %c0_31] : memref<8x1xf32, #tpu.memory_space<vmem>>, vector<8x1xf32>
    %44 = arith.mulf %42, %43 : vector<8x1xf32>
    %45 = vector.shape_cast %44 : vector<8x1xf32> to vector<1x8x1xf32>
    %cst_32 = arith.constant dense<0.000000e+00> : vector<1xf32>
    %46 = vector.multi_reduction <add>, %45, %cst_32 [1, 2] : vector<1x8x1xf32> to vector<1xf32>
    %47 = vector.shape_cast %46 : vector<1xf32> to vector<1x1x1xf32>
    %48 = vector.extract %47[0, 0, 0] : f32 from vector<1x1x1xf32>
    %c0_33 = arith.constant 0 : index
    %c0_34 = arith.constant 0 : index
    %c0_35 = arith.constant 0 : index
    %49 = vector.load %arg14[%c0_33, %c0_34, %c0_35] : memref<1x32x3xf32, #tpu.memory_space<vmem>>, vector<1x32x3xf32>
    %50 = vector.shape_cast %49 : vector<1x32x3xf32> to vector<32x3xf32>
    %c0_36 = arith.constant 0 : index
    %c0_37 = arith.constant 0 : index
    %51 = vector.load %arg15[%c0_36, %c0_37] : memref<32x3xf32, #tpu.memory_space<vmem>>, vector<32x3xf32>
    %52 = arith.subf %50, %51 : vector<32x3xf32>
    %c0_38 = arith.constant 0 : index
    %c0_39 = arith.constant 0 : index
    %53 = vector.load %arg13[%c0_38, %c0_39] : memref<32x1xf32, #tpu.memory_space<vmem>>, vector<32x1xf32>
    %54 = vector.broadcast %53 : vector<32x1xf32> to vector<32x3xf32>
    %55 = arith.mulf %52, %54 : vector<32x3xf32>
    %56 = math.absf %55 : vector<32x3xf32>
    %cst_40 = arith.constant 1.000000e+00 : f32
    %57 = vector.broadcast %cst_40 : f32 to vector<32x3xf32>
    %58 = arith.cmpf olt, %56, %57 : vector<32x3xf32>
    %cst_41 = arith.constant 5.000000e-01 : f32
    %59 = vector.broadcast %cst_41 : f32 to vector<32x3xf32>
    %60 = arith.mulf %59, %55 : vector<32x3xf32>
    %61 = arith.mulf %60, %55 : vector<32x3xf32>
    %cst_42 = arith.constant 5.000000e-01 : f32
    %62 = vector.broadcast %cst_42 : f32 to vector<32x3xf32>
    %63 = arith.subf %56, %62 : vector<32x3xf32>
    %64 = arith.select %58, %61, %63 : vector<32x3xi1>, vector<32x3xf32>
    %65 = vector.shape_cast %64 : vector<32x3xf32> to vector<1x32x3xf32>
    %cst_43 = arith.constant dense<0.000000e+00> : vector<1xf32>
    %66 = vector.multi_reduction <add>, %65, %cst_43 [1, 2] : vector<1x32x3xf32> to vector<1xf32>
    %67 = vector.shape_cast %66 : vector<1xf32> to vector<1x1x1xf32>
    %68 = vector.extract %67[0, 0, 0] : f32 from vector<1x1x1xf32>
    %cst_44 = arith.constant 0.027777778 : f32
    %69 = arith.mulf %68, %cst_44 : f32
    %c0_45 = arith.constant 0 : index
    %c0_46 = arith.constant 0 : index
    %c0_47 = arith.constant 0 : index
    %70 = vector.load %arg16[%c0_45, %c0_46, %c0_47] : memref<1x16x3xf32, #tpu.memory_space<vmem>>, vector<1x16x3xf32>
    %71 = vector.shape_cast %70 : vector<1x16x3xf32> to vector<16x3xf32>
    %c0_48 = arith.constant 0 : index
    %c0_49 = arith.constant 0 : index
    %72 = vector.load %arg17[%c0_48, %c0_49] : memref<16x3xf32, #tpu.memory_space<vmem>>, vector<16x3xf32>
    %73 = arith.subf %71, %72 : vector<16x3xf32>
    %74 = math.absf %73 : vector<16x3xf32>
    %cst_50 = arith.constant 1.000000e+00 : f32
    %75 = vector.broadcast %cst_50 : f32 to vector<16x3xf32>
    %76 = arith.cmpf olt, %74, %75 : vector<16x3xf32>
    %cst_51 = arith.constant 5.000000e-01 : f32
    %77 = vector.broadcast %cst_51 : f32 to vector<16x3xf32>
    %78 = arith.mulf %77, %73 : vector<16x3xf32>
    %79 = arith.mulf %78, %73 : vector<16x3xf32>
    %cst_52 = arith.constant 5.000000e-01 : f32
    %80 = vector.broadcast %cst_52 : f32 to vector<16x3xf32>
    %81 = arith.subf %74, %80 : vector<16x3xf32>
    %82 = arith.select %76, %79, %81 : vector<16x3xi1>, vector<16x3xf32>
    %83 = vector.shape_cast %82 : vector<16x3xf32> to vector<1x16x3xf32>
    %cst_53 = arith.constant dense<0.000000e+00> : vector<1xf32>
    %84 = vector.multi_reduction <add>, %83, %cst_53 [1, 2] : vector<1x16x3xf32> to vector<1xf32>
    %85 = vector.shape_cast %84 : vector<1xf32> to vector<1x1x1xf32>
    %86 = vector.extract %85[0, 0, 0] : f32 from vector<1x1x1xf32>
    %cst_54 = arith.constant 0.027777778 : f32
    %87 = arith.mulf %86, %cst_54 : f32
    %88 = tpu.iota {dimensions = array<i32: 1>} : vector<1x128xi32>
    %c0_i32_55 = arith.constant 0 : i32
    %89 = vector.broadcast %c0_i32_55 : i32 to vector<1x128xi32>
    %90 = arith.cmpi eq, %88, %89 : vector<1x128xi32>
    %91 = arith.addf %69, %87 : f32
    %cst_56 = arith.constant 0.000000e+00 : f32
    %92 = vector.broadcast %91 : f32 to vector<1x128xf32>
    %93 = vector.broadcast %cst_56 : f32 to vector<1x128xf32>
    %94 = arith.select %90, %92, %93 : vector<1x128xi1>, vector<1x128xf32>
    %c1_i32 = arith.constant 1 : i32
    %95 = vector.broadcast %c1_i32 : i32 to vector<1x128xi32>
    %96 = arith.cmpi eq, %88, %95 : vector<1x128xi32>
    %cst_57 = arith.constant 0.000000e+00 : f32
    %97 = vector.broadcast %48 : f32 to vector<1x128xf32>
    %98 = vector.broadcast %cst_57 : f32 to vector<1x128xf32>
    %99 = arith.select %96, %97, %98 : vector<1x128xi1>, vector<1x128xf32>
    %100 = arith.addf %94, %99 : vector<1x128xf32>
    %c0_58 = arith.constant 0 : index
    %c0_59 = arith.constant 0 : index
    %101 = vector.load %arg18[%c0_58, %c0_59] : memref<1x128xf32, #tpu.memory_space<vmem>>, vector<1x128xf32>
    %102 = arith.addf %101, %100 : vector<1x128xf32>
    %c0_60 = arith.constant 0 : index
    %c0_61 = arith.constant 0 : index
    %103 = vector.load %arg18[%c0_60, %c0_61] : memref<1x128xf32, #tpu.memory_space<vmem>>, vector<1x128xf32>
    tpu.vector_store %arg18[%c0_60, %c0_61], %102 {strides = array<i32>} : memref<1x128xf32, #tpu.memory_space<vmem>>, vector<1x128xf32>,
    return
  }
  func.func @transform_0(%arg0: i32) -> (i32, i32) {
    %c0_i32 = arith.constant 0 : i32
    %c0_i32_0 = arith.constant 0 : i32
    %c0_i32_1 = arith.constant 0 : i32
    return %c0_i32, %c0_i32_0 : i32, i32
  }
  func.func @transform_1(%arg0: i32) -> (i32, i32) {
    %c0_i32 = arith.constant 0 : i32
    %c0_i32_0 = arith.constant 0 : i32
    %c0_i32_1 = arith.constant 0 : i32
    return %c0_i32, %c0_i32_0 : i32, i32
  }
  func.func @transform_2(%arg0: i32) -> (i32, i32) {
    %c0_i32 = arith.constant 0 : i32
    %c0_i32_0 = arith.constant 0 : i32
    %c0_i32_1 = arith.constant 0 : i32
    return %c0_i32, %c0_i32_0 : i32, i32
  }
  func.func @transform_3(%arg0: i32) -> (i32, i32) {
    %c0_i32 = arith.constant 0 : i32
    %c0_i32_0 = arith.constant 0 : i32
    %c0_i32_1 = arith.constant 0 : i32
    return %c0_i32, %c0_i32_0 : i32, i32
  }
  func.func @transform_4(%arg0: i32) -> (i32, i32) {
    %c0_i32 = arith.constant 0 : i32
    %c0_i32_0 = arith.constant 0 : i32
    %c0_i32_1 = arith.constant 0 : i32
    return %c0_i32, %c0_i32_0 : i32, i32
  }
  func.func @transform_5(%arg0: i32) -> (i32, i32) {
    %c0_i32 = arith.constant 0 : i32
    %c0_i32_0 = arith.constant 0 : i32
    %c0_i32_1 = arith.constant 0 : i32
    return %c0_i32, %c0_i32_0 : i32, i32
  }
  func.func @transform_6(%arg0: i32) -> (i32, i32) {
    %c0_i32 = arith.constant 0 : i32
    %c0_i32_0 = arith.constant 0 : i32
    %c0_i32_1 = arith.constant 0 : i32
    return %c0_i32, %c0_i32_0 : i32, i32
  }
  func.func @transform_7(%arg0: i32) -> (i32, i32) {
    %c0_i32 = arith.constant 0 : i32
    %c0_i32_0 = arith.constant 0 : i32
    %c0_i32_1 = arith.constant 0 : i32
    return %c0_i32, %c0_i32_0 : i32, i32
  }
  func.func @transform_8(%arg0: i32) -> (i32, i32) {
    %c0_i32 = arith.constant 0 : i32
    %c0_i32_0 = arith.constant 0 : i32
    %c0_i32_1 = arith.constant 0 : i32
    return %c0_i32, %c0_i32_0 : i32, i32
  }
  func.func @transform_9(%arg0: i32) -> (i32, i32) {
    %c0_i32 = arith.constant 0 : i32
    %c0_i32_0 = arith.constant 0 : i32
    %c0_i32_1 = arith.constant 0 : i32
    return %c0_i32, %c0_i32_0 : i32, i32
  }
  func.func @transform_10(%arg0: i32) -> (i32, i32) {
    %c0_i32 = arith.constant 0 : i32
    %c0_i32_0 = arith.constant 0 : i32
    %c0_i32_1 = arith.constant 0 : i32
    return %c0_i32, %c0_i32_0 : i32, i32
  }
  func.func @transform_11(%arg0: i32) -> (i32, i32) {
    %c0_i32 = arith.constant 0 : i32
    %c0_i32_0 = arith.constant 0 : i32
    %c0_i32_1 = arith.constant 0 : i32
    return %c0_i32, %c0_i32_0 : i32, i32
  }
  func.func @transform_12(%arg0: i32) -> (i32, i32) {
    %c0_i32 = arith.constant 0 : i32
    %c0_i32_0 = arith.constant 0 : i32
    %c0_i32_1 = arith.constant 0 : i32
    return %c0_i32, %c0_i32_0 : i32, i32
  }
  func.func @transform_13(%arg0: i32) -> (i32, i32, i32) {
    %c0_i32 = arith.constant 0 : i32
    %c0_i32_0 = arith.constant 0 : i32
    %c0_i32_1 = arith.constant 0 : i32
    return %arg0, %c0_i32, %c0_i32_0 : i32, i32, i32
  }
  func.func @transform_14(%arg0: i32) -> (i32, i32) {
    %c0_i32 = arith.constant 0 : i32
    %c0_i32_0 = arith.constant 0 : i32
    %c0_i32_1 = arith.constant 0 : i32
    return %c0_i32, %c0_i32_0 : i32, i32
  }
  func.func @transform_15(%arg0: i32) -> (i32, i32, i32) {
    %c0_i32 = arith.constant 0 : i32
    %c0_i32_0 = arith.constant 0 : i32
    %c0_i32_1 = arith.constant 0 : i32
    return %arg0, %c0_i32, %c0_i32_0 : i32, i32, i32
  }
  func.func @transform_16(%arg0: i32) -> (i32, i32) {
    %c0_i32 = arith.constant 0 : i32
    %c0_i32_0 = arith.constant 0 : i32
    %c0_i32_1 = arith.constant 0 : i32
    return %c0_i32, %c0_i32_0 : i32, i32
  }
  func.func @transform_17(%arg0: i32) -> (i32, i32) {
    %c0_i32 = arith.constant 0 : i32
    %c0_i32_0 = arith.constant 0 : i32
    %c0_i32_1 = arith.constant 0 : i32
    return %c0_i32, %c0_i32_0 : i32, i32
  }
}

</mosaic_0001>

<llo_original>
// kernel: _forward_jit.7
$region0: #{_forward_jit.7}
  #allocation0 [shape = 'u32[]', space=smem, size = 0x4, offset = 0x4, fixed_abs, tag = 'smem constant byte address 0x4 - core index']
  #allocation1 [shape = 'u32[144,128]{1,0:T(1,128)}', space=vmem, size = 0x12000, scoped, tag = 'internal scratch']
  %s0 = inlined_call_operand.vmem [shape: f32[16,128], index: 0, kind: input, shape index: {}]
  %s1 = inlined_call_operand.vmem [shape: bf16[128,128], index: 1, kind: input, shape index: {}]
  %s2 = inlined_call_operand.vmem [shape: f32[1,128], index: 2, kind: input, shape index: {}]
  %s3 = inlined_call_operand.hbm [shape: f32[16,128], index: 3, kind: output, shape index: {}]
  %s4 = sld [smem:[#allocation0]]
  $region22: #{_forward_jit.7} parent=0
    _
  %s6 = ssub.s32 1, %s4
  %s7 = scalar_select 0, %s6, %s4
  $region1: #{_forward_jit.7} parent=0
    #allocation2 [shape = 'u8[8192]{0}', space=vmem, size = 0x2000, scoped, tag = 'output window, operand 0, single buffered']
    #allocation3 [shape = 's32[1]{0}', space=sflag, size = 0x4, scoped, tag = 'scoped memory for _forward_jit.7']
    %8 = vsyncpa [#allocation3], 0
    // Predicated region
    $region2: #{_forward_jit.7} parent=1 // pred_check
      _
    $region3: #{_forward_jit.7} parent=1 // pred_check_branch
      %10 = sbr.rel (0) target = $region5
    $region4: #{_forward_jit.7} parent=1 // pred_region
      _
    $region5: #{_forward_jit.7} parent=1 // pred_fallthru
      _
    // Predicated region
    $region6: #{_forward_jit.7} parent=1 // pred_check
      _
    $region7: #{_forward_jit.7} parent=1 // pred_check_branch
      %12 = sbr.rel (0) target = $region9
    $region8: #{_forward_jit.7} parent=1 // pred_region
      _
    $region9: #{_forward_jit.7} parent=1 // pred_fallthru
      _
    // Predicated region
    $region10: #{_forward_jit.7} parent=1 // pred_check
      _
    $region11: #{_forward_jit.7} parent=1 // pred_check_branch
      %14 = sbr.rel (0) target = $region13
    $region12: #{_forward_jit.7} parent=1 // pred_region
      _
    $region13: #{_forward_jit.7} parent=1 // pred_fallthru
      _
    %v16 = vld [vmem:[%s0] sm:$0xff]
    %v17 = vld [vmem:[%s0 + $0x8] sm:$0xff]
    %v18 = vpack.c.bf16 %v17, %v16
    %v19 = vld [vmem:[%s1] sm:$0xf]
    %v20 = vld [vmem:[%s1 + $0x4] sm:$0xf]
    %v21 = vld [vmem:[%s1 + $0x8] sm:$0xf]
    %v22 = vld [vmem:[%s1 + $0xc] sm:$0xf]
    %v23 = vld [vmem:[%s1 + $0x10] sm:$0xf]
    %v24 = vld [vmem:[%s1 + $0x14] sm:$0xf]
    %v25 = vld [vmem:[%s1 + $0x18] sm:$0xf]
    %v26 = vld [vmem:[%s1 + $0x1c] sm:$0xf]
    %v27 = vld [vmem:[%s1 + $0x20] sm:$0xf]
    %v28 = vld [vmem:[%s1 + $0x24] sm:$0xf]
    %v29 = vld [vmem:[%s1 + $0x28] sm:$0xf]
    %v30 = vld [vmem:[%s1 + $0x2c] sm:$0xf]
    %v31 = vld [vmem:[%s1 + $0x30] sm:$0xf]
    %v32 = vld [vmem:[%s1 + $0x34] sm:$0xf]
    %v33 = vld [vmem:[%s1 + $0x38] sm:$0xf]
    %v34 = vld [vmem:[%s1 + $0x3c] sm:$0xf]
    %v35 = vld [vmem:[%s2] sm:$0x1]
    %v37 = vlaneseq
    %v38 = vshrl.u32 %v37, 7
    %v39 = vsub.s32 0, %v38
    %v40 = vrot.slane %v35, %v39
    %v58 = vunpack.c.l.b16 %v19
    %v59 = vunpack.c.l.b16 %v20
    %v60 = vunpack.c.l.b16 %v21
    %v61 = vunpack.c.l.b16 %v22
    %v62 = vunpack.c.l.b16 %v23
    %v63 = vunpack.c.l.b16 %v24
    %v64 = vunpack.c.l.b16 %v25
    %v65 = vunpack.c.l.b16 %v26
    %v66 = vunpack.c.l.b16 %v27
    %v67 = vunpack.c.l.b16 %v28
    %v68 = vunpack.c.l.b16 %v29
    %v69 = vunpack.c.l.b16 %v30
    %v70 = vunpack.c.l.b16 %v31
    %v71 = vunpack.c.l.b16 %v32
    %v72 = vunpack.c.l.b16 %v33
    %v73 = vunpack.c.l.b16 %v34
    %v74 = vpack.c.b16 %v59, %v58
    %v75 = vpack.c.b16 %v61, %v60
    %v76 = vpack.c.b16 %v63, %v62
    %v77 = vpack.c.b16 %v65, %v64
    %v78 = vpack.c.b16 %v67, %v66
    %v79 = vpack.c.b16 %v69, %v68
    %v80 = vpack.c.b16 %v71, %v70
    %v81 = vpack.c.b16 %v73, %v72
    %90 = vmatprep.subr.bf16.mxu0 0
    %91 = vmatpush1.bf16.msra.mxu0 %v74
    %92 = vmatprep.subr.bf16.mxu0 0
    %93 = vmatpush1.bf16.msra.mxu0 %v75
    %94 = vmatprep.subr.bf16.mxu0 0
    %95 = vmatpush1.bf16.msra.mxu0 %v76
    %96 = vmatprep.subr.bf16.mxu0 0
    %97 = vmatpush1.bf16.msra.mxu0 %v77
    %98 = vmatprep.subr.bf16.mxu0 0
    %99 = vmatpush1.bf16.msra.mxu0 %v78
    %100 = vmatprep.subr.bf16.mxu0 0
    %101 = vmatpush1.bf16.msra.mxu0 %v79
    %102 = vmatprep.subr.bf16.mxu0 0
    %103 = vmatpush1.bf16.msra.mxu0 %v80
    %104 = vmatprep.subr.bf16.mxu0 0
    %105 = vmatpush1.bf16.msra.mxu0 %v81
    %106 = vmatprep.subr.bf16.mxu0 0
    %107 = vmatpush1.bf16.msra.mxu0 0
    %108 = vmatprep.subr.bf16.mxu0 0
    %109 = vmatpush1.bf16.msra.mxu0 0
    %110 = vmatprep.subr.bf16.mxu0 0
    %111 = vmatpush1.bf16.msra.mxu0 0
    %112 = vmatprep.subr.bf16.mxu0 0
    %113 = vmatpush1.bf16.msra.mxu0 0
    %114 = vmatprep.subr.bf16.mxu0 0
    %115 = vmatpush1.bf16.msra.mxu0 0
    %116 = vmatprep.subr.bf16.mxu0 0
    %117 = vmatpush1.bf16.msra.mxu0 0
    %118 = vmatprep.subr.bf16.mxu0 0
    %119 = vmatpush1.bf16.msra.mxu0 0
    %120 = vmatprep.subr.bf16.mxu0 0
    %121 = vmatpush1.bf16.msra.mxu0 0
    %122 = vmatprep.mubr.bf16.mxu0 0
    %123 = vmatmul.mubr.bf16.gmra.mrb[0].mxu0 %v18
    %v124 = vpop.f32.mrb[0].mxu0
    %v125 = vadd.f32 %v40, %v124
    %v126 = vpop.f32.mrb[0].mxu0
    %v127 = vpop.f32.mrb[0].mxu0
    %v128 = vadd.f32 %v40, %v127
    %v129 = vpop.f32.mrb[0].mxu0
    %130 = vdwg.mxu0
    %131 = vst [vmem:[#allocation2] sm:$0xff] %v125
    %132 = vst [vmem:[#allocation2 + $0x8] sm:$0xff] %v128
    // Predicated region
    $region14: #{_forward_jit.7} parent=1 // pred_check
      _
    $region15: #{_forward_jit.7} parent=1 // pred_check_branch
      %134 = sbr.rel (0) target = $region17
    $region16: #{_forward_jit.7} parent=1 // pred_region
      %s136 = ssub.s32 256, 256
      %137 = vsyncadd [#allocation3], %s136
      %s138 = sshll.u32 [#allocation2], 4
      %s139 = int_to_ptr.vmem [resolvable:$true] %s138
      %144 = dma.vmem_to_hbm [thread:$0]  %s139, 256, %s3, [#allocation3], 128, 128, 8
    $region17: #{_forward_jit.7} parent=1 // pred_fallthru
      _
    // Predicated region
    $region18: #{_forward_jit.7} parent=1 // pred_check
      _
    $region19: #{_forward_jit.7} parent=1 // pred_check_branch
      %146 = sbr.rel (0) target = $region21
    $region20: #{_forward_jit.7} parent=1 // pred_region
      %147 = dma.done [#allocation3], 256
    $region21: #{_forward_jit.7} parent=1 // pred_fallthru
      _
    %148 = vsyncpa [#allocation3], 1

// kernel: _forward_jit.6
$region0: #{_forward_jit.6}
  #allocation0 [shape = 'u32[]', space=smem, size = 0x4, offset = 0x4, fixed_abs, tag = 'smem constant byte address 0x4 - core index']
  #allocation1 [shape = 'u32[144,128]{1,0:T(1,128)}', space=vmem, size = 0x12000, scoped, tag = 'internal scratch']
  #allocation2 [shape = 'f32[8,128]{1,0:T(8,128)}', space=vmem, size = 0x1000, scoped, tag = 'scratch operand']
  %s0 = inlined_call_operand.vmem [shape: f32[72,128], index: 0, kind: input, shape index: {}]
  %s1 = inlined_call_operand.vmem [shape: f32[72,8], index: 1, kind: input, shape index: {}]
  %s2 = inlined_call_operand.vmem [shape: bf16[128,128], index: 2, kind: input, shape index: {}]
  %s3 = inlined_call_operand.vmem [shape: f32[1,128], index: 3, kind: input, shape index: {}]
  %s4 = inlined_call_operand.vmem [shape: f32[8,72], index: 4, kind: input, shape index: {}]
  %s5 = inlined_call_operand.vmem [shape: f32[8,1], index: 5, kind: input, shape index: {}]
  %s6 = inlined_call_operand.vmem [shape: bf16[128,128], index: 6, kind: input, shape index: {}]
  %s7 = inlined_call_operand.vmem [shape: f32[1,128], index: 7, kind: input, shape index: {}]
  %s8 = inlined_call_operand.vmem [shape: f32[8,128], index: 8, kind: input, shape index: {}]
  %s9 = inlined_call_operand.vmem [shape: f32[8,128], index: 9, kind: input, shape index: {}]
  %s10 = inlined_call_operand.vmem [shape: f32[1,128], index: 10, kind: input, shape index: {}]
  %s11 = inlined_call_operand.vmem [shape: f32[8,1], index: 11, kind: input, shape index: {}]
  %s12 = inlined_call_operand.vmem [shape: f32[72,1], index: 12, kind: input, shape index: {}]
  %s13 = inlined_call_operand.vmem [shape: f32[5,72,3], index: 13, kind: input, shape index: {}]
  %s14 = inlined_call_operand.vmem [shape: f32[72,3], index: 14, kind: input, shape index: {}]
  %s15 = inlined_call_operand.vmem [shape: f32[5,16,3], index: 15, kind: input, shape index: {}]
  %s16 = inlined_call_operand.vmem [shape: f32[16,3], index: 16, kind: input, shape index: {}]
  %s17 = inlined_call_operand.vmem [shape: f32[1,128], index: 17, kind: output, shape index: {}]
  %s18 = sld [smem:[#allocation0]]
  $region105: #{_forward_jit.6} parent=0
    _
  %s20 = ssub.s32 1, %s18
  %s21 = scalar_select 0, %s20, %s18
  loop: start=0, step=1, limit=7
  $region2: #{_forward_jit.6} parent=0 // loop_pre_header
    _
  $region3: #{_forward_jit.6} parent=0 // loop_header
    %s23 = sphi 0, %s27
    %p24 = scmp.ge.s32.totalorder %s23, 7
    %s31 = sphi 0, %s31
    %s33 = sphi 0, %s31
    %s34 = sphi 0, %s33
    %s48 = sphi 0, %s34
    %s52 = sphi 0, %s52
    %s54 = sphi 0, %s52
    %s55 = sphi 0, %s54
    %s69 = sphi 0, %s55
    %s73 = sphi 0, %s73
    %s75 = sphi 0, %s73
    %s76 = sphi 0, %s75
    %s90 = sphi 0, %s76
    %s94 = sphi 0, %s94
    %s96 = sphi 0, %s94
    %s97 = sphi 0, %s96
    %s111 = sphi 0, %s97
    %s115 = sphi 0, %s115
    %s117 = sphi 0, %s115
    %s118 = sphi 0, %s117
    %s132 = sphi 0, %s118
    %s136 = sphi 0, %s136
    %s138 = sphi 0, %s136
    %s139 = sphi 0, %s138
    %s153 = sphi 0, %s139
    %s157 = sphi 0, %s157
    %s159 = sphi 0, %s157
    %s160 = sphi 0, %s159
    %s174 = sphi 0, %s160
    %s178 = sphi 0, %s178
    %s180 = sphi 0, %s178
    %s181 = sphi 0, %s180
    %s195 = sphi 0, %s181
    %s199 = sphi 0, %s199
    %s201 = sphi 0, %s199
    %s202 = sphi 0, %s201
    %s216 = sphi 0, %s202
    %s220 = sphi 0, %s220
    %s222 = sphi 0, %s220
    %s223 = sphi 0, %s222
    %s237 = sphi 0, %s223
    %s241 = sphi 0, %s241
    %s243 = sphi 0, %s241
    %s244 = sphi 0, %s243
    %s258 = sphi 0, %s244
    %s262 = sphi 0, %s262
    %s264 = sphi 0, %s262
    %s265 = sphi 0, %s264
    %s279 = sphi 0, %s265
    %s283 = sphi 0, %s283
    %s285 = sphi 0, %s283
    %s286 = sphi 0, %s285
    %s300 = sphi 0, %s286
    %s306 = sphi 0, %s308
    %s309 = sphi 0, %s306
    %s310 = sphi 0, %s309
    %s326 = sphi 0, %s310
    %s330 = sphi 0, %s330
    %s332 = sphi 0, %s330
    %s333 = sphi 0, %s332
    %s347 = sphi 0, %s333
    %s353 = sphi 0, %s355
    %s356 = sphi 0, %s353
    %s357 = sphi 0, %s356
    %s373 = sphi 0, %s357
    %s377 = sphi 0, %s377
    %s379 = sphi 0, %s377
    %s380 = sphi 0, %s379
    %s394 = sphi 0, %s380
    %s398 = sphi 0, %s398
    %s400 = sphi 0, %s398
    %s401 = sphi 0, %s400
    %s415 = sphi 0, %s401
  $region4: #{_forward_jit.6} parent=0 // loop_header_branch
    %26 = sbr.rel (%p24) target = $region8
  $region5: #{_forward_jit.6} parent=0 // loop_body
    %s28 = ssub.s32 %s23, 1
    %s29 = ssub.s32 %s23, 2
    %s30 = sadd.s32 %s23, 1
    %s32 = sadd.s32 %s31, 1
    %p35 = scmp.eq.s32.totalorder %s23, 4
    %p36 = scmp.ne.s32.totalorder %s31, %s33
    %p37 = scmp.eq.s32.totalorder %s23, 0
    %p38 = por %p36, %p37
    %p39 = scmp.ne.s32.totalorder %s31, %s33
    %p40 = scmp.eq.s32.totalorder %s28, 4
    %p41 = por %p39, %p40
    %p42 = scmp.ne.s32.totalorder %s33, %s34
    %p43 = scmp.eq.s32.totalorder %s28, 0
    %p44 = por %p42, %p43
    %p45 = scmp.ne.s32.totalorder %s33, %s34
    %p46 = scmp.eq.s32.totalorder %s29, 4
    %p47 = por %p45, %p46
    %p49 = scmp.ne.s32.totalorder %s34, %s48
    %p50 = scmp.eq.s32.totalorder %s29, 0
    %p51 = por %p49, %p50
    %s53 = sadd.s32 %s52, 1
    %p56 = scmp.eq.s32.totalorder %s23, 4
    %p57 = scmp.ne.s32.totalorder %s52, %s54
    %p58 = scmp.eq.s32.totalorder %s23, 0
    %p59 = por %p57, %p58
    %p60 = scmp.ne.s32.totalorder %s52, %s54
    %p61 = scmp.eq.s32.totalorder %s28, 4
    %p62 = por %p60, %p61
    %p63 = scmp.ne.s32.totalorder %s54, %s55
    %p64 = scmp.eq.s32.totalorder %s28, 0
    %p65 = por %p63, %p64
    %p66 = scmp.ne.s32.totalorder %s54, %s55
    %p67 = scmp.eq.s32.totalorder %s29, 4
    %p68 = por %p66, %p67
    %p70 = scmp.ne.s32.totalorder %s55, %s69
    %p71 = scmp.eq.s32.totalorder %s29, 0
    %p72 = por %p70, %p71
    %s74 = sadd.s32 %s73, 1
    %p77 = scmp.eq.s32.totalorder %s23, 4
    %p78 = scmp.ne.s32.totalorder %s73, %s75
    %p79 = scmp.eq.s32.totalorder %s23, 0
    %p80 = por %p78, %p79
    %p81 = scmp.ne.s32.totalorder %s73, %s75
    %p82 = scmp.eq.s32.totalorder %s28, 4
    %p83 = por %p81, %p82
    %p84 = scmp.ne.s32.totalorder %s75, %s76
    %p85 = scmp.eq.s32.totalorder %s28, 0
    %p86 = por %p84, %p85
    %p87 = scmp.ne.s32.totalorder %s75, %s76
    %p88 = scmp.eq.s32.totalorder %s29, 4
    %p89 = por %p87, %p88
    %p91 = scmp.ne.s32.totalorder %s76, %s90
    %p92 = scmp.eq.s32.totalorder %s29, 0
    %p93 = por %p91, %p92
    %s95 = sadd.s32 %s94, 1
    %p98 = scmp.eq.s32.totalorder %s23, 4
    %p99 = scmp.ne.s32.totalorder %s94, %s96
    %p100 = scmp.eq.s32.totalorder %s23, 0
    %p101 = por %p99, %p100
    %p102 = scmp.ne.s32.totalorder %s94, %s96
    %p103 = scmp.eq.s32.totalorder %s28, 4
    %p104 = por %p102, %p103
    %p105 = scmp.ne.s32.totalorder %s96, %s97
    %p106 = scmp.eq.s32.totalorder %s28, 0
    %p107 = por %p105, %p106
    %p108 = scmp.ne.s32.totalorder %s96, %s97
    %p109 = scmp.eq.s32.totalorder %s29, 4
    %p110 = por %p108, %p109
    %p112 = scmp.ne.s32.totalorder %s97, %s111
    %p113 = scmp.eq.s32.totalorder %s29, 0
    %p114 = por %p112, %p113
    %s116 = sadd.s32 %s115, 1
    %p119 = scmp.eq.s32.totalorder %s23, 4
    %p120 = scmp.ne.s32.totalorder %s115, %s117
    %p121 = scmp.eq.s32.totalorder %s23, 0
    %p122 = por %p120, %p121
    %p123 = scmp.ne.s32.totalorder %s115, %s117
    %p124 = scmp.eq.s32.totalorder %s28, 4
    %p125 = por %p123, %p124
    %p126 = scmp.ne.s32.totalorder %s117, %s118
    %p127 = scmp.eq.s32.totalorder %s28, 0
    %p128 = por %p126, %p127
    %p129 = scmp.ne.s32.totalorder %s117, %s118
    %p130 = scmp.eq.s32.totalorder %s29, 4
    %p131 = por %p129, %p130
    %p133 = scmp.ne.s32.totalorder %s118, %s132
    %p134 = scmp.eq.s32.totalorder %s29, 0
    %p135 = por %p133, %p134
    %s137 = sadd.s32 %s136, 1
    %p140 = scmp.eq.s32.totalorder %s23, 4
    %p141 = scmp.ne.s32.totalorder %s136, %s138
    %p142 = scmp.eq.s32.totalorder %s23, 0
    %p143 = por %p141, %p142
    %p144 = scmp.ne.s32.totalorder %s136, %s138
    %p145 = scmp.eq.s32.totalorder %s28, 4
    %p146 = por %p144, %p145
    %p147 = scmp.ne.s32.totalorder %s138, %s139
    %p148 = scmp.eq.s32.totalorder %s28, 0
    %p149 = por %p147, %p148
    %p150 = scmp.ne.s32.totalorder %s138, %s139
    %p151 = scmp.eq.s32.totalorder %s29, 4
    %p152 = por %p150, %p151
    %p154 = scmp.ne.s32.totalorder %s139, %s153
    %p155 = scmp.eq.s32.totalorder %s29, 0
    %p156 = por %p154, %p155
    %s158 = sadd.s32 %s157, 1
    %p161 = scmp.eq.s32.totalorder %s23, 4
    %p162 = scmp.ne.s32.totalorder %s157, %s159
    %p163 = scmp.eq.s32.totalorder %s23, 0
    %p164 = por %p162, %p163
    %p165 = scmp.ne.s32.totalorder %s157, %s159
    %p166 = scmp.eq.s32.totalorder %s28, 4
    %p167 = por %p165, %p166
    %p168 = scmp.ne.s32.totalorder %s159, %s160
    %p169 = scmp.eq.s32.totalorder %s28, 0
    %p170 = por %p168, %p169
    %p171 = scmp.ne.s32.totalorder %s159, %s160
    %p172 = scmp.eq.s32.totalorder %s29, 4
    %p173 = por %p171, %p172
    %p175 = scmp.ne.s32.totalorder %s160, %s174
    %p176 = scmp.eq.s32.totalorder %s29, 0
    %p177 = por %p175, %p176
    %s179 = sadd.s32 %s178, 1
    %p182 = scmp.eq.s32.totalorder %s23, 4
    %p183 = scmp.ne.s32.totalorder %s178, %s180
    %p184 = scmp.eq.s32.totalorder %s23, 0
    %p185 = por %p183, %p184
    %p186 = scmp.ne.s32.totalorder %s178, %s180
    %p187 = scmp.eq.s32.totalorder %s28, 4
    %p188 = por %p186, %p187
    %p189 = scmp.ne.s32.totalorder %s180, %s181
    %p190 = scmp.eq.s32.totalorder %s28, 0
    %p191 = por %p189, %p190
    %p192 = scmp.ne.s32.totalorder %s180, %s181
    %p193 = scmp.eq.s32.totalorder %s29, 4
    %p194 = por %p192, %p193
    %p196 = scmp.ne.s32.totalorder %s181, %s195
    %p197 = scmp.eq.s32.totalorder %s29, 0
    %p198 = por %p196, %p197
    %s200 = sadd.s32 %s199, 1
    %p203 = scmp.eq.s32.totalorder %s23, 4
    %p204 = scmp.ne.s32.totalorder %s199, %s201
    %p205 = scmp.eq.s32.totalorder %s23, 0
    %p206 = por %p204, %p205
    %p207 = scmp.ne.s32.totalorder %s199, %s201
    %p208 = scmp.eq.s32.totalorder %s28, 4
    %p209 = por %p207, %p208
    %p210 = scmp.ne.s32.totalorder %s201, %s202
    %p211 = scmp.eq.s32.totalorder %s28, 0
    %p212 = por %p210, %p211
    %p213 = scmp.ne.s32.totalorder %s201, %s202
    %p214 = scmp.eq.s32.totalorder %s29, 4
    %p215 = por %p213, %p214
    %p217 = scmp.ne.s32.totalorder %s202, %s216
    %p218 = scmp.eq.s32.totalorder %s29, 0
    %p219 = por %p217, %p218
    %s221 = sadd.s32 %s220, 1
    %p224 = scmp.eq.s32.totalorder %s23, 4
    %p225 = scmp.ne.s32.totalorder %s220, %s222
    %p226 = scmp.eq.s32.totalorder %s23, 0
    %p227 = por %p225, %p226
    %p228 = scmp.ne.s32.totalorder %s220, %s222
    %p229 = scmp.eq.s32.totalorder %s28, 4
    %p230 = por %p228, %p229
    %p231 = scmp.ne.s32.totalorder %s222, %s223
    %p232 = scmp.eq.s32.totalorder %s28, 0
    %p233 = por %p231, %p232
    %p234 = scmp.ne.s32.totalorder %s222, %s223
    %p235 = scmp.eq.s32.totalorder %s29, 4
    %p236 = por %p234, %p235
    %p238 = scmp.ne.s32.totalorder %s223, %s237
    %p239 = scmp.eq.s32.totalorder %s29, 0
    %p240 = por %p238, %p239
    %s242 = sadd.s32 %s241, 1
    %p245 = scmp.eq.s32.totalorder %s23, 4
    %p246 = scmp.ne.s32.totalorder %s241, %s243
    %p247 = scmp.eq.s32.totalorder %s23, 0
    %p248 = por %p246, %p247
    %p249 = scmp.ne.s32.totalorder %s241, %s243
    %p250 = scmp.eq.s32.totalorder %s28, 4
    %p251 = por %p249, %p250
    %p252 = scmp.ne.s32.totalorder %s243, %s244
    %p253 = scmp.eq.s32.totalorder %s28, 0
    %p254 = por %p252, %p253
    %p255 = scmp.ne.s32.totalorder %s243, %s244
    %p256 = scmp.eq.s32.totalorder %s29, 4
    %p257 = por %p255, %p256
    %p259 = scmp.ne.s32.totalorder %s244, %s258
    %p260 = scmp.eq.s32.totalorder %s29, 0
    %p261 = por %p259, %p260
    %s263 = sadd.s32 %s262, 1
    %p266 = scmp.eq.s32.totalorder %s23, 4
    %p267 = scmp.ne.s32.totalorder %s262, %s264
    %p268 = scmp.eq.s32.totalorder %s23, 0
    %p269 = por %p267, %p268
    %p270 = scmp.ne.s32.totalorder %s262, %s264
    %p271 = scmp.eq.s32.totalorder %s28, 4
    %p272 = por %p270, %p271
    %p273 = scmp.ne.s32.totalorder %s264, %s265
    %p274 = scmp.eq.s32.totalorder %s28, 0
    %p275 = por %p273, %p274
    %p276 = scmp.ne.s32.totalorder %s264, %s265
    %p277 = scmp.eq.s32.totalorder %s29, 4
    %p278 = por %p276, %p277
    %p280 = scmp.ne.s32.totalorder %s265, %s279
    %p281 = scmp.eq.s32.totalorder %s29, 0
    %p282 = por %p280, %p281
    %s284 = sadd.s32 %s283, 1
    %p287 = scmp.eq.s32.totalorder %s23, 4
    %p288 = scmp.ne.s32.totalorder %s283, %s285
    %p289 = scmp.eq.s32.totalorder %s23, 0
    %p290 = por %p288, %p289
    %p291 = scmp.ne.s32.totalorder %s283, %s285
    %p292 = scmp.eq.s32.totalorder %s28, 4
    %p293 = por %p291, %p292
    %p294 = scmp.ne.s32.totalorder %s285, %s286
    %p295 = scmp.eq.s32.totalorder %s28, 0
    %p296 = por %p294, %p295
    %p297 = scmp.ne.s32.totalorder %s285, %s286
    %p298 = scmp.eq.s32.totalorder %s29, 4
    %p299 = por %p297, %p298
    %p301 = scmp.ne.s32.totalorder %s286, %s300
    %p302 = scmp.eq.s32.totalorder %s29, 0
    %p303 = por %p301, %p302
    %s304 = ssub.s32 %s23, %s30
    %p305 = scmp.eq.s32.totalorder %s304, 0
    %s307 = sadd.s32 %s306, 1
    %s308 = scalar_select %p305, %s306, %s307
    %p311 = pneg %p305
    %p312 = scmp.eq.s32.totalorder %s23, 4
    %p313 = por %p311, %p312
    %p314 = scmp.ne.s32.totalorder %s306, %s309
    %p315 = scmp.eq.s32.totalorder %s23, 0
    %p316 = por %p314, %p315
    %p317 = scmp.ne.s32.totalorder %s306, %s309
    %p318 = scmp.eq.s32.totalorder %s28, 4
    %p319 = por %p317, %p318
    %p320 = scmp.ne.s32.totalorder %s309, %s310
    %p321 = scmp.eq.s32.totalorder %s28, 0
    %p322 = por %p320, %p321
    %p323 = scmp.ne.s32.totalorder %s309, %s310
    %p324 = scmp.eq.s32.totalorder %s29, 4
    %p325 = por %p323, %p324
    %p327 = scmp.ne.s32.totalorder %s310, %s326
    %p328 = scmp.eq.s32.totalorder %s29, 0
    %p329 = por %p327, %p328
    %s331 = sadd.s32 %s330, 1
    %p334 = scmp.eq.s32.totalorder %s23, 4
    %p335 = scmp.ne.s32.totalorder %s330, %s332
    %p336 = scmp.eq.s32.totalorder %s23, 0
    %p337 = por %p335, %p336
    %p338 = scmp.ne.s32.totalorder %s330, %s332
    %p339 = scmp.eq.s32.totalorder %s28, 4
    %p340 = por %p338, %p339
    %p341 = scmp.ne.s32.totalorder %s332, %s333
    %p342 = scmp.eq.s32.totalorder %s28, 0
    %p343 = por %p341, %p342
    %p344 = scmp.ne.s32.totalorder %s332, %s333
    %p345 = scmp.eq.s32.totalorder %s29, 4
    %p346 = por %p344, %p345
    %p348 = scmp.ne.s32.totalorder %s333, %s347
    %p349 = scmp.eq.s32.totalorder %s29, 0
    %p350 = por %p348, %p349
    %s351 = ssub.s32 %s23, %s30
    %p352 = scmp.eq.s32.totalorder %s351, 0
    %s354 = sadd.s32 %s353, 1
    %s355 = scalar_select %p352, %s353, %s354
    %p358 = pneg %p352
    %p359 = scmp.eq.s32.totalorder %s23, 4
    %p360 = por %p358, %p359
    %p361 = scmp.ne.s32.totalorder %s353, %s356
    %p362 = scmp.eq.s32.totalorder %s23, 0
    %p363 = por %p361, %p362
    %p364 = scmp.ne.s32.totalorder %s353, %s356
    %p365 = scmp.eq.s32.totalorder %s28, 4
    %p366 = por %p364, %p365
    %p367 = scmp.ne.s32.totalorder %s356, %s357
    %p368 = scmp.eq.s32.totalorder %s28, 0
    %p369 = por %p367, %p368
    %p370 = scmp.ne.s32.totalorder %s356, %s357
    %p371 = scmp.eq.s32.totalorder %s29, 4
    %p372 = por %p370, %p371
    %p374 = scmp.ne.s32.totalorder %s357, %s373
    %p375 = scmp.eq.s32.totalorder %s29, 0
    %p376 = por %p374, %p375
    %s378 = sadd.s32 %s377, 1
    %p381 = scmp.eq.s32.totalorder %s23, 4
    %p382 = scmp.ne.s32.totalorder %s377, %s379
    %p383 = scmp.eq.s32.totalorder %s23, 0
    %p384 = por %p382, %p383
    %p385 = scmp.ne.s32.totalorder %s377, %s379
    %p386 = scmp.eq.s32.totalorder %s28, 4
    %p387 = por %p385, %p386
    %p388 = scmp.ne.s32.totalorder %s379, %s380
    %p389 = scmp.eq.s32.totalorder %s28, 0
    %p390 = por %p388, %p389
    %p391 = scmp.ne.s32.totalorder %s379, %s380
    %p392 = scmp.eq.s32.totalorder %s29, 4
    %p393 = por %p391, %p392
    %p395 = scmp.ne.s32.totalorder %s380, %s394
    %p396 = scmp.eq.s32.totalorder %s29, 0
    %p397 = por %p395, %p396
    %s399 = sadd.s32 %s398, 1
    %p402 = scmp.eq.s32.totalorder %s23, 4
    %p403 = scmp.ne.s32.totalorder %s398, %s400
    %p404 = scmp.eq.s32.totalorder %s23, 0
    %p405 = por %p403, %p404
    %p406 = scmp.ne.s32.totalorder %s398, %s400
    %p407 = scmp.eq.s32.totalorder %s28, 4
    %p408 = por %p406, %p407
    %p409 = scmp.ne.s32.totalorder %s400, %s401
    %p410 = scmp.eq.s32.totalorder %s28, 0
    %p411 = por %p409, %p410
    %p412 = scmp.ne.s32.totalorder %s400, %s401
    %p413 = scmp.eq.s32.totalorder %s29, 4
    %p414 = por %p412, %p413
    %p416 = scmp.ne.s32.totalorder %s401, %s415
    %p417 = scmp.eq.s32.totalorder %s29, 0
    %p418 = por %p416, %p417
    %p419 = scmp.le.s32.totalorder 1, %s23
    %p420 = scmp.lt.s32.totalorder %s23, 6
    %p421 = pnand %p419, %p420
    %p422 = pneg %p421
    // Predicated region
    $region9: #{_forward_jit.6} parent=5 // pred_check
      _
    $region10: #{_forward_jit.6} parent=5 // pred_check_branch
      %424 = sbr.rel (%p421) target = $region12
    $region11: #{_forward_jit.6} parent=5 // pred_region
      %s425 = ssub.s32 %s23, 1
      // Predicated region
      $region13: #{_forward_jit.6} parent=11 // pred_check
        %p426 = pneg %p44
      $region14: #{_forward_jit.6} parent=11 // pred_check_branch
        %428 = sbr.rel (%p426) target = $region16
      $region15: #{_forward_jit.6} parent=11 // pred_region
        _
      $region16: #{_forward_jit.6} parent=11 // pred_fallthru
        _
      // Predicated region
      $region17: #{_forward_jit.6} parent=11 // pred_check
        %p429 = pneg %p65
      $region18: #{_forward_jit.6} parent=11 // pred_check_branch
        %431 = sbr.rel (%p429) target = $region20
      $region19: #{_forward_jit.6} parent=11 // pred_region
        _
      $region20: #{_forward_jit.6} parent=11 // pred_fallthru
        _
      // Predicated region
      $region21: #{_forward_jit.6} parent=11 // pred_check
        %p432 = pneg %p86
      $region22: #{_forward_jit.6} parent=11 // pred_check_branch
        %434 = sbr.rel (%p432) target = $region24
      $region23: #{_forward_jit.6} parent=11 // pred_region
        _
      $region24: #{_forward_jit.6} parent=11 // pred_fallthru
        _
      // Predicated region
      $region25: #{_forward_jit.6} parent=11 // pred_check
        %p435 = pneg %p107
      $region26: #{_forward_jit.6} parent=11 // pred_check_branch
        %437 = sbr.rel (%p435) target = $region28
      $region27: #{_forward_jit.6} parent=11 // pred_region
        _
      $region28: #{_forward_jit.6} parent=11 // pred_fallthru
        _
      // Predicated region
      $region29: #{_forward_jit.6} parent=11 // pred_check
        %p438 = pneg %p128
      $region30: #{_forward_jit.6} parent=11 // pred_check_branch
        %440 = sbr.rel (%p438) target = $region32
      $region31: #{_forward_jit.6} parent=11 // pred_region
        _
      $region32: #{_forward_jit.6} parent=11 // pred_fallthru
        _
      // Predicated region
      $region33: #{_forward_jit.6} parent=11 // pred_check
        %p441 = pneg %p149
      $region34: #{_forward_jit.6} parent=11 // pred_check_branch
        %443 = sbr.rel (%p441) target = $region36
      $region35: #{_forward_jit.6} parent=11 // pred_region
        _
      $region36: #{_forward_jit.6} parent=11 // pred_fallthru
        _
      // Predicated region
      $region37: #{_forward_jit.6} parent=11 // pred_check
        %p444 = pneg %p170
      $region38: #{_forward_jit.6} parent=11 // pred_check_branch
        %446 = sbr.rel (%p444) target = $region40
      $region39: #{_forward_jit.6} parent=11 // pred_region
        _
      $region40: #{_forward_jit.6} parent=11 // pred_fallthru
        _
      // Predicated region
      $region41: #{_forward_jit.6} parent=11 // pred_check
        %p447 = pneg %p191
      $region42: #{_forward_jit.6} parent=11 // pred_check_branch
        %449 = sbr.rel (%p447) target = $region44
      $region43: #{_forward_jit.6} parent=11 // pred_region
        _
      $region44: #{_forward_jit.6} parent=11 // pred_fallthru
        _
      // Predicated region
      $region45: #{_forward_jit.6} parent=11 // pred_check
        %p450 = pneg %p212
      $region46: #{_forward_jit.6} parent=11 // pred_check_branch
        %452 = sbr.rel (%p450) target = $region48
      $region47: #{_forward_jit.6} parent=11 // pred_region
        _
      $region48: #{_forward_jit.6} parent=11 // pred_fallthru
        _
      // Predicated region
      $region49: #{_forward_jit.6} parent=11 // pred_check
        %p453 = pneg %p233
      $region50: #{_forward_jit.6} parent=11 // pred_check_branch
        %455 = sbr.rel (%p453) target = $region52
      $region51: #{_forward_jit.6} parent=11 // pred_region
        _
      $region52: #{_forward_jit.6} parent=11 // pred_fallthru
        _
      // Predicated region
      $region53: #{_forward_jit.6} parent=11 // pred_check
        %p456 = pneg %p254
      $region54: #{_forward_jit.6} parent=11 // pred_check_branch
        %458 = sbr.rel (%p456) target = $region56
      $region55: #{_forward_jit.6} parent=11 // pred_region
        _
      $region56: #{_forward_jit.6} parent=11 // pred_fallthru
        _
      // Predicated region
      $region57: #{_forward_jit.6} parent=11 // pred_check
        %p459 = pneg %p275
      $region58: #{_forward_jit.6} parent=11 // pred_check_branch
        %461 = sbr.rel (%p459) target = $region60
      $region59: #{_forward_jit.6} parent=11 // pred_region
        _
      $region60: #{_forward_jit.6} parent=11 // pred_fallthru
        _
      // Predicated region
      $region61: #{_forward_jit.6} parent=11 // pred_check
        %p462 = pneg %p296
      $region62: #{_forward_jit.6} parent=11 // pred_check_branch
        %464 = sbr.rel (%p462) target = $region64
      $region63: #{_forward_jit.6} parent=11 // pred_region
        _
      $region64: #{_forward_jit.6} parent=11 // pred_fallthru
        _
      // Predicated region
      $region65: #{_forward_jit.6} parent=11 // pred_check
        %p465 = pneg %p343
      $region66: #{_forward_jit.6} parent=11 // pred_check_branch
        %467 = sbr.rel (%p465) target = $region68
      $region67: #{_forward_jit.6} parent=11 // pred_region
        _
      $region68: #{_forward_jit.6} parent=11 // pred_fallthru
        _
      // Predicated region
      $region69: #{_forward_jit.6} parent=11 // pred_check
        %p468 = pneg %p390
      $region70: #{_forward_jit.6} parent=11 // pred_check_branch
        %470 = sbr.rel (%p468) target = $region72
      $region71: #{_forward_jit.6} parent=11 // pred_region
        _
      $region72: #{_forward_jit.6} parent=11 // pred_fallthru
        _
    $region12: #{_forward_jit.6} parent=5 // pred_fallthru
      _
    %p471 = scmp.lt.s32.totalorder %s23, 5
    // Predicated region
    $region73: #{_forward_jit.6} parent=5 // pred_check
      %p472 = pneg %p471
    $region74: #{_forward_jit.6} parent=5 // pred_check_branch
      %474 = sbr.rel (%p472) target = $region76
    $region75: #{_forward_jit.6} parent=5 // pred_region
      // Predicated region
      $region77: #{_forward_jit.6} parent=75 // pred_check
        %p475 = pneg %p316
      $region78: #{_forward_jit.6} parent=75 // pred_check_branch
        %477 = sbr.rel (%p475) target = $region80
      $region79: #{_forward_jit.6} parent=75 // pred_region
        %p478 = scmp.lt.s32.totalorder %s23, 4
        %s479 = scalar_select %p478, %s23, 4
        %s480 = smul.addr %s479, 9
        %s481 = smul.addr %s480, 8
        %s482 = scalar_lea.vmem %s13, %s481
      $region80: #{_forward_jit.6} parent=75 // pred_fallthru
        _
      // Predicated region
      $region81: #{_forward_jit.6} parent=75 // pred_check
        %p483 = pneg %p363
      $region82: #{_forward_jit.6} parent=75 // pred_check_branch
        %485 = sbr.rel (%p483) target = $region84
      $region83: #{_forward_jit.6} parent=75 // pred_region
        %p486 = scmp.lt.s32.totalorder %s23, 4
        %s487 = scalar_select %p486, %s23, 4
        %s488 = smul.addr %s487, 2
        %s489 = smul.addr %s488, 8
        %s490 = scalar_lea.vmem %s15, %s489
      $region84: #{_forward_jit.6} parent=75 // pred_fallthru
        _
    $region76: #{_forward_jit.6} parent=5 // pred_fallthru
      _
    %p491 = scmp.le.s32.totalorder 1, %s23
    %p492 = scmp.lt.s32.totalorder %s23, 6
    %p493 = pnand %p491, %p492
    %p494 = pneg %p493
    // Predicated region
    $region85: #{_forward_jit.6} parent=5 // pred_check
      _
    $region86: #{_forward_jit.6} parent=5 // pred_check_branch
      %496 = sbr.rel (%p493) target = $region88
    $region87: #{_forward_jit.6} parent=5 // pred_region
      %s497 = ssub.s32 %s23, 1
      %p498 = pneg %p44
      %p499 = pneg %p41
      %p500 = pneg %p65
      %p501 = pneg %p62
      %p502 = pneg %p86
      %p503 = pneg %p83
      %p504 = pneg %p107
      %p505 = pneg %p104
      %p506 = pneg %p128
      %p507 = pneg %p125
      %p508 = pneg %p149
      %p509 = pneg %p146
      %p510 = pneg %p170
      %p511 = pneg %p167
      %p512 = pneg %p191
      %p513 = pneg %p188
      %p514 = pneg %p212
      %p515 = pneg %p209
      %p516 = pneg %p233
      %p517 = pneg %p230
      %p518 = pneg %p254
      %p519 = pneg %p251
      %p520 = pneg %p275
      %p521 = pneg %p272
      %p522 = pneg %p296
      %p523 = pneg %p293
      %p524 = scmp.lt.s32.totalorder %s28, 4
      %s525 = scalar_select %p524, %s28, 4
      %s526 = smul.addr %s525, 9
      %s527 = smul.addr %s526, 8
      %s528 = scalar_lea.vmem %s13, %s527
      %p529 = pneg %p322
      %p530 = pneg %p319
      %p531 = pneg %p343
      %p532 = pneg %p340
      %p533 = scmp.lt.s32.totalorder %s28, 4
      %s534 = scalar_select %p533, %s28, 4
      %s535 = smul.addr %s534, 2
      %s536 = smul.addr %s535, 8
      %s537 = scalar_lea.vmem %s15, %s536
      %p538 = pneg %p369
      %p539 = pneg %p366
      %p540 = pneg %p390
      %p541 = pneg %p387
      %p542 = pneg %p411
      %p543 = pneg %p408
      %p544 = scmp.lt.s32.totalorder %s28, 4
      %s545 = scalar_select %p544, %s28, 4
      %s546 = smul.addr %s545, 9
      %s547 = smul.addr %s546, 8
      %s548 = scalar_lea.vmem %s13, %s547
      %p549 = scmp.lt.s32.totalorder %s28, 4
      %s550 = scalar_select %p549, %s28, 4
      %s551 = smul.addr %s550, 2
      %s552 = smul.addr %s551, 8
      %s553 = scalar_lea.vmem %s15, %s552
      %p555 = scmp.eq.s32.totalorder %s28, 0
      // Predicated region
      $region89: #{_forward_jit.6} parent=87 // pred_check
        %p556 = pneg %p555
      $region90: #{_forward_jit.6} parent=87 // pred_check_branch
        %558 = sbr.rel (%p556) target = $region92
      $region91: #{_forward_jit.6} parent=87 // pred_region
        %v559 = vld [vmem:[%s8] sm:$0xff]
        %560 = vst [vmem:[#allocation2] sm:$0xff] %v559
        %561 = vst [vmem:[%s17] sm:$0x1] 0.0
      $region92: #{_forward_jit.6} parent=87 // pred_fallthru
        _
      %v562 = vld [vmem:[%s1] sm:$0xff]
      %v563 = vld [vmem:[%s1 + $0x8] sm:$0xff]
      %v564 = vld [vmem:[%s1 + $0x10] sm:$0xff]
      %v565 = vld [vmem:[%s1 + $0x18] sm:$0xff]
      %v566 = vld [vmem:[%s1 + $0x20] sm:$0xff]
      %v567 = vld [vmem:[%s1 + $0x28] sm:$0xff]
      %v568 = vld [vmem:[%s1 + $0x30] sm:$0xff]
      %v569 = vld [vmem:[%s1 + $0x38] sm:$0xff]
      %v570 = vld [vmem:[%s1 + $0x40] sm:$0xff]
      %v571 = vld [vmem:[#allocation2] sm:$0xff]
      %vm572 = vcmask 64512
      %v574 = vsel %vm572, %v562, 0
      %v577 = vsel %vm572, %v563, 0
      %v580 = vsel %vm572, %v564, 0
      %v583 = vsel %vm572, %v565, 0
      %v586 = vsel %vm572, %v566, 0
      %v589 = vsel %vm572, %v567, 0
      %v592 = vsel %vm572, %v568, 0
      %v595 = vsel %vm572, %v569, 0
      %v598 = vsel %vm572, %v570, 0
      %600 = vmatprep.subr.mxu0 0.0
      %601 = vmatpush1.msra.mxu0 %v571
      %602 = vmatprep.subr.mxu0 0.0
      %603 = vmatpush1.msra.mxu0 0.0
      %604 = vmatprep.subr.mxu0 0.0
      %605 = vmatpush1.msra.mxu0 0.0
      %606 = vmatprep.subr.mxu0 0.0
      %607 = vmatpush1.msra.mxu0 0.0
      %608 = vmatprep.subr.mxu0 0.0
      %609 = vmatpush1.msra.mxu0 0.0
      %610 = vmatprep.subr.mxu0 0.0
      %611 = vmatpush1.msra.mxu0 0.0
      %612 = vmatprep.subr.mxu0 0.0
      %613 = vmatpush1.msra.mxu0 0.0
      %614 = vmatprep.subr.mxu0 0.0
      %615 = vmatpush1.msra.mxu0 0.0
      %616 = vmatprep.subr.mxu0 0.0
      %617 = vmatpush1.msra.mxu0 0.0
      %618 = vmatprep.subr.mxu0 0.0
      %619 = vmatpush1.msra.mxu0 0.0
      %620 = vmatprep.subr.mxu0 0.0
      %621 = vmatpush1.msra.mxu0 0.0
      %622 = vmatprep.subr.mxu0 0.0
      %623 = vmatpush1.msra.mxu0 0.0
      %624 = vmatprep.subr.mxu0 0.0
      %625 = vmatpush1.msra.mxu0 0.0
      %626 = vmatprep.subr.mxu0 0.0
      %627 = vmatpush1.msra.mxu0 0.0
      %628 = vmatprep.subr.mxu0 0.0
      %629 = vmatpush1.msra.mxu0 0.0
      %630 = vmatprep.subr.mxu0 0.0
      %631 = vmatpush1.msra.mxu0 0.0
      %632 = vmatprep.subr.mxu0 0.0
      %633 = vmatpush1.msra.mxu0 0.0
      %634 = vmatprep.subr.mxu0 0.0
      %635 = vmatpush1.msra.mxu0 0.0
      %636 = vmatprep.subr.mxu0 0.0
      %637 = vmatpush1.msra.mxu0 0.0
      %638 = vmatprep.subr.mxu0 0.0
      %639 = vmatpush1.msra.mxu0 0.0
      %640 = vmatprep.subr.mxu0 0.0
      %641 = vmatpush1.msra.mxu0 0.0
      %642 = vmatprep.subr.mxu0 0.0
      %643 = vmatpush1.msra.mxu0 0.0
      %644 = vmatprep.subr.mxu0 0.0
      %645 = vmatpush1.msra.mxu0 0.0
      %646 = vmatprep.subr.mxu0 0.0
      %647 = vmatpush1.msra.mxu0 0.0
      %648 = vmatprep.subr.mxu0 0.0
      %649 = vmatpush1.msra.mxu0 0.0
      %650 = vmatprep.subr.mxu0 0.0
      %651 = vmatpush1.msra.mxu0 0.0
      %652 = vmatprep.subr.mxu0 0.0
      %653 = vmatpush1.msra.mxu0 0.0
      %654 = vmatprep.subr.mxu0 0.0
      %655 = vmatpush1.msra.mxu0 0.0
      %656 = vmatprep.subr.mxu0 0.0
      %657 = vmatpush1.msra.mxu0 0.0
      %658 = vmatprep.subr.mxu0 0.0
      %659 = vmatpush1.msra.mxu0 0.0
      %660 = vmatprep.subr.mxu0 0.0
      %661 = vmatpush1.msra.mxu0 0.0
      %662 = vmatprep.subr.mxu0 0.0
      %663 = vmatpush1.msra.mxu0 0.0
      %664 = vmatprep.mubr.f32.mxu0 0.0
      %665 = vmatmul.mubr.f32.gmra.mrb[0].mxu0 %v574
      %v666 = vpop.f32.mrb[0].mxu0
      %v667 = vadd.f32 0.0, %v666
      %v668 = vpop.f32.mrb[0].mxu0
      %669 = vmatprep.mubr.f32.mxu0 0.0
      %670 = vmatmul.mubr.f32.gmra.mrb[0].mxu0 %v577
      %v671 = vpop.f32.mrb[0].mxu0
      %v672 = vadd.f32 0.0, %v671
      %v673 = vpop.f32.mrb[0].mxu0
      %674 = vmatprep.mubr.f32.mxu0 0.0
      %675 = vmatmul.mubr.f32.gmra.mrb[0].mxu0 %v580
      %v676 = vpop.f32.mrb[0].mxu0
      %v677 = vadd.f32 0.0, %v676
      %v678 = vpop.f32.mrb[0].mxu0
      %679 = vmatprep.mubr.f32.mxu0 0.0
      %680 = vmatmul.mubr.f32.gmra.mrb[0].mxu0 %v583
      %v681 = vpop.f32.mrb[0].mxu0
      %v682 = vadd.f32 0.0, %v681
      %v683 = vpop.f32.mrb[0].mxu0
      %684 = vmatprep.mubr.f32.mxu0 0.0
      %685 = vmatmul.mubr.f32.gmra.mrb[0].mxu0 %v586
      %v686 = vpop.f32.mrb[0].mxu0
      %v687 = vadd.f32 0.0, %v686
      %v688 = vpop.f32.mrb[0].mxu0
      %689 = vmatprep.mubr.f32.mxu0 0.0
      %690 = vmatmul.mubr.f32.gmra.mrb[0].mxu0 %v589
      %v691 = vpop.f32.mrb[0].mxu0
      %v692 = vadd.f32 0.0, %v691
      %v693 = vpop.f32.mrb[0].mxu0
      %694 = vmatprep.mubr.f32.mxu0 0.0
      %695 = vmatmul.mubr.f32.gmra.mrb[0].mxu0 %v592
      %v696 = vpop.f32.mrb[0].mxu0
      %v697 = vadd.f32 0.0, %v696
      %v698 = vpop.f32.mrb[0].mxu0
      %699 = vmatprep.mubr.f32.mxu0 0.0
      %700 = vmatmul.mubr.f32.gmra.mrb[0].mxu0 %v595
      %v701 = vpop.f32.mrb[0].mxu0
      %v702 = vadd.f32 0.0, %v701
      %v703 = vpop.f32.mrb[0].mxu0
      %704 = vmatprep.mubr.f32.mxu0 0.0
      %705 = vmatmul.mubr.f32.gmra.mrb[0].mxu0 %v598
      %v706 = vpop.f32.mrb[0].mxu0
      %v707 = vadd.f32 0.0, %v706
      %v708 = vpop.f32.mrb[0].mxu0
      %709 = vdwg.mxu0
      %v710 = vld [vmem:[%s0] sm:$0xff]
      %v711 = vld [vmem:[%s0 + $0x8] sm:$0xff]
      %v712 = vld [vmem:[%s0 + $0x10] sm:$0xff]
      %v713 = vld [vmem:[%s0 + $0x18] sm:$0xff]
      %v714 = vld [vmem:[%s0 + $0x20] sm:$0xff]
      %v715 = vld [vmem:[%s0 + $0x28] sm:$0xff]
      %v716 = vld [vmem:[%s0 + $0x30] sm:$0xff]
      %v717 = vld [vmem:[%s0 + $0x38] sm:$0xff]
      %v718 = vld [vmem:[%s0 + $0x40] sm:$0xff]
      %v719 = vadd.f32 %v710, %v667
      %v720 = vadd.f32 %v711, %v672
      %v721 = vadd.f32 %v712, %v677
      %v722 = vadd.f32 %v713, %v682
      %v723 = vadd.f32 %v714, %v687
      %v724 = vadd.f32 %v715, %v692
      %v725 = vadd.f32 %v716, %v697
      %v726 = vadd.f32 %v717, %v702
      %v727 = vadd.f32 %v718, %v707
      %v728 = vpack.c.bf16 %v720, %v719
      %v729 = vpack.c.bf16 %v722, %v721
      %v730 = vpack.c.bf16 %v724, %v723
      %v731 = vpack.c.bf16 %v726, %v725
      %v732 = vpack.c.bf16 %v727, %v727
      %v733 = vld [vmem:[%s2] sm:$0xf]
      %v734 = vld [vmem:[%s2 + $0x4] sm:$0xf]
      %v735 = vld [vmem:[%s2 + $0x8] sm:$0xf]
      %v736 = vld [vmem:[%s2 + $0xc] sm:$0xf]
      %v737 = vld [vmem:[%s2 + $0x10] sm:$0xf]
      %v738 = vld [vmem:[%s2 + $0x14] sm:$0xf]
      %v739 = vld [vmem:[%s2 + $0x18] sm:$0xf]
      %v740 = vld [vmem:[%s2 + $0x1c] sm:$0xf]
      %v741 = vld [vmem:[%s2 + $0x20] sm:$0xf]
      %v742 = vld [vmem:[%s2 + $0x24] sm:$0xf]
      %v743 = vld [vmem:[%s2 + $0x28] sm:$0xf]
      %v744 = vld [vmem:[%s2 + $0x2c] sm:$0xf]
      %v745 = vld [vmem:[%s2 + $0x30] sm:$0xf]
      %v746 = vld [vmem:[%s2 + $0x34] sm:$0xf]
      %v747 = vld [vmem:[%s2 + $0x38] sm:$0xf]
      %v748 = vld [vmem:[%s2 + $0x3c] sm:$0xf]
      %v749 = vld [vmem:[%s3] sm:$0x1]
      %v751 = vlaneseq
      %v752 = vshrl.u32 %v751, 7
      %v753 = vsub.s32 0, %v752
      %v754 = vrot.slane %v749, %v753
      %v772 = vunpack.c.l.b16 %v733
      %v773 = vunpack.c.l.b16 %v734
      %v774 = vunpack.c.l.b16 %v735
      %v775 = vunpack.c.l.b16 %v736
      %v776 = vunpack.c.l.b16 %v737
      %v777 = vunpack.c.l.b16 %v738
      %v778 = vunpack.c.l.b16 %v739
      %v779 = vunpack.c.l.b16 %v740
      %v780 = vunpack.c.l.b16 %v741
      %v781 = vunpack.c.l.b16 %v742
      %v782 = vunpack.c.l.b16 %v743
      %v783 = vunpack.c.l.b16 %v744
      %v784 = vunpack.c.l.b16 %v745
      %v785 = vunpack.c.l.b16 %v746
      %v786 = vunpack.c.l.b16 %v747
      %v787 = vunpack.c.l.b16 %v748
      %v788 = vpack.c.b16 %v773, %v772
      %v789 = vpack.c.b16 %v775, %v774
      %v790 = vpack.c.b16 %v777, %v776
      %v791 = vpack.c.b16 %v779, %v778
      %v792 = vpack.c.b16 %v781, %v780
      %v793 = vpack.c.b16 %v783, %v782
      %v794 = vpack.c.b16 %v785, %v784
      %v795 = vpack.c.b16 %v787, %v786
      %804 = vmatprep.subr.bf16.mxu0 0
      %805 = vmatpush1.bf16.msra.mxu0 %v788
      %806 = vmatprep.subr.bf16.mxu0 0
      %807 = vmatpush1.bf16.msra.mxu0 %v789
      %808 = vmatprep.subr.bf16.mxu0 0
      %809 = vmatpush1.bf16.msra.mxu0 %v790
      %810 = vmatprep.subr.bf16.mxu0 0
      %811 = vmatpush1.bf16.msra.mxu0 %v791
      %812 = vmatprep.subr.bf16.mxu0 0
      %813 = vmatpush1.bf16.msra.mxu0 %v792
      %814 = vmatprep.subr.bf16.mxu0 0
      %815 = vmatpush1.bf16.msra.mxu0 %v793
      %816 = vmatprep.subr.bf16.mxu0 0
      %817 = vmatpush1.bf16.msra.mxu0 %v794
      %818 = vmatprep.subr.bf16.mxu0 0
      %819 = vmatpush1.bf16.msra.mxu0 %v795
      %820 = vmatprep.subr.bf16.mxu0 0
      %821 = vmatpush1.bf16.msra.mxu0 0
      %822 = vmatprep.subr.bf16.mxu0 0
      %823 = vmatpush1.bf16.msra.mxu0 0
      %824 = vmatprep.subr.bf16.mxu0 0
      %825 = vmatpush1.bf16.msra.mxu0 0
      %826 = vmatprep.subr.bf16.mxu0 0
      %827 = vmatpush1.bf16.msra.mxu0 0
      %828 = vmatprep.subr.bf16.mxu0 0
      %829 = vmatpush1.bf16.msra.mxu0 0
      %830 = vmatprep.subr.bf16.mxu0 0
      %831 = vmatpush1.bf16.msra.mxu0 0
      %832 = vmatprep.subr.bf16.mxu0 0
      %833 = vmatpush1.bf16.msra.mxu0 0
      %834 = vmatprep.subr.bf16.mxu0 0
      %835 = vmatpush1.bf16.msra.mxu0 0
      %836 = vmatprep.mubr.bf16.mxu0 0
      %837 = vmatmul.mubr.bf16.gmra.mrb[0].mxu0 %v728
      %v838 = vpop.f32.mrb[0].mxu0
      %v839 = vadd.f32 %v754, %v838
      %v840 = vpop.f32.mrb[0].mxu0
      %v841 = vpop.f32.mrb[0].mxu0
      %v842 = vadd.f32 %v754, %v841
      %v843 = vpop.f32.mrb[0].mxu0
      %844 = vmatprep.mubr.bf16.mxu0 0
      %845 = vmatmul.mubr.bf16.gmra.mrb[0].mxu0 %v729
      %v846 = vpop.f32.mrb[0].mxu0
      %v847 = vadd.f32 %v754, %v846
      %v848 = vpop.f32.mrb[0].mxu0
      %v849 = vpop.f32.mrb[0].mxu0
      %v850 = vadd.f32 %v754, %v849
      %v851 = vpop.f32.mrb[0].mxu0
      %852 = vmatprep.mubr.bf16.mxu0 0
      %853 = vmatmul.mubr.bf16.gmra.mrb[0].mxu0 %v730
      %v854 = vpop.f32.mrb[0].mxu0
      %v855 = vadd.f32 %v754, %v854
      %v856 = vpop.f32.mrb[0].mxu0
      %v857 = vpop.f32.mrb[0].mxu0
      %v858 = vadd.f32 %v754, %v857
      %v859 = vpop.f32.mrb[0].mxu0
      %860 = vmatprep.mubr.bf16.mxu0 0
      %861 = vmatmul.mubr.bf16.gmra.mrb[0].mxu0 %v731
      %v862 = vpop.f32.mrb[0].mxu0
      %v863 = vadd.f32 %v754, %v862
      %v864 = vpop.f32.mrb[0].mxu0
      %v865 = vpop.f32.mrb[0].mxu0
      %v866 = vadd.f32 %v754, %v865
      %v867 = vpop.f32.mrb[0].mxu0
      %868 = vmatprep.mubr.bf16.mxu0 0
      %869 = vmatmul.mubr.bf16.gmra.mrb[0].mxu0 %v732
      %v870 = vpop.f32.mrb[0].mxu0
      %v871 = vadd.f32 %v754, %v870
      %v872 = vpop.f32.mrb[0].mxu0
      %v873 = vpop.f32.mrb[0].mxu0
      %v874 = vpop.f32.mrb[0].mxu0
      %875 = vdwg.mxu0
      %v876 = vld [vmem:[%s4] sm:$0xff]
      %vm877 = vcmask 588800
      %v879 = vsel %vm877, %v876, 0
      %881 = vmatprep.subr.mxu0 0.0
      %882 = vmatpush1.msra.mxu0 %v839
      %883 = vmatprep.subr.mxu0 0.0
      %884 = vmatpush1.msra.mxu0 %v842
      %885 = vmatprep.subr.mxu0 0.0
      %886 = vmatpush1.msra.mxu0 %v847
      %887 = vmatprep.subr.mxu0 0.0
      %888 = vmatpush1.msra.mxu0 %v850
      %889 = vmatprep.subr.mxu0 0.0
      %890 = vmatpush1.msra.mxu0 %v855
      %891 = vmatprep.subr.mxu0 0.0
      %892 = vmatpush1.msra.mxu0 %v858
      %893 = vmatprep.subr.mxu0 0.0
      %894 = vmatpush1.msra.mxu0 %v863
      %895 = vmatprep.subr.mxu0 0.0
      %896 = vmatpush1.msra.mxu0 %v866
      %897 = vmatprep.subr.mxu0 0.0
      %898 = vmatpush1.msra.mxu0 %v871
      %899 = vmatprep.subr.mxu0 0.0
      %900 = vmatpush1.msra.mxu0 0.0
      %901 = vmatprep.subr.mxu0 0.0
      %902 = vmatpush1.msra.mxu0 0.0
      %903 = vmatprep.subr.mxu0 0.0
      %904 = vmatpush1.msra.mxu0 0.0
      %905 = vmatprep.subr.mxu0 0.0
      %906 = vmatpush1.msra.mxu0 0.0
      %907 = vmatprep.subr.mxu0 0.0
      %908 = vmatpush1.msra.mxu0 0.0
      %909 = vmatprep.subr.mxu0 0.0
      %910 = vmatpush1.msra.mxu0 0.0
      %911 = vmatprep.subr.mxu0 0.0
      %912 = vmatpush1.msra.mxu0 0.0
      %913 = vmatprep.subr.mxu0 0.0
      %914 = vmatpush1.msra.mxu0 0.0
      %915 = vmatprep.subr.mxu0 0.0
      %916 = vmatpush1.msra.mxu0 0.0
      %917 = vmatprep.subr.mxu0 0.0
      %918 = vmatpush1.msra.mxu0 0.0
      %919 = vmatprep.subr.mxu0 0.0
      %920 = vmatpush1.msra.mxu0 0.0
      %921 = vmatprep.subr.mxu0 0.0
      %922 = vmatpush1.msra.mxu0 0.0
      %923 = vmatprep.subr.mxu0 0.0
      %924 = vmatpush1.msra.mxu0 0.0
      %925 = vmatprep.subr.mxu0 0.0
      %926 = vmatpush1.msra.mxu0 0.0
      %927 = vmatprep.subr.mxu0 0.0
      %928 = vmatpush1.msra.mxu0 0.0
      %929 = vmatprep.subr.mxu0 0.0
      %930 = vmatpush1.msra.mxu0 0.0
      %931 = vmatprep.subr.mxu0 0.0
      %932 = vmatpush1.msra.mxu0 0.0
      %933 = vmatprep.subr.mxu0 0.0
      %934 = vmatpush1.msra.mxu0 0.0
      %935 = vmatprep.subr.mxu0 0.0
      %936 = vmatpush1.msra.mxu0 0.0
      %937 = vmatprep.subr.mxu0 0.0
      %938 = vmatpush1.msra.mxu0 0.0
      %939 = vmatprep.subr.mxu0 0.0
      %940 = vmatpush1.msra.mxu0 0.0
      %941 = vmatprep.subr.mxu0 0.0
      %942 = vmatpush1.msra.mxu0 0.0
      %943 = vmatprep.subr.mxu0 0.0
      %944 = vmatpush1.msra.mxu0 0.0
      %945 = vmatprep.mubr.f32.mxu0 0.0
      %946 = vmatmul.mubr.f32.gmra.mrb[0].mxu0 %v879
      %v947 = vpop.f32.mrb[0].mxu0
      %v948 = vadd.f32 0.0, %v947
      %v949 = vpop.f32.mrb[0].mxu0
      %950 = vdwg.mxu0
      %v951 = vld [vmem:[%s5] sm:$0xff]
      %953 = vset.pattern.permute.xlu0 0
      %954 = vperm.xlu0 %953, %v951
      %v955 = vpop.permute.xlu0 %954
      %v957 = vmul.f32 %v948, %v955
      %v958 = vpack.c.bf16 %v957, %v957
      %v959 = vld [vmem:[%s6] sm:$0xf]
      %v960 = vld [vmem:[%s6 + $0x4] sm:$0xf]
      %v961 = vld [vmem:[%s6 + $0x8] sm:$0xf]
      %v962 = vld [vmem:[%s6 + $0xc] sm:$0xf]
      %v963 = vld [vmem:[%s6 + $0x10] sm:$0xf]
      %v964 = vld [vmem:[%s6 + $0x14] sm:$0xf]
      %v965 = vld [vmem:[%s6 + $0x18] sm:$0xf]
      %v966 = vld [vmem:[%s6 + $0x1c] sm:$0xf]
      %v967 = vld [vmem:[%s6 + $0x20] sm:$0xf]
      %v968 = vld [vmem:[%s6 + $0x24] sm:$0xf]
      %v969 = vld [vmem:[%s6 + $0x28] sm:$0xf]
      %v970 = vld [vmem:[%s6 + $0x2c] sm:$0xf]
      %v971 = vld [vmem:[%s6 + $0x30] sm:$0xf]
      %v972 = vld [vmem:[%s6 + $0x34] sm:$0xf]
      %v973 = vld [vmem:[%s6 + $0x38] sm:$0xf]
      %v974 = vld [vmem:[%s6 + $0x3c] sm:$0xf]
      %v975 = vld [vmem:[%s7] sm:$0x1]
      %v977 = vlaneseq
      %v978 = vshrl.u32 %v977, 7
      %v979 = vsub.s32 0, %v978
      %v980 = vrot.slane %v975, %v979
      %v998 = vunpack.c.l.b16 %v959
      %v999 = vunpack.c.l.b16 %v960
      %v1000 = vunpack.c.l.b16 %v961
      %v1001 = vunpack.c.l.b16 %v962
      %v1002 = vunpack.c.l.b16 %v963
      %v1003 = vunpack.c.l.b16 %v964
      %v1004 = vunpack.c.l.b16 %v965
      %v1005 = vunpack.c.l.b16 %v966
      %v1006 = vunpack.c.l.b16 %v967
      %v1007 = vunpack.c.l.b16 %v968
      %v1008 = vunpack.c.l.b16 %v969
      %v1009 = vunpack.c.l.b16 %v970
      %v1010 = vunpack.c.l.b16 %v971
      %v1011 = vunpack.c.l.b16 %v972
      %v1012 = vunpack.c.l.b16 %v973
      %v1013 = vunpack.c.l.b16 %v974
      %v1014 = vpack.c.b16 %v999, %v998
      %v1015 = vpack.c.b16 %v1001, %v1000
      %v1016 = vpack.c.b16 %v1003, %v1002
      %v1017 = vpack.c.b16 %v1005, %v1004
      %v1018 = vpack.c.b16 %v1007, %v1006
      %v1019 = vpack.c.b16 %v1009, %v1008
      %v1020 = vpack.c.b16 %v1011, %v1010
      %v1021 = vpack.c.b16 %v1013, %v1012
      %1030 = vmatprep.subr.bf16.mxu0 0
      %1031 = vmatpush1.bf16.msra.mxu0 %v1014
      %1032 = vmatprep.subr.bf16.mxu0 0
      %1033 = vmatpush1.bf16.msra.mxu0 %v1015
      %1034 = vmatprep.subr.bf16.mxu0 0
      %1035 = vmatpush1.bf16.msra.mxu0 %v1016
      %1036 = vmatprep.subr.bf16.mxu0 0
      %1037 = vmatpush1.bf16.msra.mxu0 %v1017
      %1038 = vmatprep.subr.bf16.mxu0 0
      %1039 = vmatpush1.bf16.msra.mxu0 %v1018
      %1040 = vmatprep.subr.bf16.mxu0 0
      %1041 = vmatpush1.bf16.msra.mxu0 %v1019
      %1042 = vmatprep.subr.bf16.mxu0 0
      %1043 = vmatpush1.bf16.msra.mxu0 %v1020
      %1044 = vmatprep.subr.bf16.mxu0 0
      %1045 = vmatpush1.bf16.msra.mxu0 %v1021
      %1046 = vmatprep.subr.bf16.mxu0 0
      %1047 = vmatpush1.bf16.msra.mxu0 0
      %1048 = vmatprep.subr.bf16.mxu0 0
      %1049 = vmatpush1.bf16.msra.mxu0 0
      %1050 = vmatprep.subr.bf16.mxu0 0
      %1051 = vmatpush1.bf16.msra.mxu0 0
      %1052 = vmatprep.subr.bf16.mxu0 0
      %1053 = vmatpush1.bf16.msra.mxu0 0
      %1054 = vmatprep.subr.bf16.mxu0 0
      %1055 = vmatpush1.bf16.msra.mxu0 0
      %1056 = vmatprep.subr.bf16.mxu0 0
      %1057 = vmatpush1.bf16.msra.mxu0 0
      %1058 = vmatprep.subr.bf16.mxu0 0
      %1059 = vmatpush1.bf16.msra.mxu0 0
      %1060 = vmatprep.subr.bf16.mxu0 0
      %1061 = vmatpush1.bf16.msra.mxu0 0
      %1062 = vmatprep.mubr.bf16.mxu0 0
      %1063 = vmatmul.mubr.bf16.gmra.mrb[0].mxu0 %v958
      %v1064 = vpop.f32.mrb[0].mxu0
      %v1065 = vadd.f32 %v980, %v1064
      %v1066 = vpop.f32.mrb[0].mxu0
      %v1067 = vpop.f32.mrb[0].mxu0
      %v1068 = vpop.f32.mrb[0].mxu0
      %1069 = vdwg.mxu0
      %1070 = vst [vmem:[#allocation2] sm:$0xff] %v1065
      %v1071 = vld [vmem:[%s10] sm:$0x1]
      %v1073 = vlaneseq
      %v1074 = vshrl.u32 %v1073, 7
      %v1075 = vsub.s32 0, %v1074
      %v1076 = vrot.slane %v1071, %v1075
      %v1078 = vadd.f32 %v1065, %v1076
      %1079 = vmax.xlane.f32.xlu0 %v1078
      %v1080 = vpop.xlane.xlu0 %1079
      %v1081 = vsub.f32 %v1078, %v1080
      %v1082 = vmul.f32 %v1081, 1.442695
      %v1083 = vpow.pop %v1082
      %1084 = vadd.xlane.f32.xlu0 %v1083
      %v1085 = vpop.xlane.xlu0 %1084
      %v1086 = vlog2.pop %v1085
      %v1087 = vmul.f32 %v1086, 0.6931472
      %v1088 = vadd.f32 %v1087, %v1080
      %v1089 = vld [vmem:[%s9] sm:$0xff]
      %v1090 = vmul.f32 %v1089, %v1065
      %1091 = vadd.xlane.f32.xlu0 %v1090
      %v1092 = vpop.xlane.xlu0 %1091
      %v1093 = vsub.f32 %v1088, %v1092
      %v1094 = vld [vmem:[%s11] sm:$0xff]
      %v1095 = vmul.f32 %v1093, %v1094
      %vm1096 = vcmask 7168
      %v1097 = vsel %vm1096, %v1095, 0.0
      %1098 = vadd.xlane.f32.xlu0 %v1097
      %v1099 = vpop.xlane.xlu0 %1098
      %v1100 = vrot.slane %v1099, 4
      %v1101 = vadd.f32 %v1099, %v1100
      %v1102 = vrot.slane %v1101, 2
      %v1103 = vadd.f32 %v1101, %v1102
      %v1104 = vrot.slane %v1103, 1
      %v1105 = vadd.f32 %v1103, %v1104
      %s1106 = vtos %v1105
      %v1107 = vld [vmem:[%s548] sm:$0xff]
      %v1108 = vld [vmem:[%s548 + $0x8] sm:$0xff]
      %v1109 = vld [vmem:[%s548 + $0x10] sm:$0xff]
      %v1110 = vld [vmem:[%s548 + $0x18] sm:$0xff]
      %v1111 = vld [vmem:[%s548 + $0x20] sm:$0xff]
      %v1112 = vld [vmem:[%s548 + $0x28] sm:$0xff]
      %v1113 = vld [vmem:[%s548 + $0x30] sm:$0xff]
      %v1114 = vld [vmem:[%s548 + $0x38] sm:$0xff]
      %v1115 = vld [vmem:[%s548 + $0x40] sm:$0xff]
      %v1116 = vld [vmem:[%s14] sm:$0xff]
      %v1117 = vld [vmem:[%s14 + $0x8] sm:$0xff]
      %v1118 = vld [vmem:[%s14 + $0x10] sm:$0xff]
      %v1119 = vld [vmem:[%s14 + $0x18] sm:$0xff]
      %v1120 = vld [vmem:[%s14 + $0x20] sm:$0xff]
      %v1121 = vld [vmem:[%s14 + $0x28] sm:$0xff]
      %v1122 = vld [vmem:[%s14 + $0x30] sm:$0xff]
      %v1123 = vld [vmem:[%s14 + $0x38] sm:$0xff]
      %v1124 = vld [vmem:[%s14 + $0x40] sm:$0xff]
      %v1125 = vsub.f32 %v1107, %v1116
      %v1126 = vsub.f32 %v1108, %v1117
      %v1127 = vsub.f32 %v1109, %v1118
      %v1128 = vsub.f32 %v1110, %v1119
      %v1129 = vsub.f32 %v1111, %v1120
      %v1130 = vsub.f32 %v1112, %v1121
      %v1131 = vsub.f32 %v1113, %v1122
      %v1132 = vsub.f32 %v1114, %v1123
      %v1133 = vsub.f32 %v1115, %v1124
      %v1134 = vld [vmem:[%s12] sm:$0xff]
      %v1135 = vld [vmem:[%s12 + $0x8] sm:$0xff]
      %v1136 = vld [vmem:[%s12 + $0x10] sm:$0xff]
      %v1137 = vld [vmem:[%s12 + $0x18] sm:$0xff]
      %v1138 = vld [vmem:[%s12 + $0x20] sm:$0xff]
      %v1139 = vld [vmem:[%s12 + $0x28] sm:$0xff]
      %v1140 = vld [vmem:[%s12 + $0x30] sm:$0xff]
      %v1141 = vld [vmem:[%s12 + $0x38] sm:$0xff]
      %v1142 = vld [vmem:[%s12 + $0x40] sm:$0xff]
      %1144 = vset.pattern.permute.xlu0 0
      %1145 = vperm.xlu0 %1144, %v1134
      %v1146 = vpop.permute.xlu0 %1145
      %1149 = vset.pattern.permute.xlu0 0
      %1150 = vperm.xlu0 %1149, %v1135
      %v1151 = vpop.permute.xlu0 %1150
      %1154 = vset.pattern.permute.xlu0 0
      %1155 = vperm.xlu0 %1154, %v1136
      %v1156 = vpop.permute.xlu0 %1155
      %1159 = vset.pattern.permute.xlu0 0
      %1160 = vperm.xlu0 %1159, %v1137
      %v1161 = vpop.permute.xlu0 %1160
      %1164 = vset.pattern.permute.xlu0 0
      %1165 = vperm.xlu0 %1164, %v1138
      %v1166 = vpop.permute.xlu0 %1165
      %1169 = vset.pattern.permute.xlu0 0
      %1170 = vperm.xlu0 %1169, %v1139
      %v1171 = vpop.permute.xlu0 %1170
      %1174 = vset.pattern.permute.xlu0 0
      %1175 = vperm.xlu0 %1174, %v1140
      %v1176 = vpop.permute.xlu0 %1175
      %1179 = vset.pattern.permute.xlu0 0
      %1180 = vperm.xlu0 %1179, %v1141
      %v1181 = vpop.permute.xlu0 %1180
      %1184 = vset.pattern.permute.xlu0 0
      %1185 = vperm.xlu0 %1184, %v1142
      %v1186 = vpop.permute.xlu0 %1185
      %v1188 = vmul.f32 %v1125, %v1146
      %v1189 = vmul.f32 %v1126, %v1151
      %v1190 = vmul.f32 %v1127, %v1156
      %v1191 = vmul.f32 %v1128, %v1161
      %v1192 = vmul.f32 %v1129, %v1166
      %v1193 = vmul.f32 %v1130, %v1171
      %v1194 = vmul.f32 %v1131, %v1176
      %v1195 = vmul.f32 %v1132, %v1181
      %v1196 = vmul.f32 %v1133, %v1186
      %v1197 = vand.u32 2147483647, %v1188
      %v1198 = vand.u32 2147483647, %v1189
      %v1199 = vand.u32 2147483647, %v1190
      %v1200 = vand.u32 2147483647, %v1191
      %v1201 = vand.u32 2147483647, %v1192
      %v1202 = vand.u32 2147483647, %v1193
      %v1203 = vand.u32 2147483647, %v1194
      %v1204 = vand.u32 2147483647, %v1195
      %v1205 = vand.u32 2147483647, %v1196
      %vm1206 = vcmp.lt.f32.partialorder %v1197, 1.0
      %vm1207 = vcmp.lt.f32.partialorder %v1198, 1.0
      %vm1208 = vcmp.lt.f32.partialorder %v1199, 1.0
      %vm1209 = vcmp.lt.f32.partialorder %v1200, 1.0
      %vm1210 = vcmp.lt.f32.partialorder %v1201, 1.0
      %vm1211 = vcmp.lt.f32.partialorder %v1202, 1.0
      %vm1212 = vcmp.lt.f32.partialorder %v1203, 1.0
      %vm1213 = vcmp.lt.f32.partialorder %v1204, 1.0
      %vm1214 = vcmp.lt.f32.partialorder %v1205, 1.0
      %v1215 = vmul.f32 %v1188, 0.5
      %v1216 = vmul.f32 %v1189, 0.5
      %v1217 = vmul.f32 %v1190, 0.5
      %v1218 = vmul.f32 %v1191, 0.5
      %v1219 = vmul.f32 %v1192, 0.5
      %v1220 = vmul.f32 %v1193, 0.5
      %v1221 = vmul.f32 %v1194, 0.5
      %v1222 = vmul.f32 %v1195, 0.5
      %v1223 = vmul.f32 %v1196, 0.5
      %v1224 = vmul.f32 %v1215, %v1188
      %v1225 = vmul.f32 %v1216, %v1189
      %v1226 = vmul.f32 %v1217, %v1190
      %v1227 = vmul.f32 %v1218, %v1191
      %v1228 = vmul.f32 %v1219, %v1192
      %v1229 = vmul.f32 %v1220, %v1193
      %v1230 = vmul.f32 %v1221, %v1194
      %v1231 = vmul.f32 %v1222, %v1195
      %v1232 = vmul.f32 %v1223, %v1196
      %v1233 = vsub.f32 %v1197, 0.5
      %v1234 = vsub.f32 %v1198, 0.5
      %v1235 = vsub.f32 %v1199, 0.5
      %v1236 = vsub.f32 %v1200, 0.5
      %v1237 = vsub.f32 %v1201, 0.5
      %v1238 = vsub.f32 %v1202, 0.5
      %v1239 = vsub.f32 %v1203, 0.5
      %v1240 = vsub.f32 %v1204, 0.5
      %v1241 = vsub.f32 %v1205, 0.5
      %v1242 = vsel %vm1206, %v1224, %v1233
      %v1243 = vsel %vm1207, %v1225, %v1234
      %v1244 = vsel %vm1208, %v1226, %v1235
      %v1245 = vsel %vm1209, %v1227, %v1236
      %v1246 = vsel %vm1210, %v1228, %v1237
      %v1247 = vsel %vm1211, %v1229, %v1238
      %v1248 = vsel %vm1212, %v1230, %v1239
      %v1249 = vsel %vm1213, %v1231, %v1240
      %v1250 = vsel %vm1214, %v1232, %v1241
      %vm1251 = vcmask 23552
      %v1252 = vsel %vm1251, %v1242, 0.0
      %v1253 = vsel %vm1251, %v1243, 0.0
      %v1254 = vadd.f32 %v1252, %v1253
      %v1255 = vsel %vm1251, %v1244, 0.0
      %v1256 = vadd.f32 %v1254, %v1255
      %v1257 = vsel %vm1251, %v1245, 0.0
      %v1258 = vadd.f32 %v1256, %v1257
      %v1259 = vsel %vm1251, %v1246, 0.0
      %v1260 = vadd.f32 %v1258, %v1259
      %v1261 = vsel %vm1251, %v1247, 0.0
      %v1262 = vadd.f32 %v1260, %v1261
      %v1263 = vsel %vm1251, %v1248, 0.0
      %v1264 = vadd.f32 %v1262, %v1263
      %v1265 = vsel %vm1251, %v1249, 0.0
      %v1266 = vadd.f32 %v1264, %v1265
      %v1267 = vsel %vm1251, %v1250, 0.0
      %v1268 = vadd.f32 %v1266, %v1267
      %1269 = vadd.xlane.f32.xlu0 %v1268
      %v1270 = vpop.xlane.xlu0 %1269
      %v1271 = vrot.slane %v1270, 4
      %v1272 = vadd.f32 %v1270, %v1271
      %v1273 = vrot.slane %v1272, 2
      %v1274 = vadd.f32 %v1272, %v1273
      %v1275 = vrot.slane %v1274, 1
      %v1276 = vadd.f32 %v1274, %v1275
      %s1277 = vtos %v1276
      %s1278 = smul.f32 %s1277, 0.011494253
      %v1279 = vld [vmem:[%s553] sm:$0xff]
      %v1280 = vld [vmem:[%s553 + $0x8] sm:$0xff]
      %v1281 = vld [vmem:[%s16] sm:$0xff]
      %v1282 = vld [vmem:[%s16 + $0x8] sm:$0xff]
      %v1283 = vsub.f32 %v1279, %v1281
      %v1284 = vsub.f32 %v1280, %v1282
      %v1285 = vand.u32 2147483647, %v1283
      %v1286 = vand.u32 2147483647, %v1284
      %vm1287 = vcmp.lt.f32.partialorder %v1285, 1.0
      %vm1288 = vcmp.lt.f32.partialorder %v1286, 1.0
      %v1289 = vmul.f32 %v1283, 0.5
      %v1290 = vmul.f32 %v1284, 0.5
      %v1291 = vmul.f32 %v1289, %v1283
      %v1292 = vmul.f32 %v1290, %v1284
      %v1293 = vsub.f32 %v1285, 0.5
      %v1294 = vsub.f32 %v1286, 0.5
      %v1295 = vsel %vm1287, %v1291, %v1293
      %v1296 = vsel %vm1288, %v1292, %v1294
      %v1297 = vsel %vm1251, %v1295, 0.0
      %v1298 = vsel %vm1251, %v1296, 0.0
      %v1299 = vadd.f32 %v1297, %v1298
      %1300 = vadd.xlane.f32.xlu0 %v1299
      %v1301 = vpop.xlane.xlu0 %1300
      %v1302 = vrot.slane %v1301, 4
      %v1303 = vadd.f32 %v1301, %v1302
      %v1304 = vrot.slane %v1303, 2
      %v1305 = vadd.f32 %v1303, %v1304
      %v1306 = vrot.slane %v1305, 1
      %v1307 = vadd.f32 %v1305, %v1306
      %s1308 = vtos %v1307
      %s1309 = smul.f32 %s1308, 0.027777778
      %v1310 = vlaneseq
      %v1311 = vand.u32 %v1310, 127
      %vm1312 = vcmp.eq.s32.totalorder %v1311, 0
      %s1313 = sadd.f32 %s1278, %s1309
      %v1314 = vstv %s1313
      %v1315 = vsel %vm1312, %v1314, 0.0
      %vm1316 = vcmp.eq.s32.totalorder %v1311, 1
      %v1317 = vstv %s1106
      %v1318 = vsel %vm1316, %v1317, 0.0
      %v1319 = vadd.f32 %v1315, %v1318
      %v1320 = vld [vmem:[%s17] sm:$0x1]
      %v1321 = vadd.f32 %v1320, %v1319
      %1322 = vst [vmem:[%s17] sm:$0x1] %v1321
      // Predicated region
      $region93: #{_forward_jit.6} parent=87 // pred_check
        %p1323 = pneg %p408
      $region94: #{_forward_jit.6} parent=87 // pred_check_branch
        %1325 = sbr.rel (%p1323) target = $region96
      $region95: #{_forward_jit.6} parent=87 // pred_region
        _
      $region96: #{_forward_jit.6} parent=87 // pred_fallthru
        _
      // Predicated region
      $region97: #{_forward_jit.6} parent=87 // pred_check
        %p1326 = pneg %p408
      $region98: #{_forward_jit.6} parent=87 // pred_check_branch
        %1328 = sbr.rel (%p1326) target = $region100
      $region99: #{_forward_jit.6} parent=87 // pred_region
        _
      $region100: #{_forward_jit.6} parent=87 // pred_fallthru
        _
    $region88: #{_forward_jit.6} parent=5 // pred_fallthru
      _
    %p1329 = scmp.le.s32.totalorder 2, %s23
    // Predicated region
    $region101: #{_forward_jit.6} parent=5 // pred_check
      %p1330 = pneg %p1329
    $region102: #{_forward_jit.6} parent=5 // pred_check_branch
      %1332 = sbr.rel (%p1330) target = $region104
    $region103: #{_forward_jit.6} parent=5 // pred_region
      %s1333 = ssub.s32 %s23, 2
    $region104: #{_forward_jit.6} parent=5 // pred_fallthru
      _
  $region6: #{_forward_jit.6} parent=0 // loop_footer
    %s27 = sadd.s32 1, %s23
  $region7: #{_forward_jit.6} parent=0 // loop_footer_branch
    %22 = sbr.rel target = $region3
  $region8: #{_forward_jit.6} parent=0 // loop_exit
    _

// kernel: _forward_jit.5
$region0: #{_forward_jit.5}
  #allocation0 [shape = 'u32[]', space=smem, size = 0x4, offset = 0x4, fixed_abs, tag = 'smem constant byte address 0x4 - core index']
  #allocation1 [shape = 'u32[144,128]{1,0:T(1,128)}', space=vmem, size = 0x12000, scoped, tag = 'internal scratch']
  #allocation2 [shape = 'f32[8,128]{1,0:T(8,128)}', space=vmem, size = 0x1000, scoped, tag = 'scratch operand']
  %s0 = inlined_call_operand.vmem [shape: f32[32,128], index: 0, kind: input, shape index: {}]
  %s1 = inlined_call_operand.vmem [shape: f32[32,8], index: 1, kind: input, shape index: {}]
  %s2 = inlined_call_operand.vmem [shape: bf16[128,128], index: 2, kind: input, shape index: {}]
  %s3 = inlined_call_operand.vmem [shape: f32[1,128], index: 3, kind: input, shape index: {}]
  %s4 = inlined_call_operand.vmem [shape: f32[8,32], index: 4, kind: input, shape index: {}]
  %s5 = inlined_call_operand.vmem [shape: f32[8,1], index: 5, kind: input, shape index: {}]
  %s6 = inlined_call_operand.vmem [shape: bf16[128,128], index: 6, kind: input, shape index: {}]
  %s7 = inlined_call_operand.vmem [shape: f32[1,128], index: 7, kind: input, shape index: {}]
  %s8 = inlined_call_operand.vmem [shape: f32[8,128], index: 8, kind: input, shape index: {}]
  %s9 = inlined_call_operand.vmem [shape: f32[8,128], index: 9, kind: input, shape index: {}]
  %s10 = inlined_call_operand.vmem [shape: f32[1,128], index: 10, kind: input, shape index: {}]
  %s11 = inlined_call_operand.vmem [shape: f32[8,1], index: 11, kind: input, shape index: {}]
  %s12 = inlined_call_operand.vmem [shape: f32[32,1], index: 12, kind: input, shape index: {}]
  %s13 = inlined_call_operand.vmem [shape: f32[5,32,3], index: 13, kind: input, shape index: {}]
  %s14 = inlined_call_operand.vmem [shape: f32[32,3], index: 14, kind: input, shape index: {}]
  %s15 = inlined_call_operand.vmem [shape: f32[5,16,3], index: 15, kind: input, shape index: {}]
  %s16 = inlined_call_operand.vmem [shape: f32[16,3], index: 16, kind: input, shape index: {}]
  %s17 = inlined_call_operand.vmem [shape: f32[1,128], index: 17, kind: output, shape index: {}]
  %s18 = sld [smem:[#allocation0]]
  $region105: #{_forward_jit.5} parent=0
    _
  %s20 = ssub.s32 1, %s18
  %s21 = scalar_select 0, %s20, %s18
  loop: start=0, step=1, limit=7
  $region2: #{_forward_jit.5} parent=0 // loop_pre_header
    _
  $region3: #{_forward_jit.5} parent=0 // loop_header
    %s23 = sphi 0, %s27
    %p24 = scmp.ge.s32.totalorder %s23, 7
    %s31 = sphi 0, %s31
    %s33 = sphi 0, %s31
    %s34 = sphi 0, %s33
    %s48 = sphi 0, %s34
    %s52 = sphi 0, %s52
    %s54 = sphi 0, %s52
    %s55 = sphi 0, %s54
    %s69 = sphi 0, %s55
    %s73 = sphi 0, %s73
    %s75 = sphi 0, %s73
    %s76 = sphi 0, %s75
    %s90 = sphi 0, %s76
    %s94 = sphi 0, %s94
    %s96 = sphi 0, %s94
    %s97 = sphi 0, %s96
    %s111 = sphi 0, %s97
    %s115 = sphi 0, %s115
    %s117 = sphi 0, %s115
    %s118 = sphi 0, %s117
    %s132 = sphi 0, %s118
    %s136 = sphi 0, %s136
    %s138 = sphi 0, %s136
    %s139 = sphi 0, %s138
    %s153 = sphi 0, %s139
    %s157 = sphi 0, %s157
    %s159 = sphi 0, %s157
    %s160 = sphi 0, %s159
    %s174 = sphi 0, %s160
    %s178 = sphi 0, %s178
    %s180 = sphi 0, %s178
    %s181 = sphi 0, %s180
    %s195 = sphi 0, %s181
    %s199 = sphi 0, %s199
    %s201 = sphi 0, %s199
    %s202 = sphi 0, %s201
    %s216 = sphi 0, %s202
    %s220 = sphi 0, %s220
    %s222 = sphi 0, %s220
    %s223 = sphi 0, %s222
    %s237 = sphi 0, %s223
    %s241 = sphi 0, %s241
    %s243 = sphi 0, %s241
    %s244 = sphi 0, %s243
    %s258 = sphi 0, %s244
    %s262 = sphi 0, %s262
    %s264 = sphi 0, %s262
    %s265 = sphi 0, %s264
    %s279 = sphi 0, %s265
    %s283 = sphi 0, %s283
    %s285 = sphi 0, %s283
    %s286 = sphi 0, %s285
    %s300 = sphi 0, %s286
    %s306 = sphi 0, %s308
    %s309 = sphi 0, %s306
    %s310 = sphi 0, %s309
    %s326 = sphi 0, %s310
    %s330 = sphi 0, %s330
    %s332 = sphi 0, %s330
    %s333 = sphi 0, %s332
    %s347 = sphi 0, %s333
    %s353 = sphi 0, %s355
    %s356 = sphi 0, %s353
    %s357 = sphi 0, %s356
    %s373 = sphi 0, %s357
    %s377 = sphi 0, %s377
    %s379 = sphi 0, %s377
    %s380 = sphi 0, %s379
    %s394 = sphi 0, %s380
    %s398 = sphi 0, %s398
    %s400 = sphi 0, %s398
    %s401 = sphi 0, %s400
    %s415 = sphi 0, %s401
  $region4: #{_forward_jit.5} parent=0 // loop_header_branch
    %26 = sbr.rel (%p24) target = $region8
  $region5: #{_forward_jit.5} parent=0 // loop_body
    %s28 = ssub.s32 %s23, 1
    %s29 = ssub.s32 %s23, 2
    %s30 = sadd.s32 %s23, 1
    %s32 = sadd.s32 %s31, 1
    %p35 = scmp.eq.s32.totalorder %s23, 4
    %p36 = scmp.ne.s32.totalorder %s31, %s33
    %p37 = scmp.eq.s32.totalorder %s23, 0
    %p38 = por %p36, %p37
    %p39 = scmp.ne.s32.totalorder %s31, %s33
    %p40 = scmp.eq.s32.totalorder %s28, 4
    %p41 = por %p39, %p40
    %p42 = scmp.ne.s32.totalorder %s33, %s34
    %p43 = scmp.eq.s32.totalorder %s28, 0
    %p44 = por %p42, %p43
    %p45 = scmp.ne.s32.totalorder %s33, %s34
    %p46 = scmp.eq.s32.totalorder %s29, 4
    %p47 = por %p45, %p46
    %p49 = scmp.ne.s32.totalorder %s34, %s48
    %p50 = scmp.eq.s32.totalorder %s29, 0
    %p51 = por %p49, %p50
    %s53 = sadd.s32 %s52, 1
    %p56 = scmp.eq.s32.totalorder %s23, 4
    %p57 = scmp.ne.s32.totalorder %s52, %s54
    %p58 = scmp.eq.s32.totalorder %s23, 0
    %p59 = por %p57, %p58
    %p60 = scmp.ne.s32.totalorder %s52, %s54
    %p61 = scmp.eq.s32.totalorder %s28, 4
    %p62 = por %p60, %p61
    %p63 = scmp.ne.s32.totalorder %s54, %s55
    %p64 = scmp.eq.s32.totalorder %s28, 0
    %p65 = por %p63, %p64
    %p66 = scmp.ne.s32.totalorder %s54, %s55
    %p67 = scmp.eq.s32.totalorder %s29, 4
    %p68 = por %p66, %p67
    %p70 = scmp.ne.s32.totalorder %s55, %s69
    %p71 = scmp.eq.s32.totalorder %s29, 0
    %p72 = por %p70, %p71
    %s74 = sadd.s32 %s73, 1
    %p77 = scmp.eq.s32.totalorder %s23, 4
    %p78 = scmp.ne.s32.totalorder %s73, %s75
    %p79 = scmp.eq.s32.totalorder %s23, 0
    %p80 = por %p78, %p79
    %p81 = scmp.ne.s32.totalorder %s73, %s75
    %p82 = scmp.eq.s32.totalorder %s28, 4
    %p83 = por %p81, %p82
    %p84 = scmp.ne.s32.totalorder %s75, %s76
    %p85 = scmp.eq.s32.totalorder %s28, 0
    %p86 = por %p84, %p85
    %p87 = scmp.ne.s32.totalorder %s75, %s76
    %p88 = scmp.eq.s32.totalorder %s29, 4
    %p89 = por %p87, %p88
    %p91 = scmp.ne.s32.totalorder %s76, %s90
    %p92 = scmp.eq.s32.totalorder %s29, 0
    %p93 = por %p91, %p92
    %s95 = sadd.s32 %s94, 1
    %p98 = scmp.eq.s32.totalorder %s23, 4
    %p99 = scmp.ne.s32.totalorder %s94, %s96
    %p100 = scmp.eq.s32.totalorder %s23, 0
    %p101 = por %p99, %p100
    %p102 = scmp.ne.s32.totalorder %s94, %s96
    %p103 = scmp.eq.s32.totalorder %s28, 4
    %p104 = por %p102, %p103
    %p105 = scmp.ne.s32.totalorder %s96, %s97
    %p106 = scmp.eq.s32.totalorder %s28, 0
    %p107 = por %p105, %p106
    %p108 = scmp.ne.s32.totalorder %s96, %s97
    %p109 = scmp.eq.s32.totalorder %s29, 4
    %p110 = por %p108, %p109
    %p112 = scmp.ne.s32.totalorder %s97, %s111
    %p113 = scmp.eq.s32.totalorder %s29, 0
    %p114 = por %p112, %p113
    %s116 = sadd.s32 %s115, 1
    %p119 = scmp.eq.s32.totalorder %s23, 4
    %p120 = scmp.ne.s32.totalorder %s115, %s117
    %p121 = scmp.eq.s32.totalorder %s23, 0
    %p122 = por %p120, %p121
    %p123 = scmp.ne.s32.totalorder %s115, %s117
    %p124 = scmp.eq.s32.totalorder %s28, 4
    %p125 = por %p123, %p124
    %p126 = scmp.ne.s32.totalorder %s117, %s118
    %p127 = scmp.eq.s32.totalorder %s28, 0
    %p128 = por %p126, %p127
    %p129 = scmp.ne.s32.totalorder %s117, %s118
    %p130 = scmp.eq.s32.totalorder %s29, 4
    %p131 = por %p129, %p130
    %p133 = scmp.ne.s32.totalorder %s118, %s132
    %p134 = scmp.eq.s32.totalorder %s29, 0
    %p135 = por %p133, %p134
    %s137 = sadd.s32 %s136, 1
    %p140 = scmp.eq.s32.totalorder %s23, 4
    %p141 = scmp.ne.s32.totalorder %s136, %s138
    %p142 = scmp.eq.s32.totalorder %s23, 0
    %p143 = por %p141, %p142
    %p144 = scmp.ne.s32.totalorder %s136, %s138
    %p145 = scmp.eq.s32.totalorder %s28, 4
    %p146 = por %p144, %p145
    %p147 = scmp.ne.s32.totalorder %s138, %s139
    %p148 = scmp.eq.s32.totalorder %s28, 0
    %p149 = por %p147, %p148
    %p150 = scmp.ne.s32.totalorder %s138, %s139
    %p151 = scmp.eq.s32.totalorder %s29, 4
    %p152 = por %p150, %p151
    %p154 = scmp.ne.s32.totalorder %s139, %s153
    %p155 = scmp.eq.s32.totalorder %s29, 0
    %p156 = por %p154, %p155
    %s158 = sadd.s32 %s157, 1
    %p161 = scmp.eq.s32.totalorder %s23, 4
    %p162 = scmp.ne.s32.totalorder %s157, %s159
    %p163 = scmp.eq.s32.totalorder %s23, 0
    %p164 = por %p162, %p163
    %p165 = scmp.ne.s32.totalorder %s157, %s159
    %p166 = scmp.eq.s32.totalorder %s28, 4
    %p167 = por %p165, %p166
    %p168 = scmp.ne.s32.totalorder %s159, %s160
    %p169 = scmp.eq.s32.totalorder %s28, 0
    %p170 = por %p168, %p169
    %p171 = scmp.ne.s32.totalorder %s159, %s160
    %p172 = scmp.eq.s32.totalorder %s29, 4
    %p173 = por %p171, %p172
    %p175 = scmp.ne.s32.totalorder %s160, %s174
    %p176 = scmp.eq.s32.totalorder %s29, 0
    %p177 = por %p175, %p176
    %s179 = sadd.s32 %s178, 1
    %p182 = scmp.eq.s32.totalorder %s23, 4
    %p183 = scmp.ne.s32.totalorder %s178, %s180
    %p184 = scmp.eq.s32.totalorder %s23, 0
    %p185 = por %p183, %p184
    %p186 = scmp.ne.s32.totalorder %s178, %s180
    %p187 = scmp.eq.s32.totalorder %s28, 4
    %p188 = por %p186, %p187
    %p189 = scmp.ne.s32.totalorder %s180, %s181
    %p190 = scmp.eq.s32.totalorder %s28, 0
    %p191 = por %p189, %p190
    %p192 = scmp.ne.s32.totalorder %s180, %s181
    %p193 = scmp.eq.s32.totalorder %s29, 4
    %p194 = por %p192, %p193
    %p196 = scmp.ne.s32.totalorder %s181, %s195
    %p197 = scmp.eq.s32.totalorder %s29, 0
    %p198 = por %p196, %p197
    %s200 = sadd.s32 %s199, 1
    %p203 = scmp.eq.s32.totalorder %s23, 4
    %p204 = scmp.ne.s32.totalorder %s199, %s201
    %p205 = scmp.eq.s32.totalorder %s23, 0
    %p206 = por %p204, %p205
    %p207 = scmp.ne.s32.totalorder %s199, %s201
    %p208 = scmp.eq.s32.totalorder %s28, 4
    %p209 = por %p207, %p208
    %p210 = scmp.ne.s32.totalorder %s201, %s202
    %p211 = scmp.eq.s32.totalorder %s28, 0
    %p212 = por %p210, %p211
    %p213 = scmp.ne.s32.totalorder %s201, %s202
    %p214 = scmp.eq.s32.totalorder %s29, 4
    %p215 = por %p213, %p214
    %p217 = scmp.ne.s32.totalorder %s202, %s216
    %p218 = scmp.eq.s32.totalorder %s29, 0
    %p219 = por %p217, %p218
    %s221 = sadd.s32 %s220, 1
    %p224 = scmp.eq.s32.totalorder %s23, 4
    %p225 = scmp.ne.s32.totalorder %s220, %s222
    %p226 = scmp.eq.s32.totalorder %s23, 0
    %p227 = por %p225, %p226
    %p228 = scmp.ne.s32.totalorder %s220, %s222
    %p229 = scmp.eq.s32.totalorder %s28, 4
    %p230 = por %p228, %p229
    %p231 = scmp.ne.s32.totalorder %s222, %s223
    %p232 = scmp.eq.s32.totalorder %s28, 0
    %p233 = por %p231, %p232
    %p234 = scmp.ne.s32.totalorder %s222, %s223
    %p235 = scmp.eq.s32.totalorder %s29, 4
    %p236 = por %p234, %p235
    %p238 = scmp.ne.s32.totalorder %s223, %s237
    %p239 = scmp.eq.s32.totalorder %s29, 0
    %p240 = por %p238, %p239
    %s242 = sadd.s32 %s241, 1
    %p245 = scmp.eq.s32.totalorder %s23, 4
    %p246 = scmp.ne.s32.totalorder %s241, %s243
    %p247 = scmp.eq.s32.totalorder %s23, 0
    %p248 = por %p246, %p247
    %p249 = scmp.ne.s32.totalorder %s241, %s243
    %p250 = scmp.eq.s32.totalorder %s28, 4
    %p251 = por %p249, %p250
    %p252 = scmp.ne.s32.totalorder %s243, %s244
    %p253 = scmp.eq.s32.totalorder %s28, 0
    %p254 = por %p252, %p253
    %p255 = scmp.ne.s32.totalorder %s243, %s244
    %p256 = scmp.eq.s32.totalorder %s29, 4
    %p257 = por %p255, %p256
    %p259 = scmp.ne.s32.totalorder %s244, %s258
    %p260 = scmp.eq.s32.totalorder %s29, 0
    %p261 = por %p259, %p260
    %s263 = sadd.s32 %s262, 1
    %p266 = scmp.eq.s32.totalorder %s23, 4
    %p267 = scmp.ne.s32.totalorder %s262, %s264
    %p268 = scmp.eq.s32.totalorder %s23, 0
    %p269 = por %p267, %p268
    %p270 = scmp.ne.s32.totalorder %s262, %s264
    %p271 = scmp.eq.s32.totalorder %s28, 4
    %p272 = por %p270, %p271
    %p273 = scmp.ne.s32.totalorder %s264, %s265
    %p274 = scmp.eq.s32.totalorder %s28, 0
    %p275 = por %p273, %p274
    %p276 = scmp.ne.s32.totalorder %s264, %s265
    %p277 = scmp.eq.s32.totalorder %s29, 4
    %p278 = por %p276, %p277
    %p280 = scmp.ne.s32.totalorder %s265, %s279
    %p281 = scmp.eq.s32.totalorder %s29, 0
    %p282 = por %p280, %p281
    %s284 = sadd.s32 %s283, 1
    %p287 = scmp.eq.s32.totalorder %s23, 4
    %p288 = scmp.ne.s32.totalorder %s283, %s285
    %p289 = scmp.eq.s32.totalorder %s23, 0
    %p290 = por %p288, %p289
    %p291 = scmp.ne.s32.totalorder %s283, %s285
    %p292 = scmp.eq.s32.totalorder %s28, 4
    %p293 = por %p291, %p292
    %p294 = scmp.ne.s32.totalorder %s285, %s286
    %p295 = scmp.eq.s32.totalorder %s28, 0
    %p296 = por %p294, %p295
    %p297 = scmp.ne.s32.totalorder %s285, %s286
    %p298 = scmp.eq.s32.totalorder %s29, 4
    %p299 = por %p297, %p298
    %p301 = scmp.ne.s32.totalorder %s286, %s300
    %p302 = scmp.eq.s32.totalorder %s29, 0
    %p303 = por %p301, %p302
    %s304 = ssub.s32 %s23, %s30
    %p305 = scmp.eq.s32.totalorder %s304, 0
    %s307 = sadd.s32 %s306, 1
    %s308 = scalar_select %p305, %s306, %s307
    %p311 = pneg %p305
    %p312 = scmp.eq.s32.totalorder %s23, 4
    %p313 = por %p311, %p312
    %p314 = scmp.ne.s32.totalorder %s306, %s309
    %p315 = scmp.eq.s32.totalorder %s23, 0
    %p316 = por %p314, %p315
    %p317 = scmp.ne.s32.totalorder %s306, %s309
    %p318 = scmp.eq.s32.totalorder %s28, 4
    %p319 = por %p317, %p318
    %p320 = scmp.ne.s32.totalorder %s309, %s310
    %p321 = scmp.eq.s32.totalorder %s28, 0
    %p322 = por %p320, %p321
    %p323 = scmp.ne.s32.totalorder %s309, %s310
    %p324 = scmp.eq.s32.totalorder %s29, 4
    %p325 = por %p323, %p324
    %p327 = scmp.ne.s32.totalorder %s310, %s326
    %p328 = scmp.eq.s32.totalorder %s29, 0
    %p329 = por %p327, %p328
    %s331 = sadd.s32 %s330, 1
    %p334 = scmp.eq.s32.totalorder %s23, 4
    %p335 = scmp.ne.s32.totalorder %s330, %s332
    %p336 = scmp.eq.s32.totalorder %s23, 0
    %p337 = por %p335, %p336
    %p338 = scmp.ne.s32.totalorder %s330, %s332
    %p339 = scmp.eq.s32.totalorder %s28, 4
    %p340 = por %p338, %p339
    %p341 = scmp.ne.s32.totalorder %s332, %s333
    %p342 = scmp.eq.s32.totalorder %s28, 0
    %p343 = por %p341, %p342
    %p344 = scmp.ne.s32.totalorder %s332, %s333
    %p345 = scmp.eq.s32.totalorder %s29, 4
    %p346 = por %p344, %p345
    %p348 = scmp.ne.s32.totalorder %s333, %s347
    %p349 = scmp.eq.s32.totalorder %s29, 0
    %p350 = por %p348, %p349
    %s351 = ssub.s32 %s23, %s30
    %p352 = scmp.eq.s32.totalorder %s351, 0
    %s354 = sadd.s32 %s353, 1
    %s355 = scalar_select %p352, %s353, %s354
    %p358 = pneg %p352
    %p359 = scmp.eq.s32.totalorder %s23, 4
    %p360 = por %p358, %p359
    %p361 = scmp.ne.s32.totalorder %s353, %s356
    %p362 = scmp.eq.s32.totalorder %s23, 0
    %p363 = por %p361, %p362
    %p364 = scmp.ne.s32.totalorder %s353, %s356
    %p365 = scmp.eq.s32.totalorder %s28, 4
    %p366 = por %p364, %p365
    %p367 = scmp.ne.s32.totalorder %s356, %s357
    %p368 = scmp.eq.s32.totalorder %s28, 0
    %p369 = por %p367, %p368
    %p370 = scmp.ne.s32.totalorder %s356, %s357
    %p371 = scmp.eq.s32.totalorder %s29, 4
    %p372 = por %p370, %p371
    %p374 = scmp.ne.s32.totalorder %s357, %s373
    %p375 = scmp.eq.s32.totalorder %s29, 0
    %p376 = por %p374, %p375
    %s378 = sadd.s32 %s377, 1
    %p381 = scmp.eq.s32.totalorder %s23, 4
    %p382 = scmp.ne.s32.totalorder %s377, %s379
    %p383 = scmp.eq.s32.totalorder %s23, 0
    %p384 = por %p382, %p383
    %p385 = scmp.ne.s32.totalorder %s377, %s379
    %p386 = scmp.eq.s32.totalorder %s28, 4
    %p387 = por %p385, %p386
    %p388 = scmp.ne.s32.totalorder %s379, %s380
    %p389 = scmp.eq.s32.totalorder %s28, 0
    %p390 = por %p388, %p389
    %p391 = scmp.ne.s32.totalorder %s379, %s380
    %p392 = scmp.eq.s32.totalorder %s29, 4
    %p393 = por %p391, %p392
    %p395 = scmp.ne.s32.totalorder %s380, %s394
    %p396 = scmp.eq.s32.totalorder %s29, 0
    %p397 = por %p395, %p396
    %s399 = sadd.s32 %s398, 1
    %p402 = scmp.eq.s32.totalorder %s23, 4
    %p403 = scmp.ne.s32.totalorder %s398, %s400
    %p404 = scmp.eq.s32.totalorder %s23, 0
    %p405 = por %p403, %p404
    %p406 = scmp.ne.s32.totalorder %s398, %s400
    %p407 = scmp.eq.s32.totalorder %s28, 4
    %p408 = por %p406, %p407
    %p409 = scmp.ne.s32.totalorder %s400, %s401
    %p410 = scmp.eq.s32.totalorder %s28, 0
    %p411 = por %p409, %p410
    %p412 = scmp.ne.s32.totalorder %s400, %s401
    %p413 = scmp.eq.s32.totalorder %s29, 4
    %p414 = por %p412, %p413
    %p416 = scmp.ne.s32.totalorder %s401, %s415
    %p417 = scmp.eq.s32.totalorder %s29, 0
    %p418 = por %p416, %p417
    %p419 = scmp.le.s32.totalorder 1, %s23
    %p420 = scmp.lt.s32.totalorder %s23, 6
    %p421 = pnand %p419, %p420
    %p422 = pneg %p421
    // Predicated region
    $region9: #{_forward_jit.5} parent=5 // pred_check
      _
    $region10: #{_forward_jit.5} parent=5 // pred_check_branch
      %424 = sbr.rel (%p421) target = $region12
    $region11: #{_forward_jit.5} parent=5 // pred_region
      %s425 = ssub.s32 %s23, 1
      // Predicated region
      $region13: #{_forward_jit.5} parent=11 // pred_check
        %p426 = pneg %p44
      $region14: #{_forward_jit.5} parent=11 // pred_check_branch
        %428 = sbr.rel (%p426) target = $region16
      $region15: #{_forward_jit.5} parent=11 // pred_region
        _
      $region16: #{_forward_jit.5} parent=11 // pred_fallthru
        _
      // Predicated region
      $region17: #{_forward_jit.5} parent=11 // pred_check
        %p429 = pneg %p65
      $region18: #{_forward_jit.5} parent=11 // pred_check_branch
        %431 = sbr.rel (%p429) target = $region20
      $region19: #{_forward_jit.5} parent=11 // pred_region
        _
      $region20: #{_forward_jit.5} parent=11 // pred_fallthru
        _
      // Predicated region
      $region21: #{_forward_jit.5} parent=11 // pred_check
        %p432 = pneg %p86
      $region22: #{_forward_jit.5} parent=11 // pred_check_branch
        %434 = sbr.rel (%p432) target = $region24
      $region23: #{_forward_jit.5} parent=11 // pred_region
        _
      $region24: #{_forward_jit.5} parent=11 // pred_fallthru
        _
      // Predicated region
      $region25: #{_forward_jit.5} parent=11 // pred_check
        %p435 = pneg %p107
      $region26: #{_forward_jit.5} parent=11 // pred_check_branch
        %437 = sbr.rel (%p435) target = $region28
      $region27: #{_forward_jit.5} parent=11 // pred_region
        _
      $region28: #{_forward_jit.5} parent=11 // pred_fallthru
        _
      // Predicated region
      $region29: #{_forward_jit.5} parent=11 // pred_check
        %p438 = pneg %p128
      $region30: #{_forward_jit.5} parent=11 // pred_check_branch
        %440 = sbr.rel (%p438) target = $region32
      $region31: #{_forward_jit.5} parent=11 // pred_region
        _
      $region32: #{_forward_jit.5} parent=11 // pred_fallthru
        _
      // Predicated region
      $region33: #{_forward_jit.5} parent=11 // pred_check
        %p441 = pneg %p149
      $region34: #{_forward_jit.5} parent=11 // pred_check_branch
        %443 = sbr.rel (%p441) target = $region36
      $region35: #{_forward_jit.5} parent=11 // pred_region
        _
      $region36: #{_forward_jit.5} parent=11 // pred_fallthru
        _
      // Predicated region
      $region37: #{_forward_jit.5} parent=11 // pred_check
        %p444 = pneg %p170
      $region38: #{_forward_jit.5} parent=11 // pred_check_branch
        %446 = sbr.rel (%p444) target = $region40
      $region39: #{_forward_jit.5} parent=11 // pred_region
        _
      $region40: #{_forward_jit.5} parent=11 // pred_fallthru
        _
      // Predicated region
      $region41: #{_forward_jit.5} parent=11 // pred_check
        %p447 = pneg %p191
      $region42: #{_forward_jit.5} parent=11 // pred_check_branch
        %449 = sbr.rel (%p447) target = $region44
      $region43: #{_forward_jit.5} parent=11 // pred_region
        _
      $region44: #{_forward_jit.5} parent=11 // pred_fallthru
        _
      // Predicated region
      $region45: #{_forward_jit.5} parent=11 // pred_check
        %p450 = pneg %p212
      $region46: #{_forward_jit.5} parent=11 // pred_check_branch
        %452 = sbr.rel (%p450) target = $region48
      $region47: #{_forward_jit.5} parent=11 // pred_region
        _
      $region48: #{_forward_jit.5} parent=11 // pred_fallthru
        _
      // Predicated region
      $region49: #{_forward_jit.5} parent=11 // pred_check
        %p453 = pneg %p233
      $region50: #{_forward_jit.5} parent=11 // pred_check_branch
        %455 = sbr.rel (%p453) target = $region52
      $region51: #{_forward_jit.5} parent=11 // pred_region
        _
      $region52: #{_forward_jit.5} parent=11 // pred_fallthru
        _
      // Predicated region
      $region53: #{_forward_jit.5} parent=11 // pred_check
        %p456 = pneg %p254
      $region54: #{_forward_jit.5} parent=11 // pred_check_branch
        %458 = sbr.rel (%p456) target = $region56
      $region55: #{_forward_jit.5} parent=11 // pred_region
        _
      $region56: #{_forward_jit.5} parent=11 // pred_fallthru
        _
      // Predicated region
      $region57: #{_forward_jit.5} parent=11 // pred_check
        %p459 = pneg %p275
      $region58: #{_forward_jit.5} parent=11 // pred_check_branch
        %461 = sbr.rel (%p459) target = $region60
      $region59: #{_forward_jit.5} parent=11 // pred_region
        _
      $region60: #{_forward_jit.5} parent=11 // pred_fallthru
        _
      // Predicated region
      $region61: #{_forward_jit.5} parent=11 // pred_check
        %p462 = pneg %p296
      $region62: #{_forward_jit.5} parent=11 // pred_check_branch
        %464 = sbr.rel (%p462) target = $region64
      $region63: #{_forward_jit.5} parent=11 // pred_region
        _
      $region64: #{_forward_jit.5} parent=11 // pred_fallthru
        _
      // Predicated region
      $region65: #{_forward_jit.5} parent=11 // pred_check
        %p465 = pneg %p343
      $region66: #{_forward_jit.5} parent=11 // pred_check_branch
        %467 = sbr.rel (%p465) target = $region68
      $region67: #{_forward_jit.5} parent=11 // pred_region
        _
      $region68: #{_forward_jit.5} parent=11 // pred_fallthru
        _
      // Predicated region
      $region69: #{_forward_jit.5} parent=11 // pred_check
        %p468 = pneg %p390
      $region70: #{_forward_jit.5} parent=11 // pred_check_branch
        %470 = sbr.rel (%p468) target = $region72
      $region71: #{_forward_jit.5} parent=11 // pred_region
        _
      $region72: #{_forward_jit.5} parent=11 // pred_fallthru
        _
    $region12: #{_forward_jit.5} parent=5 // pred_fallthru
      _
    %p471 = scmp.lt.s32.totalorder %s23, 5
    // Predicated region
    $region73: #{_forward_jit.5} parent=5 // pred_check
      %p472 = pneg %p471
    $region74: #{_forward_jit.5} parent=5 // pred_check_branch
      %474 = sbr.rel (%p472) target = $region76
    $region75: #{_forward_jit.5} parent=5 // pred_region
      // Predicated region
      $region77: #{_forward_jit.5} parent=75 // pred_check
        %p475 = pneg %p316
      $region78: #{_forward_jit.5} parent=75 // pred_check_branch
        %477 = sbr.rel (%p475) target = $region80
      $region79: #{_forward_jit.5} parent=75 // pred_region
        %p478 = scmp.lt.s32.totalorder %s23, 4
        %s479 = scalar_select %p478, %s23, 4
        %s480 = smul.addr %s479, 4
        %s481 = smul.addr %s480, 8
        %s482 = scalar_lea.vmem %s13, %s481
      $region80: #{_forward_jit.5} parent=75 // pred_fallthru
        _
      // Predicated region
      $region81: #{_forward_jit.5} parent=75 // pred_check
        %p483 = pneg %p363
      $region82: #{_forward_jit.5} parent=75 // pred_check_branch
        %485 = sbr.rel (%p483) target = $region84
      $region83: #{_forward_jit.5} parent=75 // pred_region
        %p486 = scmp.lt.s32.totalorder %s23, 4
        %s487 = scalar_select %p486, %s23, 4
        %s488 = smul.addr %s487, 2
        %s489 = smul.addr %s488, 8
        %s490 = scalar_lea.vmem %s15, %s489
      $region84: #{_forward_jit.5} parent=75 // pred_fallthru
        _
    $region76: #{_forward_jit.5} parent=5 // pred_fallthru
      _
    %p491 = scmp.le.s32.totalorder 1, %s23
    %p492 = scmp.lt.s32.totalorder %s23, 6
    %p493 = pnand %p491, %p492
    %p494 = pneg %p493
    // Predicated region
    $region85: #{_forward_jit.5} parent=5 // pred_check
      _
    $region86: #{_forward_jit.5} parent=5 // pred_check_branch
      %496 = sbr.rel (%p493) target = $region88
    $region87: #{_forward_jit.5} parent=5 // pred_region
      %s497 = ssub.s32 %s23, 1
      %p498 = pneg %p44
      %p499 = pneg %p41
      %p500 = pneg %p65
      %p501 = pneg %p62
      %p502 = pneg %p86
      %p503 = pneg %p83
      %p504 = pneg %p107
      %p505 = pneg %p104
      %p506 = pneg %p128
      %p507 = pneg %p125
      %p508 = pneg %p149
      %p509 = pneg %p146
      %p510 = pneg %p170
      %p511 = pneg %p167
      %p512 = pneg %p191
      %p513 = pneg %p188
      %p514 = pneg %p212
      %p515 = pneg %p209
      %p516 = pneg %p233
      %p517 = pneg %p230
      %p518 = pneg %p254
      %p519 = pneg %p251
      %p520 = pneg %p275
      %p521 = pneg %p272
      %p522 = pneg %p296
      %p523 = pneg %p293
      %p524 = scmp.lt.s32.totalorder %s28, 4
      %s525 = scalar_select %p524, %s28, 4
      %s526 = smul.addr %s525, 4
      %s527 = smul.addr %s526, 8
      %s528 = scalar_lea.vmem %s13, %s527
      %p529 = pneg %p322
      %p530 = pneg %p319
      %p531 = pneg %p343
      %p532 = pneg %p340
      %p533 = scmp.lt.s32.totalorder %s28, 4
      %s534 = scalar_select %p533, %s28, 4
      %s535 = smul.addr %s534, 2
      %s536 = smul.addr %s535, 8
      %s537 = scalar_lea.vmem %s15, %s536
      %p538 = pneg %p369
      %p539 = pneg %p366
      %p540 = pneg %p390
      %p541 = pneg %p387
      %p542 = pneg %p411
      %p543 = pneg %p408
      %p544 = scmp.lt.s32.totalorder %s28, 4
      %s545 = scalar_select %p544, %s28, 4
      %s546 = smul.addr %s545, 4
      %s547 = smul.addr %s546, 8
      %s548 = scalar_lea.vmem %s13, %s547
      %p549 = scmp.lt.s32.totalorder %s28, 4
      %s550 = scalar_select %p549, %s28, 4
      %s551 = smul.addr %s550, 2
      %s552 = smul.addr %s551, 8
      %s553 = scalar_lea.vmem %s15, %s552
      %p555 = scmp.eq.s32.totalorder %s28, 0
      // Predicated region
      $region89: #{_forward_jit.5} parent=87 // pred_check
        %p556 = pneg %p555
      $region90: #{_forward_jit.5} parent=87 // pred_check_branch
        %558 = sbr.rel (%p556) target = $region92
      $region91: #{_forward_jit.5} parent=87 // pred_region
        %v559 = vld [vmem:[%s8] sm:$0xff]
        %560 = vst [vmem:[#allocation2] sm:$0xff] %v559
        %561 = vst [vmem:[%s17] sm:$0x1] 0.0
      $region92: #{_forward_jit.5} parent=87 // pred_fallthru
        _
      %v562 = vld [vmem:[%s1] sm:$0xff]
      %v563 = vld [vmem:[%s1 + $0x8] sm:$0xff]
      %v564 = vld [vmem:[%s1 + $0x10] sm:$0xff]
      %v565 = vld [vmem:[%s1 + $0x18] sm:$0xff]
      %v566 = vld [vmem:[#allocation2] sm:$0xff]
      %vm567 = vcmask 64512
      %v569 = vsel %vm567, %v562, 0
      %v572 = vsel %vm567, %v563, 0
      %v575 = vsel %vm567, %v564, 0
      %v578 = vsel %vm567, %v565, 0
      %580 = vmatprep.subr.mxu0 0.0
      %581 = vmatpush1.msra.mxu0 %v566
      %582 = vmatprep.subr.mxu0 0.0
      %583 = vmatpush1.msra.mxu0 0.0
      %584 = vmatprep.subr.mxu0 0.0
      %585 = vmatpush1.msra.mxu0 0.0
      %586 = vmatprep.subr.mxu0 0.0
      %587 = vmatpush1.msra.mxu0 0.0
      %588 = vmatprep.subr.mxu0 0.0
      %589 = vmatpush1.msra.mxu0 0.0
      %590 = vmatprep.subr.mxu0 0.0
      %591 = vmatpush1.msra.mxu0 0.0
      %592 = vmatprep.subr.mxu0 0.0
      %593 = vmatpush1.msra.mxu0 0.0
      %594 = vmatprep.subr.mxu0 0.0
      %595 = vmatpush1.msra.mxu0 0.0
      %596 = vmatprep.subr.mxu0 0.0
      %597 = vmatpush1.msra.mxu0 0.0
      %598 = vmatprep.subr.mxu0 0.0
      %599 = vmatpush1.msra.mxu0 0.0
      %600 = vmatprep.subr.mxu0 0.0
      %601 = vmatpush1.msra.mxu0 0.0
      %602 = vmatprep.subr.mxu0 0.0
      %603 = vmatpush1.msra.mxu0 0.0
      %604 = vmatprep.subr.mxu0 0.0
      %605 = vmatpush1.msra.mxu0 0.0
      %606 = vmatprep.subr.mxu0 0.0
      %607 = vmatpush1.msra.mxu0 0.0
      %608 = vmatprep.subr.mxu0 0.0
      %609 = vmatpush1.msra.mxu0 0.0
      %610 = vmatprep.subr.mxu0 0.0
      %611 = vmatpush1.msra.mxu0 0.0
      %612 = vmatprep.subr.mxu0 0.0
      %613 = vmatpush1.msra.mxu0 0.0
      %614 = vmatprep.subr.mxu0 0.0
      %615 = vmatpush1.msra.mxu0 0.0
      %616 = vmatprep.subr.mxu0 0.0
      %617 = vmatpush1.msra.mxu0 0.0
      %618 = vmatprep.subr.mxu0 0.0
      %619 = vmatpush1.msra.mxu0 0.0
      %620 = vmatprep.subr.mxu0 0.0
      %621 = vmatpush1.msra.mxu0 0.0
      %622 = vmatprep.subr.mxu0 0.0
      %623 = vmatpush1.msra.mxu0 0.0
      %624 = vmatprep.subr.mxu0 0.0
      %625 = vmatpush1.msra.mxu0 0.0
      %626 = vmatprep.subr.mxu0 0.0
      %627 = vmatpush1.msra.mxu0 0.0
      %628 = vmatprep.subr.mxu0 0.0
      %629 = vmatpush1.msra.mxu0 0.0
      %630 = vmatprep.subr.mxu0 0.0
      %631 = vmatpush1.msra.mxu0 0.0
      %632 = vmatprep.subr.mxu0 0.0
      %633 = vmatpush1.msra.mxu0 0.0
      %634 = vmatprep.subr.mxu0 0.0
      %635 = vmatpush1.msra.mxu0 0.0
      %636 = vmatprep.subr.mxu0 0.0
      %637 = vmatpush1.msra.mxu0 0.0
      %638 = vmatprep.subr.mxu0 0.0
      %639 = vmatpush1.msra.mxu0 0.0
      %640 = vmatprep.subr.mxu0 0.0
      %641 = vmatpush1.msra.mxu0 0.0
      %642 = vmatprep.subr.mxu0 0.0
      %643 = vmatpush1.msra.mxu0 0.0
      %644 = vmatprep.mubr.f32.mxu0 0.0
      %645 = vmatmul.mubr.f32.gmra.mrb[0].mxu0 %v569
      %v646 = vpop.f32.mrb[0].mxu0
      %v647 = vadd.f32 0.0, %v646
      %v648 = vpop.f32.mrb[0].mxu0
      %649 = vmatprep.mubr.f32.mxu0 0.0
      %650 = vmatmul.mubr.f32.gmra.mrb[0].mxu0 %v572
      %v651 = vpop.f32.mrb[0].mxu0
      %v652 = vadd.f32 0.0, %v651
      %v653 = vpop.f32.mrb[0].mxu0
      %654 = vmatprep.mubr.f32.mxu0 0.0
      %655 = vmatmul.mubr.f32.gmra.mrb[0].mxu0 %v575
      %v656 = vpop.f32.mrb[0].mxu0
      %v657 = vadd.f32 0.0, %v656
      %v658 = vpop.f32.mrb[0].mxu0
      %659 = vmatprep.mubr.f32.mxu0 0.0
      %660 = vmatmul.mubr.f32.gmra.mrb[0].mxu0 %v578
      %v661 = vpop.f32.mrb[0].mxu0
      %v662 = vadd.f32 0.0, %v661
      %v663 = vpop.f32.mrb[0].mxu0
      %664 = vdwg.mxu0
      %v665 = vld [vmem:[%s0] sm:$0xff]
      %v666 = vld [vmem:[%s0 + $0x8] sm:$0xff]
      %v667 = vld [vmem:[%s0 + $0x10] sm:$0xff]
      %v668 = vld [vmem:[%s0 + $0x18] sm:$0xff]
      %v669 = vadd.f32 %v665, %v647
      %v670 = vadd.f32 %v666, %v652
      %v671 = vadd.f32 %v667, %v657
      %v672 = vadd.f32 %v668, %v662
      %v673 = vpack.c.bf16 %v670, %v669
      %v674 = vpack.c.bf16 %v672, %v671
      %v675 = vld [vmem:[%s2] sm:$0xf]
      %v676 = vld [vmem:[%s2 + $0x4] sm:$0xf]
      %v677 = vld [vmem:[%s2 + $0x8] sm:$0xf]
      %v678 = vld [vmem:[%s2 + $0xc] sm:$0xf]
      %v679 = vld [vmem:[%s2 + $0x10] sm:$0xf]
      %v680 = vld [vmem:[%s2 + $0x14] sm:$0xf]
      %v681 = vld [vmem:[%s2 + $0x18] sm:$0xf]
      %v682 = vld [vmem:[%s2 + $0x1c] sm:$0xf]
      %v683 = vld [vmem:[%s2 + $0x20] sm:$0xf]
      %v684 = vld [vmem:[%s2 + $0x24] sm:$0xf]
      %v685 = vld [vmem:[%s2 + $0x28] sm:$0xf]
      %v686 = vld [vmem:[%s2 + $0x2c] sm:$0xf]
      %v687 = vld [vmem:[%s2 + $0x30] sm:$0xf]
      %v688 = vld [vmem:[%s2 + $0x34] sm:$0xf]
      %v689 = vld [vmem:[%s2 + $0x38] sm:$0xf]
      %v690 = vld [vmem:[%s2 + $0x3c] sm:$0xf]
      %v691 = vld [vmem:[%s3] sm:$0x1]
      %v693 = vlaneseq
      %v694 = vshrl.u32 %v693, 7
      %v695 = vsub.s32 0, %v694
      %v696 = vrot.slane %v691, %v695
      %v714 = vunpack.c.l.b16 %v675
      %v715 = vunpack.c.l.b16 %v676
      %v716 = vunpack.c.l.b16 %v677
      %v717 = vunpack.c.l.b16 %v678
      %v718 = vunpack.c.l.b16 %v679
      %v719 = vunpack.c.l.b16 %v680
      %v720 = vunpack.c.l.b16 %v681
      %v721 = vunpack.c.l.b16 %v682
      %v722 = vunpack.c.l.b16 %v683
      %v723 = vunpack.c.l.b16 %v684
      %v724 = vunpack.c.l.b16 %v685
      %v725 = vunpack.c.l.b16 %v686
      %v726 = vunpack.c.l.b16 %v687
      %v727 = vunpack.c.l.b16 %v688
      %v728 = vunpack.c.l.b16 %v689
      %v729 = vunpack.c.l.b16 %v690
      %v730 = vpack.c.b16 %v715, %v714
      %v731 = vpack.c.b16 %v717, %v716
      %v732 = vpack.c.b16 %v719, %v718
      %v733 = vpack.c.b16 %v721, %v720
      %v734 = vpack.c.b16 %v723, %v722
      %v735 = vpack.c.b16 %v725, %v724
      %v736 = vpack.c.b16 %v727, %v726
      %v737 = vpack.c.b16 %v729, %v728
      %746 = vmatprep.subr.bf16.mxu0 0
      %747 = vmatpush1.bf16.msra.mxu0 %v730
      %748 = vmatprep.subr.bf16.mxu0 0
      %749 = vmatpush1.bf16.msra.mxu0 %v731
      %750 = vmatprep.subr.bf16.mxu0 0
      %751 = vmatpush1.bf16.msra.mxu0 %v732
      %752 = vmatprep.subr.bf16.mxu0 0
      %753 = vmatpush1.bf16.msra.mxu0 %v733
      %754 = vmatprep.subr.bf16.mxu0 0
      %755 = vmatpush1.bf16.msra.mxu0 %v734
      %756 = vmatprep.subr.bf16.mxu0 0
      %757 = vmatpush1.bf16.msra.mxu0 %v735
      %758 = vmatprep.subr.bf16.mxu0 0
      %759 = vmatpush1.bf16.msra.mxu0 %v736
      %760 = vmatprep.subr.bf16.mxu0 0
      %761 = vmatpush1.bf16.msra.mxu0 %v737
      %762 = vmatprep.subr.bf16.mxu0 0
      %763 = vmatpush1.bf16.msra.mxu0 0
      %764 = vmatprep.subr.bf16.mxu0 0
      %765 = vmatpush1.bf16.msra.mxu0 0
      %766 = vmatprep.subr.bf16.mxu0 0
      %767 = vmatpush1.bf16.msra.mxu0 0
      %768 = vmatprep.subr.bf16.mxu0 0
      %769 = vmatpush1.bf16.msra.mxu0 0
      %770 = vmatprep.subr.bf16.mxu0 0
      %771 = vmatpush1.bf16.msra.mxu0 0
      %772 = vmatprep.subr.bf16.mxu0 0
      %773 = vmatpush1.bf16.msra.mxu0 0
      %774 = vmatprep.subr.bf16.mxu0 0
      %775 = vmatpush1.bf16.msra.mxu0 0
      %776 = vmatprep.subr.bf16.mxu0 0
      %777 = vmatpush1.bf16.msra.mxu0 0
      %778 = vmatprep.mubr.bf16.mxu0 0
      %779 = vmatmul.mubr.bf16.gmra.mrb[0].mxu0 %v673
      %v780 = vpop.f32.mrb[0].mxu0
      %v781 = vadd.f32 %v696, %v780
      %v782 = vpop.f32.mrb[0].mxu0
      %v783 = vpop.f32.mrb[0].mxu0
      %v784 = vadd.f32 %v696, %v783
      %v785 = vpop.f32.mrb[0].mxu0
      %786 = vmatprep.mubr.bf16.mxu0 0
      %787 = vmatmul.mubr.bf16.gmra.mrb[0].mxu0 %v674
      %v788 = vpop.f32.mrb[0].mxu0
      %v789 = vadd.f32 %v696, %v788
      %v790 = vpop.f32.mrb[0].mxu0
      %v791 = vpop.f32.mrb[0].mxu0
      %v792 = vadd.f32 %v696, %v791
      %v793 = vpop.f32.mrb[0].mxu0
      %794 = vdwg.mxu0
      %v795 = vld [vmem:[%s4] sm:$0xff]
      %vm796 = vcmask 261120
      %v798 = vsel %vm796, %v795, 0
      %800 = vmatprep.subr.mxu0 0.0
      %801 = vmatpush1.msra.mxu0 %v781
      %802 = vmatprep.subr.mxu0 0.0
      %803 = vmatpush1.msra.mxu0 %v784
      %804 = vmatprep.subr.mxu0 0.0
      %805 = vmatpush1.msra.mxu0 %v789
      %806 = vmatprep.subr.mxu0 0.0
      %807 = vmatpush1.msra.mxu0 %v792
      %808 = vmatprep.subr.mxu0 0.0
      %809 = vmatpush1.msra.mxu0 0.0
      %810 = vmatprep.subr.mxu0 0.0
      %811 = vmatpush1.msra.mxu0 0.0
      %812 = vmatprep.subr.mxu0 0.0
      %813 = vmatpush1.msra.mxu0 0.0
      %814 = vmatprep.subr.mxu0 0.0
      %815 = vmatpush1.msra.mxu0 0.0
      %816 = vmatprep.subr.mxu0 0.0
      %817 = vmatpush1.msra.mxu0 0.0
      %818 = vmatprep.subr.mxu0 0.0
      %819 = vmatpush1.msra.mxu0 0.0
      %820 = vmatprep.subr.mxu0 0.0
      %821 = vmatpush1.msra.mxu0 0.0
      %822 = vmatprep.subr.mxu0 0.0
      %823 = vmatpush1.msra.mxu0 0.0
      %824 = vmatprep.subr.mxu0 0.0
      %825 = vmatpush1.msra.mxu0 0.0
      %826 = vmatprep.subr.mxu0 0.0
      %827 = vmatpush1.msra.mxu0 0.0
      %828 = vmatprep.subr.mxu0 0.0
      %829 = vmatpush1.msra.mxu0 0.0
      %830 = vmatprep.subr.mxu0 0.0
      %831 = vmatpush1.msra.mxu0 0.0
      %832 = vmatprep.subr.mxu0 0.0
      %833 = vmatpush1.msra.mxu0 0.0
      %834 = vmatprep.subr.mxu0 0.0
      %835 = vmatpush1.msra.mxu0 0.0
      %836 = vmatprep.subr.mxu0 0.0
      %837 = vmatpush1.msra.mxu0 0.0
      %838 = vmatprep.subr.mxu0 0.0
      %839 = vmatpush1.msra.mxu0 0.0
      %840 = vmatprep.subr.mxu0 0.0
      %841 = vmatpush1.msra.mxu0 0.0
      %842 = vmatprep.subr.mxu0 0.0
      %843 = vmatpush1.msra.mxu0 0.0
      %844 = vmatprep.subr.mxu0 0.0
      %845 = vmatpush1.msra.mxu0 0.0
      %846 = vmatprep.subr.mxu0 0.0
      %847 = vmatpush1.msra.mxu0 0.0
      %848 = vmatprep.subr.mxu0 0.0
      %849 = vmatpush1.msra.mxu0 0.0
      %850 = vmatprep.subr.mxu0 0.0
      %851 = vmatpush1.msra.mxu0 0.0
      %852 = vmatprep.subr.mxu0 0.0
      %853 = vmatpush1.msra.mxu0 0.0
      %854 = vmatprep.subr.mxu0 0.0
      %855 = vmatpush1.msra.mxu0 0.0
      %856 = vmatprep.subr.mxu0 0.0
      %857 = vmatpush1.msra.mxu0 0.0
      %858 = vmatprep.subr.mxu0 0.0
      %859 = vmatpush1.msra.mxu0 0.0
      %860 = vmatprep.subr.mxu0 0.0
      %861 = vmatpush1.msra.mxu0 0.0
      %862 = vmatprep.subr.mxu0 0.0
      %863 = vmatpush1.msra.mxu0 0.0
      %864 = vmatprep.mubr.f32.mxu0 0.0
      %865 = vmatmul.mubr.f32.gmra.mrb[0].mxu0 %v798
      %v866 = vpop.f32.mrb[0].mxu0
      %v867 = vadd.f32 0.0, %v866
      %v868 = vpop.f32.mrb[0].mxu0
      %869 = vdwg.mxu0
      %v870 = vld [vmem:[%s5] sm:$0xff]
      %872 = vset.pattern.permute.xlu0 0
      %873 = vperm.xlu0 %872, %v870
      %v874 = vpop.permute.xlu0 %873
      %v876 = vmul.f32 %v867, %v874
      %v877 = vpack.c.bf16 %v876, %v876
      %v878 = vld [vmem:[%s6] sm:$0xf]
      %v879 = vld [vmem:[%s6 + $0x4] sm:$0xf]
      %v880 = vld [vmem:[%s6 + $0x8] sm:$0xf]
      %v881 = vld [vmem:[%s6 + $0xc] sm:$0xf]
      %v882 = vld [vmem:[%s6 + $0x10] sm:$0xf]
      %v883 = vld [vmem:[%s6 + $0x14] sm:$0xf]
      %v884 = vld [vmem:[%s6 + $0x18] sm:$0xf]
      %v885 = vld [vmem:[%s6 + $0x1c] sm:$0xf]
      %v886 = vld [vmem:[%s6 + $0x20] sm:$0xf]
      %v887 = vld [vmem:[%s6 + $0x24] sm:$0xf]
      %v888 = vld [vmem:[%s6 + $0x28] sm:$0xf]
      %v889 = vld [vmem:[%s6 + $0x2c] sm:$0xf]
      %v890 = vld [vmem:[%s6 + $0x30] sm:$0xf]
      %v891 = vld [vmem:[%s6 + $0x34] sm:$0xf]
      %v892 = vld [vmem:[%s6 + $0x38] sm:$0xf]
      %v893 = vld [vmem:[%s6 + $0x3c] sm:$0xf]
      %v894 = vld [vmem:[%s7] sm:$0x1]
      %v896 = vlaneseq
      %v897 = vshrl.u32 %v896, 7
      %v898 = vsub.s32 0, %v897
      %v899 = vrot.slane %v894, %v898
      %v917 = vunpack.c.l.b16 %v878
      %v918 = vunpack.c.l.b16 %v879
      %v919 = vunpack.c.l.b16 %v880
      %v920 = vunpack.c.l.b16 %v881
      %v921 = vunpack.c.l.b16 %v882
      %v922 = vunpack.c.l.b16 %v883
      %v923 = vunpack.c.l.b16 %v884
      %v924 = vunpack.c.l.b16 %v885
      %v925 = vunpack.c.l.b16 %v886
      %v926 = vunpack.c.l.b16 %v887
      %v927 = vunpack.c.l.b16 %v888
      %v928 = vunpack.c.l.b16 %v889
      %v929 = vunpack.c.l.b16 %v890
      %v930 = vunpack.c.l.b16 %v891
      %v931 = vunpack.c.l.b16 %v892
      %v932 = vunpack.c.l.b16 %v893
      %v933 = vpack.c.b16 %v918, %v917
      %v934 = vpack.c.b16 %v920, %v919
      %v935 = vpack.c.b16 %v922, %v921
      %v936 = vpack.c.b16 %v924, %v923
      %v937 = vpack.c.b16 %v926, %v925
      %v938 = vpack.c.b16 %v928, %v927
      %v939 = vpack.c.b16 %v930, %v929
      %v940 = vpack.c.b16 %v932, %v931
      %949 = vmatprep.subr.bf16.mxu0 0
      %950 = vmatpush1.bf16.msra.mxu0 %v933
      %951 = vmatprep.subr.bf16.mxu0 0
      %952 = vmatpush1.bf16.msra.mxu0 %v934
      %953 = vmatprep.subr.bf16.mxu0 0
      %954 = vmatpush1.bf16.msra.mxu0 %v935
      %955 = vmatprep.subr.bf16.mxu0 0
      %956 = vmatpush1.bf16.msra.mxu0 %v936
      %957 = vmatprep.subr.bf16.mxu0 0
      %958 = vmatpush1.bf16.msra.mxu0 %v937
      %959 = vmatprep.subr.bf16.mxu0 0
      %960 = vmatpush1.bf16.msra.mxu0 %v938
      %961 = vmatprep.subr.bf16.mxu0 0
      %962 = vmatpush1.bf16.msra.mxu0 %v939
      %963 = vmatprep.subr.bf16.mxu0 0
      %964 = vmatpush1.bf16.msra.mxu0 %v940
      %965 = vmatprep.subr.bf16.mxu0 0
      %966 = vmatpush1.bf16.msra.mxu0 0
      %967 = vmatprep.subr.bf16.mxu0 0
      %968 = vmatpush1.bf16.msra.mxu0 0
      %969 = vmatprep.subr.bf16.mxu0 0
      %970 = vmatpush1.bf16.msra.mxu0 0
      %971 = vmatprep.subr.bf16.mxu0 0
      %972 = vmatpush1.bf16.msra.mxu0 0
      %973 = vmatprep.subr.bf16.mxu0 0
      %974 = vmatpush1.bf16.msra.mxu0 0
      %975 = vmatprep.subr.bf16.mxu0 0
      %976 = vmatpush1.bf16.msra.mxu0 0
      %977 = vmatprep.subr.bf16.mxu0 0
      %978 = vmatpush1.bf16.msra.mxu0 0
      %979 = vmatprep.subr.bf16.mxu0 0
      %980 = vmatpush1.bf16.msra.mxu0 0
      %981 = vmatprep.mubr.bf16.mxu0 0
      %982 = vmatmul.mubr.bf16.gmra.mrb[0].mxu0 %v877
      %v983 = vpop.f32.mrb[0].mxu0
      %v984 = vadd.f32 %v899, %v983
      %v985 = vpop.f32.mrb[0].mxu0
      %v986 = vpop.f32.mrb[0].mxu0
      %v987 = vpop.f32.mrb[0].mxu0
      %988 = vdwg.mxu0
      %989 = vst [vmem:[#allocation2] sm:$0xff] %v984
      %v990 = vld [vmem:[%s10] sm:$0x1]
      %v992 = vlaneseq
      %v993 = vshrl.u32 %v992, 7
      %v994 = vsub.s32 0, %v993
      %v995 = vrot.slane %v990, %v994
      %v997 = vadd.f32 %v984, %v995
      %998 = vmax.xlane.f32.xlu0 %v997
      %v999 = vpop.xlane.xlu0 %998
      %v1000 = vsub.f32 %v997, %v999
      %v1001 = vmul.f32 %v1000, 1.442695
      %v1002 = vpow.pop %v1001
      %1003 = vadd.xlane.f32.xlu0 %v1002
      %v1004 = vpop.xlane.xlu0 %1003
      %v1005 = vlog2.pop %v1004
      %v1006 = vmul.f32 %v1005, 0.6931472
      %v1007 = vadd.f32 %v1006, %v999
      %v1008 = vld [vmem:[%s9] sm:$0xff]
      %v1009 = vmul.f32 %v1008, %v984
      %1010 = vadd.xlane.f32.xlu0 %v1009
      %v1011 = vpop.xlane.xlu0 %1010
      %v1012 = vsub.f32 %v1007, %v1011
      %v1013 = vld [vmem:[%s11] sm:$0xff]
      %v1014 = vmul.f32 %v1012, %v1013
      %vm1015 = vcmask 7168
      %v1016 = vsel %vm1015, %v1014, 0.0
      %1017 = vadd.xlane.f32.xlu0 %v1016
      %v1018 = vpop.xlane.xlu0 %1017
      %v1019 = vrot.slane %v1018, 4
      %v1020 = vadd.f32 %v1018, %v1019
      %v1021 = vrot.slane %v1020, 2
      %v1022 = vadd.f32 %v1020, %v1021
      %v1023 = vrot.slane %v1022, 1
      %v1024 = vadd.f32 %v1022, %v1023
      %s1025 = vtos %v1024
      %v1026 = vld [vmem:[%s548] sm:$0xff]
      %v1027 = vld [vmem:[%s548 + $0x8] sm:$0xff]
      %v1028 = vld [vmem:[%s548 + $0x10] sm:$0xff]
      %v1029 = vld [vmem:[%s548 + $0x18] sm:$0xff]
      %v1030 = vld [vmem:[%s14] sm:$0xff]
      %v1031 = vld [vmem:[%s14 + $0x8] sm:$0xff]
      %v1032 = vld [vmem:[%s14 + $0x10] sm:$0xff]
      %v1033 = vld [vmem:[%s14 + $0x18] sm:$0xff]
      %v1034 = vsub.f32 %v1026, %v1030
      %v1035 = vsub.f32 %v1027, %v1031
      %v1036 = vsub.f32 %v1028, %v1032
      %v1037 = vsub.f32 %v1029, %v1033
      %v1038 = vld [vmem:[%s12] sm:$0xff]
      %v1039 = vld [vmem:[%s12 + $0x8] sm:$0xff]
      %v1040 = vld [vmem:[%s12 + $0x10] sm:$0xff]
      %v1041 = vld [vmem:[%s12 + $0x18] sm:$0xff]
      %1043 = vset.pattern.permute.xlu0 0
      %1044 = vperm.xlu0 %1043, %v1038
      %v1045 = vpop.permute.xlu0 %1044
      %1048 = vset.pattern.permute.xlu0 0
      %1049 = vperm.xlu0 %1048, %v1039
      %v1050 = vpop.permute.xlu0 %1049
      %1053 = vset.pattern.permute.xlu0 0
      %1054 = vperm.xlu0 %1053, %v1040
      %v1055 = vpop.permute.xlu0 %1054
      %1058 = vset.pattern.permute.xlu0 0
      %1059 = vperm.xlu0 %1058, %v1041
      %v1060 = vpop.permute.xlu0 %1059
      %v1062 = vmul.f32 %v1034, %v1045
      %v1063 = vmul.f32 %v1035, %v1050
      %v1064 = vmul.f32 %v1036, %v1055
      %v1065 = vmul.f32 %v1037, %v1060
      %v1066 = vand.u32 2147483647, %v1062
      %v1067 = vand.u32 2147483647, %v1063
      %v1068 = vand.u32 2147483647, %v1064
      %v1069 = vand.u32 2147483647, %v1065
      %vm1070 = vcmp.lt.f32.partialorder %v1066, 1.0
      %vm1071 = vcmp.lt.f32.partialorder %v1067, 1.0
      %vm1072 = vcmp.lt.f32.partialorder %v1068, 1.0
      %vm1073 = vcmp.lt.f32.partialorder %v1069, 1.0
      %v1074 = vmul.f32 %v1062, 0.5
      %v1075 = vmul.f32 %v1063, 0.5
      %v1076 = vmul.f32 %v1064, 0.5
      %v1077 = vmul.f32 %v1065, 0.5
      %v1078 = vmul.f32 %v1074, %v1062
      %v1079 = vmul.f32 %v1075, %v1063
      %v1080 = vmul.f32 %v1076, %v1064
      %v1081 = vmul.f32 %v1077, %v1065
      %v1082 = vsub.f32 %v1066, 0.5
      %v1083 = vsub.f32 %v1067, 0.5
      %v1084 = vsub.f32 %v1068, 0.5
      %v1085 = vsub.f32 %v1069, 0.5
      %v1086 = vsel %vm1070, %v1078, %v1082
      %v1087 = vsel %vm1071, %v1079, %v1083
      %v1088 = vsel %vm1072, %v1080, %v1084
      %v1089 = vsel %vm1073, %v1081, %v1085
      %vm1090 = vcmask 23552
      %v1091 = vsel %vm1090, %v1086, 0.0
      %v1092 = vsel %vm1090, %v1087, 0.0
      %v1093 = vadd.f32 %v1091, %v1092
      %v1094 = vsel %vm1090, %v1088, 0.0
      %v1095 = vadd.f32 %v1093, %v1094
      %v1096 = vsel %vm1090, %v1089, 0.0
      %v1097 = vadd.f32 %v1095, %v1096
      %1098 = vadd.xlane.f32.xlu0 %v1097
      %v1099 = vpop.xlane.xlu0 %1098
      %v1100 = vrot.slane %v1099, 4
      %v1101 = vadd.f32 %v1099, %v1100
      %v1102 = vrot.slane %v1101, 2
      %v1103 = vadd.f32 %v1101, %v1102
      %v1104 = vrot.slane %v1103, 1
      %v1105 = vadd.f32 %v1103, %v1104
      %s1106 = vtos %v1105
      %s1107 = smul.f32 %s1106, 0.027777778
      %v1108 = vld [vmem:[%s553] sm:$0xff]
      %v1109 = vld [vmem:[%s553 + $0x8] sm:$0xff]
      %v1110 = vld [vmem:[%s16] sm:$0xff]
      %v1111 = vld [vmem:[%s16 + $0x8] sm:$0xff]
      %v1112 = vsub.f32 %v1108, %v1110
      %v1113 = vsub.f32 %v1109, %v1111
      %v1114 = vand.u32 2147483647, %v1112
      %v1115 = vand.u32 2147483647, %v1113
      %vm1116 = vcmp.lt.f32.partialorder %v1114, 1.0
      %vm1117 = vcmp.lt.f32.partialorder %v1115, 1.0
      %v1118 = vmul.f32 %v1112, 0.5
      %v1119 = vmul.f32 %v1113, 0.5
      %v1120 = vmul.f32 %v1118, %v1112
      %v1121 = vmul.f32 %v1119, %v1113
      %v1122 = vsub.f32 %v1114, 0.5
      %v1123 = vsub.f32 %v1115, 0.5
      %v1124 = vsel %vm1116, %v1120, %v1122
      %v1125 = vsel %vm1117, %v1121, %v1123
      %v1126 = vsel %vm1090, %v1124, 0.0
      %v1127 = vsel %vm1090, %v1125, 0.0
      %v1128 = vadd.f32 %v1126, %v1127
      %1129 = vadd.xlane.f32.xlu0 %v1128
      %v1130 = vpop.xlane.xlu0 %1129
      %v1131 = vrot.slane %v1130, 4
      %v1132 = vadd.f32 %v1130, %v1131
      %v1133 = vrot.slane %v1132, 2
      %v1134 = vadd.f32 %v1132, %v1133
      %v1135 = vrot.slane %v1134, 1
      %v1136 = vadd.f32 %v1134, %v1135
      %s1137 = vtos %v1136
      %s1138 = smul.f32 %s1137, 0.027777778
      %v1139 = vlaneseq
      %v1140 = vand.u32 %v1139, 127
      %vm1141 = vcmp.eq.s32.totalorder %v1140, 0
      %s1142 = sadd.f32 %s1107, %s1138
      %v1143 = vstv %s1142
      %v1144 = vsel %vm1141, %v1143, 0.0
      %vm1145 = vcmp.eq.s32.totalorder %v1140, 1
      %v1146 = vstv %s1025
      %v1147 = vsel %vm1145, %v1146, 0.0
      %v1148 = vadd.f32 %v1144, %v1147
      %v1149 = vld [vmem:[%s17] sm:$0x1]
      %v1150 = vadd.f32 %v1149, %v1148
      %1151 = vst [vmem:[%s17] sm:$0x1] %v1150
      // Predicated region
      $region93: #{_forward_jit.5} parent=87 // pred_check
        %p1152 = pneg %p408
      $region94: #{_forward_jit.5} parent=87 // pred_check_branch
        %1154 = sbr.rel (%p1152) target = $region96
      $region95: #{_forward_jit.5} parent=87 // pred_region
        _
      $region96: #{_forward_jit.5} parent=87 // pred_fallthru
        _
      // Predicated region
      $region97: #{_forward_jit.5} parent=87 // pred_check
        %p1155 = pneg %p408
      $region98: #{_forward_jit.5} parent=87 // pred_check_branch
        %1157 = sbr.rel (%p1155) target = $region100
      $region99: #{_forward_jit.5} parent=87 // pred_region
        _
      $region100: #{_forward_jit.5} parent=87 // pred_fallthru
        _
    $region88: #{_forward_jit.5} parent=5 // pred_fallthru
      _
    %p1158 = scmp.le.s32.totalorder 2, %s23
    // Predicated region
    $region101: #{_forward_jit.5} parent=5 // pred_check
      %p1159 = pneg %p1158
    $region102: #{_forward_jit.5} parent=5 // pred_check_branch
      %1161 = sbr.rel (%p1159) target = $region104
    $region103: #{_forward_jit.5} parent=5 // pred_region
      %s1162 = ssub.s32 %s23, 2
    $region104: #{_forward_jit.5} parent=5 // pred_fallthru
      _
  $region6: #{_forward_jit.5} parent=0 // loop_footer
    %s27 = sadd.s32 1, %s23
  $region7: #{_forward_jit.5} parent=0 // loop_footer_branch
    %22 = sbr.rel target = $region3
  $region8: #{_forward_jit.5} parent=0 // loop_exit
    _

</llo_original>
